<compile_context>
chip_gen: v6e
topology: v6e:2x2x1
jax: 0.10.0
libtpu: 0.0.40
codegen_flags: <defaults>
</compile_context>

<pallas_src>
import functools

import jax
import jax.numpy as jnp
from jax.experimental import pallas as pl
from jax.experimental.pallas import tpu as pltpu

NIN = 1000        # spectrum length (fixed by the module)
NHIDDEN = 250     # nn.Linear(1000, nhidden) default
NLATENT = 2

# Lane-aligned padded storage sizes.
NIN_PAD = 1024    # 1000 -> 8*128
NH_PAD = 256      # 250  -> 2*128
NLV = 2 * NLATENT # packed [mu | logvar] width


def vae_kernel(x_ref, w_enc_ref, b_enc_ref, w_mulv_ref, b_mulv_ref,
               w_dec_ref, b_dec_ref, w_out_ref, b_out_ref, eps_ref,
               recon_ref, mulv_ref):
    # ---- encode: big matmul on the MXU (bf16 inputs, f32 accumulation) ----
    h = jnp.dot(x_ref[...], w_enc_ref[...],
                preferred_element_type=jnp.float32) + b_enc_ref[...]
    h = jnp.maximum(h, 0.0)                                   # ReLU

    # ---- fused mu|logvar projection: one MXU pass instead of two ----
    mulv = jnp.dot(h, w_mulv_ref[...],
                   preferred_element_type=jnp.float32) + b_mulv_ref[...]
    mu = mulv[:, 0:NLATENT]
    logvar = mulv[:, NLATENT:NLV]

    # ---- reparameterize: z = eps * exp(0.5*logvar) + mu ----
    std = jnp.exp(0.5 * logvar)
    z = eps_ref[...] * std + mu                               # (TB, 2)

    # ---- decode: K=2 contraction as two broadcast FMAs on the VPU ----
    hd = (z[:, 0:1] * w_dec_ref[0:1, :]
          + z[:, 1:2] * w_dec_ref[1:2, :]
          + b_dec_ref[...])
    hd = jnp.maximum(hd, 0.0)                                 # ReLU

    # ---- output projection: big matmul (bf16 inputs, f32 accumulation) ----
    recon = jnp.dot(hd.astype(w_out_ref.dtype), w_out_ref[...],
                    preferred_element_type=jnp.float32) + b_out_ref[...]

    recon_ref[...] = recon
    mulv_ref[...] = mulv


def vae_forward(x, params, eps, *, batch_tile=128):
    """x: [B, 1000] f32, eps: [B, 2] f32 (pre-drawn N(0,1) noise).

    Returns (recon [B,1000] f32, mu [B,2] f32, logvar [B,2] f32)."""
    B = x.shape[0]
    TB = batch_tile
    n_tiles = pl.cdiv(B, TB)
    B_pad = n_tiles * TB

    # Pad batch to a multiple of the batch tile and features to lane multiples.
    x_pad = jnp.zeros((B_pad, NIN_PAD), jnp.float32)
    x_pad = x_pad.at[:B, :NIN].set(x).astype(jnp.bfloat16)
    eps_pad = jnp.zeros((B_pad, NLATENT), jnp.float32).at[:B].set(eps)

    def resident(shape):
        # Full-array block whose block index never changes across the batch
        # grid -> DMA'd once, then VMEM-resident for every grid step.
        return pl.BlockSpec(shape, lambda i: (0, 0))

    in_specs = [
        pl.BlockSpec((TB, NIN_PAD), lambda i: (i, 0)),   # x tile (streams)
        resident((NIN_PAD, NH_PAD)),                     # w_enc (bf16)
        resident((1, NH_PAD)),                           # b_enc
        resident((NH_PAD, NLV)),                         # w_mulv (fused mu|logvar)
        resident((1, NLV)),                              # b_mulv
        resident((NLATENT, NH_PAD)),                     # w_dec
        resident((1, NH_PAD)),                           # b_dec
        resident((NH_PAD, NIN_PAD)),                     # w_out (bf16)
        resident((1, NIN_PAD)),                          # b_out
        pl.BlockSpec((TB, NLATENT), lambda i: (i, 0)),   # eps tile (streams)
    ]
    out_specs = (
        pl.BlockSpec((TB, NIN_PAD), lambda i: (i, 0)),   # recon (padded)
        pl.BlockSpec((TB, NLV), lambda i: (i, 0)),       # packed [mu | logvar]
    )
    out_shape = (
        jax.ShapeDtypeStruct((B_pad, NIN_PAD), jnp.float32),
        jax.ShapeDtypeStruct((B_pad, NLV), jnp.float32),
    )

    flops = 2 * B_pad * (NIN_PAD * NH_PAD + NH_PAD * NLV
                         + NLATENT * NH_PAD + NH_PAD * NIN_PAD)
    bytes_weights = ((NIN_PAD * NH_PAD + NH_PAD * NIN_PAD) * 2          # bf16
                     + (NH_PAD * NLV + NLATENT * NH_PAD) * 4            # f32
                     + (2 * NH_PAD + NLV + NIN_PAD) * 4)                # biases
    bytes_io = B_pad * (NIN_PAD * 2 + NLATENT * 4 + NIN_PAD * 4 + NLV * 4)
    cost = pl.CostEstimate(flops=flops,
                           transcendentals=B_pad * NLATENT,
                           bytes_accessed=bytes_weights + bytes_io)

    recon_pad, mulv = pl.pallas_call(
        vae_kernel,
        out_shape=out_shape,
        grid=(n_tiles,),
        in_specs=in_specs,
        out_specs=out_specs,
        compiler_params=pltpu.CompilerParams(
            dimension_semantics=("parallel",),
            vmem_limit_bytes=32 * 1024 * 1024),
        cost_estimate=cost,
    )(x_pad,
      params["w_enc"], params["b_enc"],
      params["w_mulv"], params["b_mulv"],
      params["w_dec"], params["b_dec"],
      params["w_out"], params["b_out"],
      eps_pad)

    recon = recon_pad[:B, :NIN]
    mu = mulv[:B, :NLATENT]
    logvar = mulv[:B, NLATENT:NLV]
    return recon, mu, logvar


def init_params(key):
    """PyTorch-like U(-1/sqrt(fan_in), 1/sqrt(fan_in)) init, stored [in, out],
    zero-padded to lane-aligned shapes, big weights in bf16."""
    def linear(k, fan_in, fan_out):
        kw, kb = jax.random.split(k)
        bound = 1.0 / jnp.sqrt(float(fan_in))
        w = jax.random.uniform(kw, (fan_in, fan_out), jnp.float32, -bound, bound)
        b = jax.random.uniform(kb, (1, fan_out), jnp.float32, -bound, bound)
        return w, b

    ks = jax.random.split(key, 5)
    w_enc, b_enc = linear(ks[0], NIN, NHIDDEN)
    w_mu, b_mu = linear(ks[1], NHIDDEN, NLATENT)
    w_lv, b_lv = linear(ks[2], NHIDDEN, NLATENT)
    w_dec, b_dec = linear(ks[3], NLATENT, NHIDDEN)
    w_out, b_out = linear(ks[4], NHIDDEN, NIN)

    def pad(a, shape):
        out = jnp.zeros(shape, a.dtype)
        return out.at[:a.shape[0], :a.shape[1]].set(a)

    w_mulv = jnp.concatenate([w_mu, w_lv], axis=1)   # (250, 4)
    b_mulv = jnp.concatenate([b_mu, b_lv], axis=1)   # (1, 4)

    return dict(
        w_enc=pad(w_enc, (NIN_PAD, NH_PAD)).astype(jnp.bfloat16),
        b_enc=pad(b_enc, (1, NH_PAD)),
        w_mulv=pad(w_mulv, (NH_PAD, NLV)),
        b_mulv=b_mulv,
        w_dec=pad(w_dec, (NLATENT, NH_PAD)),
        b_dec=pad(b_dec, (1, NH_PAD)),
        w_out=pad(w_out, (NH_PAD, NIN_PAD)).astype(jnp.bfloat16),
        b_out=pad(b_out, (1, NIN_PAD)),
    )


def vae_ref(x, params, eps):
    """Pure-JAX reference using the same padded/bf16 parameters."""
    B = x.shape[0]
    x_pad = jnp.zeros((B, NIN_PAD), jnp.float32).at[:, :NIN].set(x)
    xb = x_pad.astype(jnp.bfloat16)
    h = jnp.maximum(jnp.dot(xb, params["w_enc"],
                            preferred_element_type=jnp.float32)
                    + params["b_enc"], 0.0)
    mulv = jnp.dot(h, params["w_mulv"],
                   preferred_element_type=jnp.float32) + params["b_mulv"]
    mu = mulv[:, :NLATENT]
    logvar = mulv[:, NLATENT:NLV]
    z = eps * jnp.exp(0.5 * logvar) + mu
    hd = jnp.maximum(z @ params["w_dec"] + params["b_dec"], 0.0)
    recon = jnp.dot(hd.astype(jnp.bfloat16), params["w_out"],
                    preferred_element_type=jnp.float32) + params["b_out"]
    return recon[:, :NIN], mu, logvar


if __name__ == "__main__":
    key = jax.random.PRNGKey(0)
    k_params, k_x, k_eps = jax.random.split(key, 3)

    B = 200  # non-multiple of the batch tile -> exercises the padding path
    params = init_params(k_params)
    x = jax.random.normal(k_x, (B, NIN), jnp.float32)
    # eps plays the role of torch.randn_like(std); drawn outside the kernel so
    # the forward is deterministic given the key.
    eps = jax.random.normal(k_eps, (B, NLATENT), jnp.float32)

    fwd = jax.jit(functools.partial(vae_forward, batch_tile=128))
    recon, mu, logvar = jax.block_until_ready(fwd(x, params, eps))

    recon_r, mu_r, logvar_r = vae_ref(x, params, eps)
    assert recon.shape == (B, NIN)
    assert mu.shape == (B, NLATENT) and logvar.shape == (B, NLATENT)
    assert jnp.allclose(mu, mu_r, atol=1e-3, rtol=1e-3)
    assert jnp.allclose(logvar, logvar_r, atol=1e-3, rtol=1e-3)
    assert jnp.allclose(recon, recon_r, atol=1e-2, rtol=1e-2)

    print("KERNEL_OK")
</pallas_src>

<mosaic_0001>
module attributes {stable_mosaic.version = 11 : i64} {
  func.func @vae_kernel(%arg0: i32, %arg1: memref<128x1024xbf16, #tpu.memory_space<vmem>>, %arg2: memref<1024x256xbf16, #tpu.memory_space<vmem>>, %arg3: memref<1x256xf32, #tpu.memory_space<vmem>>, %arg4: memref<256x4xf32, #tpu.memory_space<vmem>>, %arg5: memref<1x4xf32, #tpu.memory_space<vmem>>, %arg6: memref<2x256xf32, #tpu.memory_space<vmem>>, %arg7: memref<1x256xf32, #tpu.memory_space<vmem>>, %arg8: memref<256x1024xbf16, #tpu.memory_space<vmem>>, %arg9: memref<1x1024xf32, #tpu.memory_space<vmem>>, %arg10: memref<128x2xf32, #tpu.memory_space<vmem>>, %arg11: memref<128x1024xf32, #tpu.memory_space<vmem>>, %arg12: memref<128x4xf32, #tpu.memory_space<vmem>>) attributes {dimension_semantics = [#tpu.dimension_semantics<parallel>], iteration_bounds = array<i64: 2>, scalar_prefetch = 0 : i64, scratch_operands = 0 : i64, tpu.core_type = #tpu.core_type<tc>, window_params = [{transform_indices = @transform_0, window_bounds = array<i64: 128, 1024>}, {pipeline_mode = #tpu.pipeline_mode<synchronous>, transform_indices = @transform_1, window_bounds = array<i64: 1024, 256>}, {pipeline_mode = #tpu.pipeline_mode<synchronous>, transform_indices = @transform_2, window_bounds = array<i64: 1, 256>}, {pipeline_mode = #tpu.pipeline_mode<synchronous>, transform_indices = @transform_3, window_bounds = array<i64: 256, 4>}, {pipeline_mode = #tpu.pipeline_mode<synchronous>, transform_indices = @transform_4, window_bounds = array<i64: 1, 4>}, {pipeline_mode = #tpu.pipeline_mode<synchronous>, transform_indices = @transform_5, window_bounds = array<i64: 2, 256>}, {pipeline_mode = #tpu.pipeline_mode<synchronous>, transform_indices = @transform_6, window_bounds = array<i64: 1, 256>}, {pipeline_mode = #tpu.pipeline_mode<synchronous>, transform_indices = @transform_7, window_bounds = array<i64: 256, 1024>}, {pipeline_mode = #tpu.pipeline_mode<synchronous>, transform_indices = @transform_8, window_bounds = array<i64: 1, 1024>}, {transform_indices = @transform_9, window_bounds = array<i64: 128, 2>}, {transform_indices = @transform_10, window_bounds = array<i64: 128, 1024>}, {transform_indices = @transform_11, window_bounds = array<i64: 128, 4>}]} {
    %c0 = arith.constant 0 : index
    %c0_0 = arith.constant 0 : index
    %0 = vector.load %arg1[%c0, %c0_0] : memref<128x1024xbf16, #tpu.memory_space<vmem>>, vector<128x1024xbf16>
    %c0_1 = arith.constant 0 : index
    %c0_2 = arith.constant 0 : index
    %1 = vector.load %arg2[%c0_1, %c0_2] : memref<1024x256xbf16, #tpu.memory_space<vmem>>, vector<1024x256xbf16>
    %cst = arith.constant dense<0.000000e+00> : vector<128x256xf32>
    %2 = tpu.matmul %0, %1, %cst {dimension_numbers = #tpu.dot_dimension_numbers<[1], [0], [0], [1], [0, 0, 1, 1], [], []>} : vector<128x1024xbf16>, vector<1024x256xbf16>, vector<128x256xf32> -> vector<128x256xf32>
    %c0_3 = arith.constant 0 : index
    %c0_4 = arith.constant 0 : index
    %3 = vector.load %arg3[%c0_3, %c0_4] : memref<1x256xf32, #tpu.memory_space<vmem>>, vector<1x256xf32>
    %4 = vector.broadcast %3 : vector<1x256xf32> to vector<128x256xf32>
    %5 = arith.addf %2, %4 : vector<128x256xf32>
    %cst_5 = arith.constant 0.000000e+00 : f32
    %6 = vector.broadcast %cst_5 : f32 to vector<128x256xf32>
    %7 = arith.maximumf %5, %6 : vector<128x256xf32>
    %c0_6 = arith.constant 0 : index
    %c0_7 = arith.constant 0 : index
    %8 = vector.load %arg4[%c0_6, %c0_7] : memref<256x4xf32, #tpu.memory_space<vmem>>, vector<256x4xf32>
    %cst_8 = arith.constant dense<0.000000e+00> : vector<128x4xf32>
    %9 = tpu.matmul %7, %8, %cst_8 {dimension_numbers = #tpu.dot_dimension_numbers<[1], [0], [0], [1], [0, 0, 1, 1], [], []>} : vector<128x256xf32>, vector<256x4xf32>, vector<128x4xf32> -> vector<128x4xf32>
    %c0_9 = arith.constant 0 : index
    %c0_10 = arith.constant 0 : index
    %10 = vector.load %arg5[%c0_9, %c0_10] : memref<1x4xf32, #tpu.memory_space<vmem>>, vector<1x4xf32>
    %11 = vector.broadcast %10 : vector<1x4xf32> to vector<128x4xf32>
    %12 = arith.addf %9, %11 : vector<128x4xf32>
    %13 = vector.extract_strided_slice %12 {offsets = [0, 0], sizes = [128, 2], strides = [1, 1]} : vector<128x4xf32> to vector<128x2xf32>
    %14 = vector.extract_strided_slice %12 {offsets = [0, 2], sizes = [128, 2], strides = [1, 1]} : vector<128x4xf32> to vector<128x2xf32>
    %cst_11 = arith.constant 5.000000e-01 : f32
    %15 = vector.broadcast %cst_11 : f32 to vector<128x2xf32>
    %16 = arith.mulf %15, %14 : vector<128x2xf32>
    %17 = math.exp %16 : vector<128x2xf32>
    %c0_12 = arith.constant 0 : index
    %c0_13 = arith.constant 0 : index
    %18 = vector.load %arg10[%c0_12, %c0_13] : memref<128x2xf32, #tpu.memory_space<vmem>>, vector<128x2xf32>
    %19 = arith.mulf %18, %17 : vector<128x2xf32>
    %20 = arith.addf %19, %13 : vector<128x2xf32>
    %21 = vector.extract_strided_slice %20 {offsets = [0, 0], sizes = [128, 1], strides = [1, 1]} : vector<128x2xf32> to vector<128x1xf32>
    %c0_14 = arith.constant 0 : index
    %c0_15 = arith.constant 0 : index
    %22 = vector.load %arg6[%c0_14, %c0_15] : memref<2x256xf32, #tpu.memory_space<vmem>>, vector<1x256xf32>
    %23 = vector.broadcast %21 : vector<128x1xf32> to vector<128x256xf32>
    %24 = vector.broadcast %22 : vector<1x256xf32> to vector<128x256xf32>
    %25 = arith.mulf %23, %24 : vector<128x256xf32>
    %26 = vector.extract_strided_slice %20 {offsets = [0, 1], sizes = [128, 1], strides = [1, 1]} : vector<128x2xf32> to vector<128x1xf32>
    %c1 = arith.constant 1 : index
    %c0_16 = arith.constant 0 : index
    %27 = vector.load %arg6[%c1, %c0_16] : memref<2x256xf32, #tpu.memory_space<vmem>>, vector<1x256xf32>
    %28 = vector.broadcast %26 : vector<128x1xf32> to vector<128x256xf32>
    %29 = vector.broadcast %27 : vector<1x256xf32> to vector<128x256xf32>
    %30 = arith.mulf %28, %29 : vector<128x256xf32>
    %31 = arith.addf %25, %30 : vector<128x256xf32>
    %c0_17 = arith.constant 0 : index
    %c0_18 = arith.constant 0 : index
    %32 = vector.load %arg7[%c0_17, %c0_18] : memref<1x256xf32, #tpu.memory_space<vmem>>, vector<1x256xf32>
    %33 = vector.broadcast %32 : vector<1x256xf32> to vector<128x256xf32>
    %34 = arith.addf %31, %33 : vector<128x256xf32>
    %cst_19 = arith.constant 0.000000e+00 : f32
    %35 = vector.broadcast %cst_19 : f32 to vector<128x256xf32>
    %36 = arith.maximumf %34, %35 : vector<128x256xf32>
    %37 = arith.truncf %36 : vector<128x256xf32> to vector<128x256xbf16>
    %c0_20 = arith.constant 0 : index
    %c0_21 = arith.constant 0 : index
    %38 = vector.load %arg8[%c0_20, %c0_21] : memref<256x1024xbf16, #tpu.memory_space<vmem>>, vector<256x1024xbf16>
    %cst_22 = arith.constant dense<0.000000e+00> : vector<128x1024xf32>
    %39 = tpu.matmul %37, %38, %cst_22 {dimension_numbers = #tpu.dot_dimension_numbers<[1], [0], [0], [1], [0, 0, 1, 1], [], []>} : vector<128x256xbf16>, vector<256x1024xbf16>, vector<128x1024xf32> -> vector<128x1024xf32>
    %c0_23 = arith.constant 0 : index
    %c0_24 = arith.constant 0 : index
    %40 = vector.load %arg9[%c0_23, %c0_24] : memref<1x1024xf32, #tpu.memory_space<vmem>>, vector<1x1024xf32>
    %41 = vector.broadcast %40 : vector<1x1024xf32> to vector<128x1024xf32>
    %42 = arith.addf %39, %41 : vector<128x1024xf32>
    %c0_25 = arith.constant 0 : index
    %c0_26 = arith.constant 0 : index
    %43 = vector.load %arg11[%c0_25, %c0_26] : memref<128x1024xf32, #tpu.memory_space<vmem>>, vector<128x1024xf32>
    tpu.vector_store %arg11[%c0_25, %c0_26], %42 {strides = array<i32>} : memref<128x1024xf32, #tpu.memory_space<vmem>>, vector<128x1024xf32>,
    %c0_27 = arith.constant 0 : index
    %c0_28 = arith.constant 0 : index
    %44 = vector.load %arg12[%c0_27, %c0_28] : memref<128x4xf32, #tpu.memory_space<vmem>>, vector<128x4xf32>
    tpu.vector_store %arg12[%c0_27, %c0_28], %12 {strides = array<i32>} : memref<128x4xf32, #tpu.memory_space<vmem>>, vector<128x4xf32>,
    return
  }
  func.func @transform_0(%arg0: i32) -> (i32, i32) {
    %c0_i32 = arith.constant 0 : i32
    %c0_i32_0 = arith.constant 0 : i32
    return %arg0, %c0_i32 : i32, i32
  }
  func.func @transform_1(%arg0: i32) -> (i32, i32) {
    %c0_i32 = arith.constant 0 : i32
    %c0_i32_0 = arith.constant 0 : i32
    %c0_i32_1 = arith.constant 0 : i32
    return %c0_i32, %c0_i32_0 : i32, i32
  }
  func.func @transform_2(%arg0: i32) -> (i32, i32) {
    %c0_i32 = arith.constant 0 : i32
    %c0_i32_0 = arith.constant 0 : i32
    %c0_i32_1 = arith.constant 0 : i32
    return %c0_i32, %c0_i32_0 : i32, i32
  }
  func.func @transform_3(%arg0: i32) -> (i32, i32) {
    %c0_i32 = arith.constant 0 : i32
    %c0_i32_0 = arith.constant 0 : i32
    %c0_i32_1 = arith.constant 0 : i32
    return %c0_i32, %c0_i32_0 : i32, i32
  }
  func.func @transform_4(%arg0: i32) -> (i32, i32) {
    %c0_i32 = arith.constant 0 : i32
    %c0_i32_0 = arith.constant 0 : i32
    %c0_i32_1 = arith.constant 0 : i32
    return %c0_i32, %c0_i32_0 : i32, i32
  }
  func.func @transform_5(%arg0: i32) -> (i32, i32) {
    %c0_i32 = arith.constant 0 : i32
    %c0_i32_0 = arith.constant 0 : i32
    %c0_i32_1 = arith.constant 0 : i32
    return %c0_i32, %c0_i32_0 : i32, i32
  }
  func.func @transform_6(%arg0: i32) -> (i32, i32) {
    %c0_i32 = arith.constant 0 : i32
    %c0_i32_0 = arith.constant 0 : i32
    %c0_i32_1 = arith.constant 0 : i32
    return %c0_i32, %c0_i32_0 : i32, i32
  }
  func.func @transform_7(%arg0: i32) -> (i32, i32) {
    %c0_i32 = arith.constant 0 : i32
    %c0_i32_0 = arith.constant 0 : i32
    %c0_i32_1 = arith.constant 0 : i32
    return %c0_i32, %c0_i32_0 : i32, i32
  }
  func.func @transform_8(%arg0: i32) -> (i32, i32) {
    %c0_i32 = arith.constant 0 : i32
    %c0_i32_0 = arith.constant 0 : i32
    %c0_i32_1 = arith.constant 0 : i32
    return %c0_i32, %c0_i32_0 : i32, i32
  }
  func.func @transform_9(%arg0: i32) -> (i32, i32) {
    %c0_i32 = arith.constant 0 : i32
    %c0_i32_0 = arith.constant 0 : i32
    return %arg0, %c0_i32 : i32, i32
  }
  func.func @transform_10(%arg0: i32) -> (i32, i32) {
    %c0_i32 = arith.constant 0 : i32
    %c0_i32_0 = arith.constant 0 : i32
    return %arg0, %c0_i32 : i32, i32
  }
  func.func @transform_11(%arg0: i32) -> (i32, i32) {
    %c0_i32 = arith.constant 0 : i32
    %c0_i32_0 = arith.constant 0 : i32
    return %arg0, %c0_i32 : i32, i32
  }
}

</mosaic_0001>

<llo_original>
// kernel: vae_forward.1
$region0: #{vae_forward.1}
  #allocation0 [shape = 'u32[]', space=smem, size = 0x4, offset = 0x4, fixed_abs, tag = 'smem constant byte address 0x4 - core index']
  #allocation1 [shape = 'u32[144,128]{1,0:T(1,128)}', space=vmem, size = 0x12000, scoped, tag = 'internal scratch']
  %s0 = inlined_call_operand.vmem [shape: bf16[256,1024], index: 0, kind: input, shape index: {}]
  %s1 = inlined_call_operand.vmem [shape: bf16[1024,256], index: 1, kind: input, shape index: {}]
  %s2 = inlined_call_operand.vmem [shape: f32[1,256], index: 2, kind: input, shape index: {}]
  %s3 = inlined_call_operand.vmem [shape: f32[256,4], index: 3, kind: input, shape index: {}]
  %s4 = inlined_call_operand.vmem [shape: f32[1,4], index: 4, kind: input, shape index: {}]
  %s5 = inlined_call_operand.vmem [shape: f32[2,256], index: 5, kind: input, shape index: {}]
  %s6 = inlined_call_operand.vmem [shape: f32[1,256], index: 6, kind: input, shape index: {}]
  %s7 = inlined_call_operand.vmem [shape: bf16[256,1024], index: 7, kind: input, shape index: {}]
  %s8 = inlined_call_operand.vmem [shape: f32[1,1024], index: 8, kind: input, shape index: {}]
  %s9 = inlined_call_operand.vmem [shape: f32[256,2], index: 9, kind: input, shape index: {}]
  %s10 = inlined_call_operand.vmem [shape: f32[256,1024], index: 10, kind: output, shape index: {0}]
  %s11 = inlined_call_operand.vmem [shape: f32[256,4], index: 11, kind: output, shape index: {1}]
  %12 = xla_tuple %s10, %s11
  %s13 = sld [smem:[#allocation0]]
  $region81: #{vae_forward.1} parent=0
    _
  %s15 = ssub.s32 1, %s13
  %s16 = scalar_select 0, %s15, %s13
  loop: start=0, step=1, limit=4
  $region2: #{vae_forward.1} parent=0 // loop_pre_header
    _
  $region3: #{vae_forward.1} parent=0 // loop_header
    %s18 = sphi 0, %s22
    %p19 = scmp.ge.s32.totalorder %s18, 4
    %s28 = sphi 0, %s30
    %s31 = sphi 0, %s28
    %s32 = sphi 0, %s31
    %s48 = sphi 0, %s32
    %s52 = sphi 0, %s52
    %s54 = sphi 0, %s52
    %s55 = sphi 0, %s54
    %s69 = sphi 0, %s55
    %s73 = sphi 0, %s73
    %s75 = sphi 0, %s73
    %s76 = sphi 0, %s75
    %s90 = sphi 0, %s76
    %s94 = sphi 0, %s94
    %s96 = sphi 0, %s94
    %s97 = sphi 0, %s96
    %s111 = sphi 0, %s97
    %s115 = sphi 0, %s115
    %s117 = sphi 0, %s115
    %s118 = sphi 0, %s117
    %s132 = sphi 0, %s118
    %s136 = sphi 0, %s136
    %s138 = sphi 0, %s136
    %s139 = sphi 0, %s138
    %s153 = sphi 0, %s139
    %s157 = sphi 0, %s157
    %s159 = sphi 0, %s157
    %s160 = sphi 0, %s159
    %s174 = sphi 0, %s160
    %s178 = sphi 0, %s178
    %s180 = sphi 0, %s178
    %s181 = sphi 0, %s180
    %s195 = sphi 0, %s181
    %s199 = sphi 0, %s199
    %s201 = sphi 0, %s199
    %s202 = sphi 0, %s201
    %s216 = sphi 0, %s202
    %s222 = sphi 0, %s224
    %s225 = sphi 0, %s222
    %s226 = sphi 0, %s225
    %s242 = sphi 0, %s226
    %s248 = sphi 0, %s250
    %s251 = sphi 0, %s248
    %s252 = sphi 0, %s251
    %s268 = sphi 0, %s252
    %s274 = sphi 0, %s276
    %s277 = sphi 0, %s274
    %s278 = sphi 0, %s277
    %s294 = sphi 0, %s278
  $region4: #{vae_forward.1} parent=0 // loop_header_branch
    %21 = sbr.rel (%p19) target = $region8
  $region5: #{vae_forward.1} parent=0 // loop_body
    %s23 = ssub.s32 %s18, 1
    %s24 = ssub.s32 %s18, 2
    %s25 = sadd.s32 %s18, 1
    %s26 = ssub.s32 %s18, %s25
    %p27 = scmp.eq.s32.totalorder %s26, 0
    %s29 = sadd.s32 %s28, 1
    %s30 = scalar_select %p27, %s28, %s29
    %p33 = pneg %p27
    %p34 = scmp.eq.s32.totalorder %s18, 1
    %p35 = por %p33, %p34
    %p36 = scmp.ne.s32.totalorder %s28, %s31
    %p37 = scmp.eq.s32.totalorder %s18, 0
    %p38 = por %p36, %p37
    %p39 = scmp.ne.s32.totalorder %s28, %s31
    %p40 = scmp.eq.s32.totalorder %s23, 1
    %p41 = por %p39, %p40
    %p42 = scmp.ne.s32.totalorder %s31, %s32
    %p43 = scmp.eq.s32.totalorder %s23, 0
    %p44 = por %p42, %p43
    %p45 = scmp.ne.s32.totalorder %s31, %s32
    %p46 = scmp.eq.s32.totalorder %s24, 1
    %p47 = por %p45, %p46
    %p49 = scmp.ne.s32.totalorder %s32, %s48
    %p50 = scmp.eq.s32.totalorder %s24, 0
    %p51 = por %p49, %p50
    %s53 = sadd.s32 %s52, 1
    %p56 = scmp.eq.s32.totalorder %s18, 1
    %p57 = scmp.ne.s32.totalorder %s52, %s54
    %p58 = scmp.eq.s32.totalorder %s18, 0
    %p59 = por %p57, %p58
    %p60 = scmp.ne.s32.totalorder %s52, %s54
    %p61 = scmp.eq.s32.totalorder %s23, 1
    %p62 = por %p60, %p61
    %p63 = scmp.ne.s32.totalorder %s54, %s55
    %p64 = scmp.eq.s32.totalorder %s23, 0
    %p65 = por %p63, %p64
    %p66 = scmp.ne.s32.totalorder %s54, %s55
    %p67 = scmp.eq.s32.totalorder %s24, 1
    %p68 = por %p66, %p67
    %p70 = scmp.ne.s32.totalorder %s55, %s69
    %p71 = scmp.eq.s32.totalorder %s24, 0
    %p72 = por %p70, %p71
    %s74 = sadd.s32 %s73, 1
    %p77 = scmp.eq.s32.totalorder %s18, 1
    %p78 = scmp.ne.s32.totalorder %s73, %s75
    %p79 = scmp.eq.s32.totalorder %s18, 0
    %p80 = por %p78, %p79
    %p81 = scmp.ne.s32.totalorder %s73, %s75
    %p82 = scmp.eq.s32.totalorder %s23, 1
    %p83 = por %p81, %p82
    %p84 = scmp.ne.s32.totalorder %s75, %s76
    %p85 = scmp.eq.s32.totalorder %s23, 0
    %p86 = por %p84, %p85
    %p87 = scmp.ne.s32.totalorder %s75, %s76
    %p88 = scmp.eq.s32.totalorder %s24, 1
    %p89 = por %p87, %p88
    %p91 = scmp.ne.s32.totalorder %s76, %s90
    %p92 = scmp.eq.s32.totalorder %s24, 0
    %p93 = por %p91, %p92
    %s95 = sadd.s32 %s94, 1
    %p98 = scmp.eq.s32.totalorder %s18, 1
    %p99 = scmp.ne.s32.totalorder %s94, %s96
    %p100 = scmp.eq.s32.totalorder %s18, 0
    %p101 = por %p99, %p100
    %p102 = scmp.ne.s32.totalorder %s94, %s96
    %p103 = scmp.eq.s32.totalorder %s23, 1
    %p104 = por %p102, %p103
    %p105 = scmp.ne.s32.totalorder %s96, %s97
    %p106 = scmp.eq.s32.totalorder %s23, 0
    %p107 = por %p105, %p106
    %p108 = scmp.ne.s32.totalorder %s96, %s97
    %p109 = scmp.eq.s32.totalorder %s24, 1
    %p110 = por %p108, %p109
    %p112 = scmp.ne.s32.totalorder %s97, %s111
    %p113 = scmp.eq.s32.totalorder %s24, 0
    %p114 = por %p112, %p113
    %s116 = sadd.s32 %s115, 1
    %p119 = scmp.eq.s32.totalorder %s18, 1
    %p120 = scmp.ne.s32.totalorder %s115, %s117
    %p121 = scmp.eq.s32.totalorder %s18, 0
    %p122 = por %p120, %p121
    %p123 = scmp.ne.s32.totalorder %s115, %s117
    %p124 = scmp.eq.s32.totalorder %s23, 1
    %p125 = por %p123, %p124
    %p126 = scmp.ne.s32.totalorder %s117, %s118
    %p127 = scmp.eq.s32.totalorder %s23, 0
    %p128 = por %p126, %p127
    %p129 = scmp.ne.s32.totalorder %s117, %s118
    %p130 = scmp.eq.s32.totalorder %s24, 1
    %p131 = por %p129, %p130
    %p133 = scmp.ne.s32.totalorder %s118, %s132
    %p134 = scmp.eq.s32.totalorder %s24, 0
    %p135 = por %p133, %p134
    %s137 = sadd.s32 %s136, 1
    %p140 = scmp.eq.s32.totalorder %s18, 1
    %p141 = scmp.ne.s32.totalorder %s136, %s138
    %p142 = scmp.eq.s32.totalorder %s18, 0
    %p143 = por %p141, %p142
    %p144 = scmp.ne.s32.totalorder %s136, %s138
    %p145 = scmp.eq.s32.totalorder %s23, 1
    %p146 = por %p144, %p145
    %p147 = scmp.ne.s32.totalorder %s138, %s139
    %p148 = scmp.eq.s32.totalorder %s23, 0
    %p149 = por %p147, %p148
    %p150 = scmp.ne.s32.totalorder %s138, %s139
    %p151 = scmp.eq.s32.totalorder %s24, 1
    %p152 = por %p150, %p151
    %p154 = scmp.ne.s32.totalorder %s139, %s153
    %p155 = scmp.eq.s32.totalorder %s24, 0
    %p156 = por %p154, %p155
    %s158 = sadd.s32 %s157, 1
    %p161 = scmp.eq.s32.totalorder %s18, 1
    %p162 = scmp.ne.s32.totalorder %s157, %s159
    %p163 = scmp.eq.s32.totalorder %s18, 0
    %p164 = por %p162, %p163
    %p165 = scmp.ne.s32.totalorder %s157, %s159
    %p166 = scmp.eq.s32.totalorder %s23, 1
    %p167 = por %p165, %p166
    %p168 = scmp.ne.s32.totalorder %s159, %s160
    %p169 = scmp.eq.s32.totalorder %s23, 0
    %p170 = por %p168, %p169
    %p171 = scmp.ne.s32.totalorder %s159, %s160
    %p172 = scmp.eq.s32.totalorder %s24, 1
    %p173 = por %p171, %p172
    %p175 = scmp.ne.s32.totalorder %s160, %s174
    %p176 = scmp.eq.s32.totalorder %s24, 0
    %p177 = por %p175, %p176
    %s179 = sadd.s32 %s178, 1
    %p182 = scmp.eq.s32.totalorder %s18, 1
    %p183 = scmp.ne.s32.totalorder %s178, %s180
    %p184 = scmp.eq.s32.totalorder %s18, 0
    %p185 = por %p183, %p184
    %p186 = scmp.ne.s32.totalorder %s178, %s180
    %p187 = scmp.eq.s32.totalorder %s23, 1
    %p188 = por %p186, %p187
    %p189 = scmp.ne.s32.totalorder %s180, %s181
    %p190 = scmp.eq.s32.totalorder %s23, 0
    %p191 = por %p189, %p190
    %p192 = scmp.ne.s32.totalorder %s180, %s181
    %p193 = scmp.eq.s32.totalorder %s24, 1
    %p194 = por %p192, %p193
    %p196 = scmp.ne.s32.totalorder %s181, %s195
    %p197 = scmp.eq.s32.totalorder %s24, 0
    %p198 = por %p196, %p197
    %s200 = sadd.s32 %s199, 1
    %p203 = scmp.eq.s32.totalorder %s18, 1
    %p204 = scmp.ne.s32.totalorder %s199, %s201
    %p205 = scmp.eq.s32.totalorder %s18, 0
    %p206 = por %p204, %p205
    %p207 = scmp.ne.s32.totalorder %s199, %s201
    %p208 = scmp.eq.s32.totalorder %s23, 1
    %p209 = por %p207, %p208
    %p210 = scmp.ne.s32.totalorder %s201, %s202
    %p211 = scmp.eq.s32.totalorder %s23, 0
    %p212 = por %p210, %p211
    %p213 = scmp.ne.s32.totalorder %s201, %s202
    %p214 = scmp.eq.s32.totalorder %s24, 1
    %p215 = por %p213, %p214
    %p217 = scmp.ne.s32.totalorder %s202, %s216
    %p218 = scmp.eq.s32.totalorder %s24, 0
    %p219 = por %p217, %p218
    %s220 = ssub.s32 %s18, %s25
    %p221 = scmp.eq.s32.totalorder %s220, 0
    %s223 = sadd.s32 %s222, 1
    %s224 = scalar_select %p221, %s222, %s223
    %p227 = pneg %p221
    %p228 = scmp.eq.s32.totalorder %s18, 1
    %p229 = por %p227, %p228
    %p230 = scmp.ne.s32.totalorder %s222, %s225
    %p231 = scmp.eq.s32.totalorder %s18, 0
    %p232 = por %p230, %p231
    %p233 = scmp.ne.s32.totalorder %s222, %s225
    %p234 = scmp.eq.s32.totalorder %s23, 1
    %p235 = por %p233, %p234
    %p236 = scmp.ne.s32.totalorder %s225, %s226
    %p237 = scmp.eq.s32.totalorder %s23, 0
    %p238 = por %p236, %p237
    %p239 = scmp.ne.s32.totalorder %s225, %s226
    %p240 = scmp.eq.s32.totalorder %s24, 1
    %p241 = por %p239, %p240
    %p243 = scmp.ne.s32.totalorder %s226, %s242
    %p244 = scmp.eq.s32.totalorder %s24, 0
    %p245 = por %p243, %p244
    %s246 = ssub.s32 %s18, %s25
    %p247 = scmp.eq.s32.totalorder %s246, 0
    %s249 = sadd.s32 %s248, 1
    %s250 = scalar_select %p247, %s248, %s249
    %p253 = pneg %p247
    %p254 = scmp.eq.s32.totalorder %s18, 1
    %p255 = por %p253, %p254
    %p256 = scmp.ne.s32.totalorder %s248, %s251
    %p257 = scmp.eq.s32.totalorder %s18, 0
    %p258 = por %p256, %p257
    %p259 = scmp.ne.s32.totalorder %s248, %s251
    %p260 = scmp.eq.s32.totalorder %s23, 1
    %p261 = por %p259, %p260
    %p262 = scmp.ne.s32.totalorder %s251, %s252
    %p263 = scmp.eq.s32.totalorder %s23, 0
    %p264 = por %p262, %p263
    %p265 = scmp.ne.s32.totalorder %s251, %s252
    %p266 = scmp.eq.s32.totalorder %s24, 1
    %p267 = por %p265, %p266
    %p269 = scmp.ne.s32.totalorder %s252, %s268
    %p270 = scmp.eq.s32.totalorder %s24, 0
    %p271 = por %p269, %p270
    %s272 = ssub.s32 %s18, %s25
    %p273 = scmp.eq.s32.totalorder %s272, 0
    %s275 = sadd.s32 %s274, 1
    %s276 = scalar_select %p273, %s274, %s275
    %p279 = pneg %p273
    %p280 = scmp.eq.s32.totalorder %s18, 1
    %p281 = por %p279, %p280
    %p282 = scmp.ne.s32.totalorder %s274, %s277
    %p283 = scmp.eq.s32.totalorder %s18, 0
    %p284 = por %p282, %p283
    %p285 = scmp.ne.s32.totalorder %s274, %s277
    %p286 = scmp.eq.s32.totalorder %s23, 1
    %p287 = por %p285, %p286
    %p288 = scmp.ne.s32.totalorder %s277, %s278
    %p289 = scmp.eq.s32.totalorder %s23, 0
    %p290 = por %p288, %p289
    %p291 = scmp.ne.s32.totalorder %s277, %s278
    %p292 = scmp.eq.s32.totalorder %s24, 1
    %p293 = por %p291, %p292
    %p295 = scmp.ne.s32.totalorder %s278, %s294
    %p296 = scmp.eq.s32.totalorder %s24, 0
    %p297 = por %p295, %p296
    %p298 = scmp.le.s32.totalorder 1, %s18
    %p299 = scmp.lt.s32.totalorder %s18, 3
    %p300 = pnand %p298, %p299
    %p301 = pneg %p300
    // Predicated region
    $region9: #{vae_forward.1} parent=5 // pred_check
      _
    $region10: #{vae_forward.1} parent=5 // pred_check_branch
      %303 = sbr.rel (%p300) target = $region12
    $region11: #{vae_forward.1} parent=5 // pred_region
      %s304 = ssub.s32 %s18, 1
      // Predicated region
      $region13: #{vae_forward.1} parent=11 // pred_check
        %p305 = pneg %p65
      $region14: #{vae_forward.1} parent=11 // pred_check_branch
        %307 = sbr.rel (%p305) target = $region16
      $region15: #{vae_forward.1} parent=11 // pred_region
        _
      $region16: #{vae_forward.1} parent=11 // pred_fallthru
        _
      // Predicated region
      $region17: #{vae_forward.1} parent=11 // pred_check
        %p308 = pneg %p86
      $region18: #{vae_forward.1} parent=11 // pred_check_branch
        %310 = sbr.rel (%p308) target = $region20
      $region19: #{vae_forward.1} parent=11 // pred_region
        _
      $region20: #{vae_forward.1} parent=11 // pred_fallthru
        _
      // Predicated region
      $region21: #{vae_forward.1} parent=11 // pred_check
        %p311 = pneg %p107
      $region22: #{vae_forward.1} parent=11 // pred_check_branch
        %313 = sbr.rel (%p311) target = $region24
      $region23: #{vae_forward.1} parent=11 // pred_region
        _
      $region24: #{vae_forward.1} parent=11 // pred_fallthru
        _
      // Predicated region
      $region25: #{vae_forward.1} parent=11 // pred_check
        %p314 = pneg %p128
      $region26: #{vae_forward.1} parent=11 // pred_check_branch
        %316 = sbr.rel (%p314) target = $region28
      $region27: #{vae_forward.1} parent=11 // pred_region
        _
      $region28: #{vae_forward.1} parent=11 // pred_fallthru
        _
      // Predicated region
      $region29: #{vae_forward.1} parent=11 // pred_check
        %p317 = pneg %p149
      $region30: #{vae_forward.1} parent=11 // pred_check_branch
        %319 = sbr.rel (%p317) target = $region32
      $region31: #{vae_forward.1} parent=11 // pred_region
        _
      $region32: #{vae_forward.1} parent=11 // pred_fallthru
        _
      // Predicated region
      $region33: #{vae_forward.1} parent=11 // pred_check
        %p320 = pneg %p170
      $region34: #{vae_forward.1} parent=11 // pred_check_branch
        %322 = sbr.rel (%p320) target = $region36
      $region35: #{vae_forward.1} parent=11 // pred_region
        _
      $region36: #{vae_forward.1} parent=11 // pred_fallthru
        _
      // Predicated region
      $region37: #{vae_forward.1} parent=11 // pred_check
        %p323 = pneg %p191
      $region38: #{vae_forward.1} parent=11 // pred_check_branch
        %325 = sbr.rel (%p323) target = $region40
      $region39: #{vae_forward.1} parent=11 // pred_region
        _
      $region40: #{vae_forward.1} parent=11 // pred_fallthru
        _
      // Predicated region
      $region41: #{vae_forward.1} parent=11 // pred_check
        %p326 = pneg %p212
      $region42: #{vae_forward.1} parent=11 // pred_check_branch
        %328 = sbr.rel (%p326) target = $region44
      $region43: #{vae_forward.1} parent=11 // pred_region
        _
      $region44: #{vae_forward.1} parent=11 // pred_fallthru
        _
    $region12: #{vae_forward.1} parent=5 // pred_fallthru
      _
    %p329 = scmp.lt.s32.totalorder %s18, 2
    // Predicated region
    $region45: #{vae_forward.1} parent=5 // pred_check
      %p330 = pneg %p329
    $region46: #{vae_forward.1} parent=5 // pred_check_branch
      %332 = sbr.rel (%p330) target = $region48
    $region47: #{vae_forward.1} parent=5 // pred_region
      // Predicated region
      $region49: #{vae_forward.1} parent=47 // pred_check
        %p333 = pneg %p38
      $region50: #{vae_forward.1} parent=47 // pred_check_branch
        %335 = sbr.rel (%p333) target = $region52
      $region51: #{vae_forward.1} parent=47 // pred_region
        %s336 = smul.u32 16, %s18
        %p337 = scmp.lt.s32.totalorder %s336, 31
        %s338 = scalar_select %p337, %s336, 31
        %s339 = smul.addr %s338, 8
        %s340 = smul.addr %s339, 4
        %s341 = scalar_lea.vmem %s0, %s340
        %s342 = smul.u32 16, %s18
      $region52: #{vae_forward.1} parent=47 // pred_fallthru
        _
      // Predicated region
      $region53: #{vae_forward.1} parent=47 // pred_check
        %p343 = pneg %p232
      $region54: #{vae_forward.1} parent=47 // pred_check_branch
        %345 = sbr.rel (%p343) target = $region56
      $region55: #{vae_forward.1} parent=47 // pred_region
        %s346 = smul.u32 16, %s18
        %p347 = scmp.lt.s32.totalorder %s346, 31
        %s348 = scalar_select %p347, %s346, 31
        %s349 = smul.addr %s348, 8
        %s350 = scalar_lea.vmem %s9, %s349
        %s351 = smul.u32 16, %s18
      $region56: #{vae_forward.1} parent=47 // pred_fallthru
        _
    $region48: #{vae_forward.1} parent=5 // pred_fallthru
      _
    %p352 = scmp.le.s32.totalorder 1, %s18
    %p353 = scmp.lt.s32.totalorder %s18, 3
    %p354 = pnand %p352, %p353
    %p355 = pneg %p354
    // Predicated region
    $region57: #{vae_forward.1} parent=5 // pred_check
      _
    $region58: #{vae_forward.1} parent=5 // pred_check_branch
      %357 = sbr.rel (%p354) target = $region60
    $region59: #{vae_forward.1} parent=5 // pred_region
      %s358 = ssub.s32 %s18, 1
      %s359 = smul.u32 16, %s23
      %p360 = scmp.lt.s32.totalorder %s359, 31
      %s361 = scalar_select %p360, %s359, 31
      %s362 = smul.addr %s361, 8
      %s363 = smul.addr %s362, 4
      %s364 = scalar_lea.vmem %s0, %s363
      %p365 = pneg %p44
      %p366 = pneg %p41
      %p367 = pneg %p65
      %p368 = pneg %p62
      %p369 = pneg %p86
      %p370 = pneg %p83
      %p371 = pneg %p107
      %p372 = pneg %p104
      %p373 = pneg %p128
      %p374 = pneg %p125
      %p375 = pneg %p149
      %p376 = pneg %p146
      %p377 = pneg %p170
      %p378 = pneg %p167
      %p379 = pneg %p191
      %p380 = pneg %p188
      %p381 = pneg %p212
      %p382 = pneg %p209
      %s383 = smul.u32 16, %s23
      %p384 = scmp.lt.s32.totalorder %s383, 31
      %s385 = scalar_select %p384, %s383, 31
      %s386 = smul.addr %s385, 8
      %s387 = scalar_lea.vmem %s9, %s386
      %p388 = pneg %p238
      %p389 = pneg %p235
      %p390 = pneg %p264
      %p391 = pneg %p261
      %s392 = smul.u32 16, %s23
      %p393 = scmp.lt.s32.totalorder %s392, 31
      %s394 = scalar_select %p393, %s392, 31
      %s395 = smul.addr %s394, 8
      %s396 = smul.addr %s395, 8
      %s397 = scalar_lea.vmem %s10, %s396
      %p398 = pneg %p290
      %p399 = pneg %p287
      %s400 = smul.u32 16, %s23
      %p401 = scmp.lt.s32.totalorder %s400, 31
      %s402 = scalar_select %p401, %s400, 31
      %s403 = smul.addr %s402, 8
      %s404 = scalar_lea.vmem %s11, %s403
      %s405 = smul.u32 16, %s23
      %p406 = scmp.lt.s32.totalorder %s405, 31
      %s407 = scalar_select %p406, %s405, 31
      %s408 = smul.addr %s407, 8
      %s409 = smul.addr %s408, 4
      %s410 = scalar_lea.vmem %s0, %s409
      %s411 = smul.u32 16, %s23
      %s412 = smul.u32 16, %s23
      %p413 = scmp.lt.s32.totalorder %s412, 31
      %s414 = scalar_select %p413, %s412, 31
      %s415 = smul.addr %s414, 8
      %s416 = scalar_lea.vmem %s9, %s415
      %s417 = smul.u32 16, %s23
      %s418 = smul.u32 16, %s23
      %p419 = scmp.lt.s32.totalorder %s418, 31
      %s420 = scalar_select %p419, %s418, 31
      %s421 = smul.addr %s420, 8
      %s422 = smul.addr %s421, 8
      %s423 = scalar_lea.vmem %s10, %s422
      %s424 = smul.u32 16, %s23
      %s425 = smul.u32 16, %s23
      %p426 = scmp.lt.s32.totalorder %s425, 31
      %s427 = scalar_select %p426, %s425, 31
      %s428 = smul.addr %s427, 8
      %s429 = scalar_lea.vmem %s11, %s428
      %s430 = smul.u32 16, %s23
      %v431 = vld [vmem:[%s410] sm:$0xff]
      %v432 = vld [vmem:[%s410 + $0x8] sm:$0xff]
      %v433 = vld [vmem:[%s410 + $0x10] sm:$0xff]
      %v434 = vld [vmem:[%s410 + $0x18] sm:$0xff]
      %v435 = vld [vmem:[%s410 + $0x20] sm:$0xff]
      %v436 = vld [vmem:[%s410 + $0x28] sm:$0xff]
      %v437 = vld [vmem:[%s410 + $0x30] sm:$0xff]
      %v438 = vld [vmem:[%s410 + $0x38] sm:$0xff]
      %v439 = vld [vmem:[%s410 + $0x40] sm:$0xff]
      %v440 = vld [vmem:[%s410 + $0x48] sm:$0xff]
      %v441 = vld [vmem:[%s410 + $0x50] sm:$0xff]
      %v442 = vld [vmem:[%s410 + $0x58] sm:$0xff]
      %v443 = vld [vmem:[%s410 + $0x60] sm:$0xff]
      %v444 = vld [vmem:[%s410 + $0x68] sm:$0xff]
      %v445 = vld [vmem:[%s410 + $0x70] sm:$0xff]
      %v446 = vld [vmem:[%s410 + $0x78] sm:$0xff]
      %v447 = vld [vmem:[%s410 + $0x80] sm:$0xff]
      %v448 = vld [vmem:[%s410 + $0x88] sm:$0xff]
      %v449 = vld [vmem:[%s410 + $0x90] sm:$0xff]
      %v450 = vld [vmem:[%s410 + $0x98] sm:$0xff]
      %v451 = vld [vmem:[%s410 + $0xa0] sm:$0xff]
      %v452 = vld [vmem:[%s410 + $0xa8] sm:$0xff]
      %v453 = vld [vmem:[%s410 + $0xb0] sm:$0xff]
      %v454 = vld [vmem:[%s410 + $0xb8] sm:$0xff]
      %v455 = vld [vmem:[%s410 + $0xc0] sm:$0xff]
      %v456 = vld [vmem:[%s410 + $0xc8] sm:$0xff]
      %v457 = vld [vmem:[%s410 + $0xd0] sm:$0xff]
      %v458 = vld [vmem:[%s410 + $0xd8] sm:$0xff]
      %v459 = vld [vmem:[%s410 + $0xe0] sm:$0xff]
      %v460 = vld [vmem:[%s410 + $0xe8] sm:$0xff]
      %v461 = vld [vmem:[%s410 + $0xf0] sm:$0xff]
      %v462 = vld [vmem:[%s410 + $0xf8] sm:$0xff]
      %v463 = vld [vmem:[%s410 + $0x100] sm:$0xff]
      %v464 = vld [vmem:[%s410 + $0x108] sm:$0xff]
      %v465 = vld [vmem:[%s410 + $0x110] sm:$0xff]
      %v466 = vld [vmem:[%s410 + $0x118] sm:$0xff]
      %v467 = vld [vmem:[%s410 + $0x120] sm:$0xff]
      %v468 = vld [vmem:[%s410 + $0x128] sm:$0xff]
      %v469 = vld [vmem:[%s410 + $0x130] sm:$0xff]
      %v470 = vld [vmem:[%s410 + $0x138] sm:$0xff]
      %v471 = vld [vmem:[%s410 + $0x140] sm:$0xff]
      %v472 = vld [vmem:[%s410 + $0x148] sm:$0xff]
      %v473 = vld [vmem:[%s410 + $0x150] sm:$0xff]
      %v474 = vld [vmem:[%s410 + $0x158] sm:$0xff]
      %v475 = vld [vmem:[%s410 + $0x160] sm:$0xff]
      %v476 = vld [vmem:[%s410 + $0x168] sm:$0xff]
      %v477 = vld [vmem:[%s410 + $0x170] sm:$0xff]
      %v478 = vld [vmem:[%s410 + $0x178] sm:$0xff]
      %v479 = vld [vmem:[%s410 + $0x180] sm:$0xff]
      %v480 = vld [vmem:[%s410 + $0x188] sm:$0xff]
      %v481 = vld [vmem:[%s410 + $0x190] sm:$0xff]
      %v482 = vld [vmem:[%s410 + $0x198] sm:$0xff]
      %v483 = vld [vmem:[%s410 + $0x1a0] sm:$0xff]
      %v484 = vld [vmem:[%s410 + $0x1a8] sm:$0xff]
      %v485 = vld [vmem:[%s410 + $0x1b0] sm:$0xff]
      %v486 = vld [vmem:[%s410 + $0x1b8] sm:$0xff]
      %v487 = vld [vmem:[%s410 + $0x1c0] sm:$0xff]
      %v488 = vld [vmem:[%s410 + $0x1c8] sm:$0xff]
      %v489 = vld [vmem:[%s410 + $0x1d0] sm:$0xff]
      %v490 = vld [vmem:[%s410 + $0x1d8] sm:$0xff]
      %v491 = vld [vmem:[%s410 + $0x1e0] sm:$0xff]
      %v492 = vld [vmem:[%s410 + $0x1e8] sm:$0xff]
      %v493 = vld [vmem:[%s410 + $0x1f0] sm:$0xff]
      %v494 = vld [vmem:[%s410 + $0x1f8] sm:$0xff]
      %v495 = vld [vmem:[%s1] sm:$0xff]
      %v496 = vld [vmem:[%s1 + $0x8] sm:$0xff]
      %v497 = vld [vmem:[%s1 + $0x10] sm:$0xff]
      %v498 = vld [vmem:[%s1 + $0x18] sm:$0xff]
      %v499 = vld [vmem:[%s1 + $0x20] sm:$0xff]
      %v500 = vld [vmem:[%s1 + $0x28] sm:$0xff]
      %v501 = vld [vmem:[%s1 + $0x30] sm:$0xff]
      %v502 = vld [vmem:[%s1 + $0x38] sm:$0xff]
      %v503 = vld [vmem:[%s1 + $0x40] sm:$0xff]
      %v504 = vld [vmem:[%s1 + $0x48] sm:$0xff]
      %v505 = vld [vmem:[%s1 + $0x50] sm:$0xff]
      %v506 = vld [vmem:[%s1 + $0x58] sm:$0xff]
      %v507 = vld [vmem:[%s1 + $0x60] sm:$0xff]
      %v508 = vld [vmem:[%s1 + $0x68] sm:$0xff]
      %v509 = vld [vmem:[%s1 + $0x70] sm:$0xff]
      %v510 = vld [vmem:[%s1 + $0x78] sm:$0xff]
      %v511 = vld [vmem:[%s1 + $0x80] sm:$0xff]
      %v512 = vld [vmem:[%s1 + $0x88] sm:$0xff]
      %v513 = vld [vmem:[%s1 + $0x90] sm:$0xff]
      %v514 = vld [vmem:[%s1 + $0x98] sm:$0xff]
      %v515 = vld [vmem:[%s1 + $0xa0] sm:$0xff]
      %v516 = vld [vmem:[%s1 + $0xa8] sm:$0xff]
      %v517 = vld [vmem:[%s1 + $0xb0] sm:$0xff]
      %v518 = vld [vmem:[%s1 + $0xb8] sm:$0xff]
      %v519 = vld [vmem:[%s1 + $0xc0] sm:$0xff]
      %v520 = vld [vmem:[%s1 + $0xc8] sm:$0xff]
      %v521 = vld [vmem:[%s1 + $0xd0] sm:$0xff]
      %v522 = vld [vmem:[%s1 + $0xd8] sm:$0xff]
      %v523 = vld [vmem:[%s1 + $0xe0] sm:$0xff]
      %v524 = vld [vmem:[%s1 + $0xe8] sm:$0xff]
      %v525 = vld [vmem:[%s1 + $0xf0] sm:$0xff]
      %v526 = vld [vmem:[%s1 + $0xf8] sm:$0xff]
      %v527 = vld [vmem:[%s1 + $0x100] sm:$0xff]
      %v528 = vld [vmem:[%s1 + $0x108] sm:$0xff]
      %v529 = vld [vmem:[%s1 + $0x110] sm:$0xff]
      %v530 = vld [vmem:[%s1 + $0x118] sm:$0xff]
      %v531 = vld [vmem:[%s1 + $0x120] sm:$0xff]
      %v532 = vld [vmem:[%s1 + $0x128] sm:$0xff]
      %v533 = vld [vmem:[%s1 + $0x130] sm:$0xff]
      %v534 = vld [vmem:[%s1 + $0x138] sm:$0xff]
      %v535 = vld [vmem:[%s1 + $0x140] sm:$0xff]
      %v536 = vld [vmem:[%s1 + $0x148] sm:$0xff]
      %v537 = vld [vmem:[%s1 + $0x150] sm:$0xff]
      %v538 = vld [vmem:[%s1 + $0x158] sm:$0xff]
      %v539 = vld [vmem:[%s1 + $0x160] sm:$0xff]
      %v540 = vld [vmem:[%s1 + $0x168] sm:$0xff]
      %v541 = vld [vmem:[%s1 + $0x170] sm:$0xff]
      %v542 = vld [vmem:[%s1 + $0x178] sm:$0xff]
      %v543 = vld [vmem:[%s1 + $0x180] sm:$0xff]
      %v544 = vld [vmem:[%s1 + $0x188] sm:$0xff]
      %v545 = vld [vmem:[%s1 + $0x190] sm:$0xff]
      %v546 = vld [vmem:[%s1 + $0x198] sm:$0xff]
      %v547 = vld [vmem:[%s1 + $0x1a0] sm:$0xff]
      %v548 = vld [vmem:[%s1 + $0x1a8] sm:$0xff]
      %v549 = vld [vmem:[%s1 + $0x1b0] sm:$0xff]
      %v550 = vld [vmem:[%s1 + $0x1b8] sm:$0xff]
      %v551 = vld [vmem:[%s1 + $0x1c0] sm:$0xff]
      %v552 = vld [vmem:[%s1 + $0x1c8] sm:$0xff]
      %v553 = vld [vmem:[%s1 + $0x1d0] sm:$0xff]
      %v554 = vld [vmem:[%s1 + $0x1d8] sm:$0xff]
      %v555 = vld [vmem:[%s1 + $0x1e0] sm:$0xff]
      %v556 = vld [vmem:[%s1 + $0x1e8] sm:$0xff]
      %v557 = vld [vmem:[%s1 + $0x1f0] sm:$0xff]
      %v558 = vld [vmem:[%s1 + $0x1f8] sm:$0xff]
      %v559 = vld [vmem:[%s1 + $0x200] sm:$0xff]
      %v560 = vld [vmem:[%s1 + $0x208] sm:$0xff]
      %v561 = vld [vmem:[%s1 + $0x210] sm:$0xff]
      %v562 = vld [vmem:[%s1 + $0x218] sm:$0xff]
      %v563 = vld [vmem:[%s1 + $0x220] sm:$0xff]
      %v564 = vld [vmem:[%s1 + $0x228] sm:$0xff]
      %v565 = vld [vmem:[%s1 + $0x230] sm:$0xff]
      %v566 = vld [vmem:[%s1 + $0x238] sm:$0xff]
      %v567 = vld [vmem:[%s1 + $0x240] sm:$0xff]
      %v568 = vld [vmem:[%s1 + $0x248] sm:$0xff]
      %v569 = vld [vmem:[%s1 + $0x250] sm:$0xff]
      %v570 = vld [vmem:[%s1 + $0x258] sm:$0xff]
      %v571 = vld [vmem:[%s1 + $0x260] sm:$0xff]
      %v572 = vld [vmem:[%s1 + $0x268] sm:$0xff]
      %v573 = vld [vmem:[%s1 + $0x270] sm:$0xff]
      %v574 = vld [vmem:[%s1 + $0x278] sm:$0xff]
      %v575 = vld [vmem:[%s1 + $0x280] sm:$0xff]
      %v576 = vld [vmem:[%s1 + $0x288] sm:$0xff]
      %v577 = vld [vmem:[%s1 + $0x290] sm:$0xff]
      %v578 = vld [vmem:[%s1 + $0x298] sm:$0xff]
      %v579 = vld [vmem:[%s1 + $0x2a0] sm:$0xff]
      %v580 = vld [vmem:[%s1 + $0x2a8] sm:$0xff]
      %v581 = vld [vmem:[%s1 + $0x2b0] sm:$0xff]
      %v582 = vld [vmem:[%s1 + $0x2b8] sm:$0xff]
      %v583 = vld [vmem:[%s1 + $0x2c0] sm:$0xff]
      %v584 = vld [vmem:[%s1 + $0x2c8] sm:$0xff]
      %v585 = vld [vmem:[%s1 + $0x2d0] sm:$0xff]
      %v586 = vld [vmem:[%s1 + $0x2d8] sm:$0xff]
      %v587 = vld [vmem:[%s1 + $0x2e0] sm:$0xff]
      %v588 = vld [vmem:[%s1 + $0x2e8] sm:$0xff]
      %v589 = vld [vmem:[%s1 + $0x2f0] sm:$0xff]
      %v590 = vld [vmem:[%s1 + $0x2f8] sm:$0xff]
      %v591 = vld [vmem:[%s1 + $0x300] sm:$0xff]
      %v592 = vld [vmem:[%s1 + $0x308] sm:$0xff]
      %v593 = vld [vmem:[%s1 + $0x310] sm:$0xff]
      %v594 = vld [vmem:[%s1 + $0x318] sm:$0xff]
      %v595 = vld [vmem:[%s1 + $0x320] sm:$0xff]
      %v596 = vld [vmem:[%s1 + $0x328] sm:$0xff]
      %v597 = vld [vmem:[%s1 + $0x330] sm:$0xff]
      %v598 = vld [vmem:[%s1 + $0x338] sm:$0xff]
      %v599 = vld [vmem:[%s1 + $0x340] sm:$0xff]
      %v600 = vld [vmem:[%s1 + $0x348] sm:$0xff]
      %v601 = vld [vmem:[%s1 + $0x350] sm:$0xff]
      %v602 = vld [vmem:[%s1 + $0x358] sm:$0xff]
      %v603 = vld [vmem:[%s1 + $0x360] sm:$0xff]
      %v604 = vld [vmem:[%s1 + $0x368] sm:$0xff]
      %v605 = vld [vmem:[%s1 + $0x370] sm:$0xff]
      %v606 = vld [vmem:[%s1 + $0x378] sm:$0xff]
      %v607 = vld [vmem:[%s1 + $0x380] sm:$0xff]
      %v608 = vld [vmem:[%s1 + $0x388] sm:$0xff]
      %v609 = vld [vmem:[%s1 + $0x390] sm:$0xff]
      %v610 = vld [vmem:[%s1 + $0x398] sm:$0xff]
      %v611 = vld [vmem:[%s1 + $0x3a0] sm:$0xff]
      %v612 = vld [vmem:[%s1 + $0x3a8] sm:$0xff]
      %v613 = vld [vmem:[%s1 + $0x3b0] sm:$0xff]
      %v614 = vld [vmem:[%s1 + $0x3b8] sm:$0xff]
      %v615 = vld [vmem:[%s1 + $0x3c0] sm:$0xff]
      %v616 = vld [vmem:[%s1 + $0x3c8] sm:$0xff]
      %v617 = vld [vmem:[%s1 + $0x3d0] sm:$0xff]
      %v618 = vld [vmem:[%s1 + $0x3d8] sm:$0xff]
      %v619 = vld [vmem:[%s1 + $0x3e0] sm:$0xff]
      %v620 = vld [vmem:[%s1 + $0x3e8] sm:$0xff]
      %v621 = vld [vmem:[%s1 + $0x3f0] sm:$0xff]
      %v622 = vld [vmem:[%s1 + $0x3f8] sm:$0xff]
      %v623 = vld [vmem:[%s2] sm:$0x3]
      %v625 = vlaneseq
      %v626 = vshrl.u32 %v625, 7
      %v627 = vsub.s32 0, %v626
      %v628 = vrot.slane %v623, %v627
      %v629 = vlaneseq
      %v630 = vshrl.u32 %v629, 7
      %v631 = vsub.s32 1, %v630
      %v632 = vrot.slane %v623, %v631
      %v699 = vunpack.c.l.b16 %v431
      %v700 = vunpack.c.h.b16 %v431
      %v701 = vunpack.c.l.b16 %v432
      %v702 = vunpack.c.h.b16 %v432
      %v703 = vunpack.c.l.b16 %v433
      %v704 = vunpack.c.h.b16 %v433
      %v705 = vunpack.c.l.b16 %v434
      %v706 = vunpack.c.h.b16 %v434
      %v707 = vunpack.c.l.b16 %v435
      %v708 = vunpack.c.h.b16 %v435
      %v709 = vunpack.c.l.b16 %v436
      %v710 = vunpack.c.h.b16 %v436
      %v711 = vunpack.c.l.b16 %v437
      %v712 = vunpack.c.h.b16 %v437
      %v713 = vunpack.c.l.b16 %v438
      %v714 = vunpack.c.h.b16 %v438
      %v715 = vunpack.c.l.b16 %v439
      %v716 = vunpack.c.h.b16 %v439
      %v717 = vunpack.c.l.b16 %v440
      %v718 = vunpack.c.h.b16 %v440
      %v719 = vunpack.c.l.b16 %v441
      %v720 = vunpack.c.h.b16 %v441
      %v721 = vunpack.c.l.b16 %v442
      %v722 = vunpack.c.h.b16 %v442
      %v723 = vunpack.c.l.b16 %v443
      %v724 = vunpack.c.h.b16 %v443
      %v725 = vunpack.c.l.b16 %v444
      %v726 = vunpack.c.h.b16 %v444
      %v727 = vunpack.c.l.b16 %v445
      %v728 = vunpack.c.h.b16 %v445
      %v729 = vunpack.c.l.b16 %v446
      %v730 = vunpack.c.h.b16 %v446
      %v731 = vunpack.c.l.b16 %v447
      %v732 = vunpack.c.h.b16 %v447
      %v733 = vunpack.c.l.b16 %v448
      %v734 = vunpack.c.h.b16 %v448
      %v735 = vunpack.c.l.b16 %v449
      %v736 = vunpack.c.h.b16 %v449
      %v737 = vunpack.c.l.b16 %v450
      %v738 = vunpack.c.h.b16 %v450
      %v739 = vunpack.c.l.b16 %v451
      %v740 = vunpack.c.h.b16 %v451
      %v741 = vunpack.c.l.b16 %v452
      %v742 = vunpack.c.h.b16 %v452
      %v743 = vunpack.c.l.b16 %v453
      %v744 = vunpack.c.h.b16 %v453
      %v745 = vunpack.c.l.b16 %v454
      %v746 = vunpack.c.h.b16 %v454
      %v747 = vunpack.c.l.b16 %v455
      %v748 = vunpack.c.h.b16 %v455
      %v749 = vunpack.c.l.b16 %v456
      %v750 = vunpack.c.h.b16 %v456
      %v751 = vunpack.c.l.b16 %v457
      %v752 = vunpack.c.h.b16 %v457
      %v753 = vunpack.c.l.b16 %v458
      %v754 = vunpack.c.h.b16 %v458
      %v755 = vunpack.c.l.b16 %v459
      %v756 = vunpack.c.h.b16 %v459
      %v757 = vunpack.c.l.b16 %v460
      %v758 = vunpack.c.h.b16 %v460
      %v759 = vunpack.c.l.b16 %v461
      %v760 = vunpack.c.h.b16 %v461
      %v761 = vunpack.c.l.b16 %v462
      %v762 = vunpack.c.h.b16 %v462
      %v763 = vunpack.c.l.b16 %v463
      %v764 = vunpack.c.h.b16 %v463
      %v765 = vunpack.c.l.b16 %v464
      %v766 = vunpack.c.h.b16 %v464
      %v767 = vunpack.c.l.b16 %v465
      %v768 = vunpack.c.h.b16 %v465
      %v769 = vunpack.c.l.b16 %v466
      %v770 = vunpack.c.h.b16 %v466
      %v771 = vunpack.c.l.b16 %v467
      %v772 = vunpack.c.h.b16 %v467
      %v773 = vunpack.c.l.b16 %v468
      %v774 = vunpack.c.h.b16 %v468
      %v775 = vunpack.c.l.b16 %v469
      %v776 = vunpack.c.h.b16 %v469
      %v777 = vunpack.c.l.b16 %v470
      %v778 = vunpack.c.h.b16 %v470
      %v779 = vunpack.c.l.b16 %v471
      %v780 = vunpack.c.h.b16 %v471
      %v781 = vunpack.c.l.b16 %v472
      %v782 = vunpack.c.h.b16 %v472
      %v783 = vunpack.c.l.b16 %v473
      %v784 = vunpack.c.h.b16 %v473
      %v785 = vunpack.c.l.b16 %v474
      %v786 = vunpack.c.h.b16 %v474
      %v787 = vunpack.c.l.b16 %v475
      %v788 = vunpack.c.h.b16 %v475
      %v789 = vunpack.c.l.b16 %v476
      %v790 = vunpack.c.h.b16 %v476
      %v791 = vunpack.c.l.b16 %v477
      %v792 = vunpack.c.h.b16 %v477
      %v793 = vunpack.c.l.b16 %v478
      %v794 = vunpack.c.h.b16 %v478
      %v795 = vunpack.c.l.b16 %v479
      %v796 = vunpack.c.h.b16 %v479
      %v797 = vunpack.c.l.b16 %v480
      %v798 = vunpack.c.h.b16 %v480
      %v799 = vunpack.c.l.b16 %v481
      %v800 = vunpack.c.h.b16 %v481
      %v801 = vunpack.c.l.b16 %v482
      %v802 = vunpack.c.h.b16 %v482
      %v803 = vunpack.c.l.b16 %v483
      %v804 = vunpack.c.h.b16 %v483
      %v805 = vunpack.c.l.b16 %v484
      %v806 = vunpack.c.h.b16 %v484
      %v807 = vunpack.c.l.b16 %v485
      %v808 = vunpack.c.h.b16 %v485
      %v809 = vunpack.c.l.b16 %v486
      %v810 = vunpack.c.h.b16 %v486
      %v811 = vunpack.c.l.b16 %v487
      %v812 = vunpack.c.h.b16 %v487
      %v813 = vunpack.c.l.b16 %v488
      %v814 = vunpack.c.h.b16 %v488
      %v815 = vunpack.c.l.b16 %v489
      %v816 = vunpack.c.h.b16 %v489
      %v817 = vunpack.c.l.b16 %v490
      %v818 = vunpack.c.h.b16 %v490
      %v819 = vunpack.c.l.b16 %v491
      %v820 = vunpack.c.h.b16 %v491
      %v821 = vunpack.c.l.b16 %v492
      %v822 = vunpack.c.h.b16 %v492
      %v823 = vunpack.c.l.b16 %v493
      %v824 = vunpack.c.h.b16 %v493
      %v825 = vunpack.c.l.b16 %v494
      %v826 = vunpack.c.h.b16 %v494
      %v827 = vpack.c.b16 %v707, %v699
      %v828 = vpack.c.b16 %v708, %v700
      %v829 = vpack.c.b16 %v709, %v701
      %v830 = vpack.c.b16 %v710, %v702
      %v831 = vpack.c.b16 %v711, %v703
      %v832 = vpack.c.b16 %v712, %v704
      %v833 = vpack.c.b16 %v713, %v705
      %v834 = vpack.c.b16 %v714, %v706
      %v835 = vpack.c.b16 %v723, %v715
      %v836 = vpack.c.b16 %v724, %v716
      %v837 = vpack.c.b16 %v725, %v717
      %v838 = vpack.c.b16 %v726, %v718
      %v839 = vpack.c.b16 %v727, %v719
      %v840 = vpack.c.b16 %v728, %v720
      %v841 = vpack.c.b16 %v729, %v721
      %v842 = vpack.c.b16 %v730, %v722
      %v843 = vpack.c.b16 %v739, %v731
      %v844 = vpack.c.b16 %v740, %v732
      %v845 = vpack.c.b16 %v741, %v733
      %v846 = vpack.c.b16 %v742, %v734
      %v847 = vpack.c.b16 %v743, %v735
      %v848 = vpack.c.b16 %v744, %v736
      %v849 = vpack.c.b16 %v745, %v737
      %v850 = vpack.c.b16 %v746, %v738
      %v851 = vpack.c.b16 %v755, %v747
      %v852 = vpack.c.b16 %v756, %v748
      %v853 = vpack.c.b16 %v757, %v749
      %v854 = vpack.c.b16 %v758, %v750
      %v855 = vpack.c.b16 %v759, %v751
      %v856 = vpack.c.b16 %v760, %v752
      %v857 = vpack.c.b16 %v761, %v753
      %v858 = vpack.c.b16 %v762, %v754
      %v859 = vpack.c.b16 %v771, %v763
      %v860 = vpack.c.b16 %v772, %v764
      %v861 = vpack.c.b16 %v773, %v765
      %v862 = vpack.c.b16 %v774, %v766
      %v863 = vpack.c.b16 %v775, %v767
      %v864 = vpack.c.b16 %v776, %v768
      %v865 = vpack.c.b16 %v777, %v769
      %v866 = vpack.c.b16 %v778, %v770
      %v867 = vpack.c.b16 %v787, %v779
      %v868 = vpack.c.b16 %v788, %v780
      %v869 = vpack.c.b16 %v789, %v781
      %v870 = vpack.c.b16 %v790, %v782
      %v871 = vpack.c.b16 %v791, %v783
      %v872 = vpack.c.b16 %v792, %v784
      %v873 = vpack.c.b16 %v793, %v785
      %v874 = vpack.c.b16 %v794, %v786
      %v875 = vpack.c.b16 %v803, %v795
      %v876 = vpack.c.b16 %v804, %v796
      %v877 = vpack.c.b16 %v805, %v797
      %v878 = vpack.c.b16 %v806, %v798
      %v879 = vpack.c.b16 %v807, %v799
      %v880 = vpack.c.b16 %v808, %v800
      %v881 = vpack.c.b16 %v809, %v801
      %v882 = vpack.c.b16 %v810, %v802
      %v883 = vpack.c.b16 %v819, %v811
      %v884 = vpack.c.b16 %v820, %v812
      %v885 = vpack.c.b16 %v821, %v813
      %v886 = vpack.c.b16 %v822, %v814
      %v887 = vpack.c.b16 %v823, %v815
      %v888 = vpack.c.b16 %v824, %v816
      %v889 = vpack.c.b16 %v825, %v817
      %v890 = vpack.c.b16 %v826, %v818
      %v1083 = vunpack.c.l.b16 %v495
      %v1084 = vunpack.c.h.b16 %v495
      %v1085 = vunpack.c.l.b16 %v496
      %v1086 = vunpack.c.h.b16 %v496
      %v1087 = vunpack.c.l.b16 %v497
      %v1088 = vunpack.c.h.b16 %v497
      %v1089 = vunpack.c.l.b16 %v498
      %v1090 = vunpack.c.h.b16 %v498
      %v1091 = vunpack.c.l.b16 %v499
      %v1092 = vunpack.c.h.b16 %v499
      %v1093 = vunpack.c.l.b16 %v500
      %v1094 = vunpack.c.h.b16 %v500
      %v1095 = vunpack.c.l.b16 %v501
      %v1096 = vunpack.c.h.b16 %v501
      %v1097 = vunpack.c.l.b16 %v502
      %v1098 = vunpack.c.h.b16 %v502
      %v1099 = vunpack.c.l.b16 %v503
      %v1100 = vunpack.c.h.b16 %v503
      %v1101 = vunpack.c.l.b16 %v504
      %v1102 = vunpack.c.h.b16 %v504
      %v1103 = vunpack.c.l.b16 %v505
      %v1104 = vunpack.c.h.b16 %v505
      %v1105 = vunpack.c.l.b16 %v506
      %v1106 = vunpack.c.h.b16 %v506
      %v1107 = vunpack.c.l.b16 %v507
      %v1108 = vunpack.c.h.b16 %v507
      %v1109 = vunpack.c.l.b16 %v508
      %v1110 = vunpack.c.h.b16 %v508
      %v1111 = vunpack.c.l.b16 %v509
      %v1112 = vunpack.c.h.b16 %v509
      %v1113 = vunpack.c.l.b16 %v510
      %v1114 = vunpack.c.h.b16 %v510
      %v1115 = vunpack.c.l.b16 %v511
      %v1116 = vunpack.c.h.b16 %v511
      %v1117 = vunpack.c.l.b16 %v512
      %v1118 = vunpack.c.h.b16 %v512
      %v1119 = vunpack.c.l.b16 %v513
      %v1120 = vunpack.c.h.b16 %v513
      %v1121 = vunpack.c.l.b16 %v514
      %v1122 = vunpack.c.h.b16 %v514
      %v1123 = vunpack.c.l.b16 %v515
      %v1124 = vunpack.c.h.b16 %v515
      %v1125 = vunpack.c.l.b16 %v516
      %v1126 = vunpack.c.h.b16 %v516
      %v1127 = vunpack.c.l.b16 %v517
      %v1128 = vunpack.c.h.b16 %v517
      %v1129 = vunpack.c.l.b16 %v518
      %v1130 = vunpack.c.h.b16 %v518
      %v1131 = vunpack.c.l.b16 %v519
      %v1132 = vunpack.c.h.b16 %v519
      %v1133 = vunpack.c.l.b16 %v520
      %v1134 = vunpack.c.h.b16 %v520
      %v1135 = vunpack.c.l.b16 %v521
      %v1136 = vunpack.c.h.b16 %v521
      %v1137 = vunpack.c.l.b16 %v522
      %v1138 = vunpack.c.h.b16 %v522
      %v1139 = vunpack.c.l.b16 %v523
      %v1140 = vunpack.c.h.b16 %v523
      %v1141 = vunpack.c.l.b16 %v524
      %v1142 = vunpack.c.h.b16 %v524
      %v1143 = vunpack.c.l.b16 %v525
      %v1144 = vunpack.c.h.b16 %v525
      %v1145 = vunpack.c.l.b16 %v526
      %v1146 = vunpack.c.h.b16 %v526
      %v1147 = vunpack.c.l.b16 %v527
      %v1148 = vunpack.c.h.b16 %v527
      %v1149 = vunpack.c.l.b16 %v528
      %v1150 = vunpack.c.h.b16 %v528
      %v1151 = vunpack.c.l.b16 %v529
      %v1152 = vunpack.c.h.b16 %v529
      %v1153 = vunpack.c.l.b16 %v530
      %v1154 = vunpack.c.h.b16 %v530
      %v1155 = vunpack.c.l.b16 %v531
      %v1156 = vunpack.c.h.b16 %v531
      %v1157 = vunpack.c.l.b16 %v532
      %v1158 = vunpack.c.h.b16 %v532
      %v1159 = vunpack.c.l.b16 %v533
      %v1160 = vunpack.c.h.b16 %v533
      %v1161 = vunpack.c.l.b16 %v534
      %v1162 = vunpack.c.h.b16 %v534
      %v1163 = vunpack.c.l.b16 %v535
      %v1164 = vunpack.c.h.b16 %v535
      %v1165 = vunpack.c.l.b16 %v536
      %v1166 = vunpack.c.h.b16 %v536
      %v1167 = vunpack.c.l.b16 %v537
      %v1168 = vunpack.c.h.b16 %v537
      %v1169 = vunpack.c.l.b16 %v538
      %v1170 = vunpack.c.h.b16 %v538
      %v1171 = vunpack.c.l.b16 %v539
      %v1172 = vunpack.c.h.b16 %v539
      %v1173 = vunpack.c.l.b16 %v540
      %v1174 = vunpack.c.h.b16 %v540
      %v1175 = vunpack.c.l.b16 %v541
      %v1176 = vunpack.c.h.b16 %v541
      %v1177 = vunpack.c.l.b16 %v542
      %v1178 = vunpack.c.h.b16 %v542
      %v1179 = vunpack.c.l.b16 %v543
      %v1180 = vunpack.c.h.b16 %v543
      %v1181 = vunpack.c.l.b16 %v544
      %v1182 = vunpack.c.h.b16 %v544
      %v1183 = vunpack.c.l.b16 %v545
      %v1184 = vunpack.c.h.b16 %v545
      %v1185 = vunpack.c.l.b16 %v546
      %v1186 = vunpack.c.h.b16 %v546
      %v1187 = vunpack.c.l.b16 %v547
      %v1188 = vunpack.c.h.b16 %v547
      %v1189 = vunpack.c.l.b16 %v548
      %v1190 = vunpack.c.h.b16 %v548
      %v1191 = vunpack.c.l.b16 %v549
      %v1192 = vunpack.c.h.b16 %v549
      %v1193 = vunpack.c.l.b16 %v550
      %v1194 = vunpack.c.h.b16 %v550
      %v1195 = vunpack.c.l.b16 %v551
      %v1196 = vunpack.c.h.b16 %v551
      %v1197 = vunpack.c.l.b16 %v552
      %v1198 = vunpack.c.h.b16 %v552
      %v1199 = vunpack.c.l.b16 %v553
      %v1200 = vunpack.c.h.b16 %v553
      %v1201 = vunpack.c.l.b16 %v554
      %v1202 = vunpack.c.h.b16 %v554
      %v1203 = vunpack.c.l.b16 %v555
      %v1204 = vunpack.c.h.b16 %v555
      %v1205 = vunpack.c.l.b16 %v556
      %v1206 = vunpack.c.h.b16 %v556
      %v1207 = vunpack.c.l.b16 %v557
      %v1208 = vunpack.c.h.b16 %v557
      %v1209 = vunpack.c.l.b16 %v558
      %v1210 = vunpack.c.h.b16 %v558
      %v1211 = vunpack.c.l.b16 %v559
      %v1212 = vunpack.c.h.b16 %v559
      %v1213 = vunpack.c.l.b16 %v560
      %v1214 = vunpack.c.h.b16 %v560
      %v1215 = vunpack.c.l.b16 %v561
      %v1216 = vunpack.c.h.b16 %v561
      %v1217 = vunpack.c.l.b16 %v562
      %v1218 = vunpack.c.h.b16 %v562
      %v1219 = vunpack.c.l.b16 %v563
      %v1220 = vunpack.c.h.b16 %v563
      %v1221 = vunpack.c.l.b16 %v564
      %v1222 = vunpack.c.h.b16 %v564
      %v1223 = vunpack.c.l.b16 %v565
      %v1224 = vunpack.c.h.b16 %v565
      %v1225 = vunpack.c.l.b16 %v566
      %v1226 = vunpack.c.h.b16 %v566
      %v1227 = vunpack.c.l.b16 %v567
      %v1228 = vunpack.c.h.b16 %v567
      %v1229 = vunpack.c.l.b16 %v568
      %v1230 = vunpack.c.h.b16 %v568
      %v1231 = vunpack.c.l.b16 %v569
      %v1232 = vunpack.c.h.b16 %v569
      %v1233 = vunpack.c.l.b16 %v570
      %v1234 = vunpack.c.h.b16 %v570
      %v1235 = vunpack.c.l.b16 %v571
      %v1236 = vunpack.c.h.b16 %v571
      %v1237 = vunpack.c.l.b16 %v572
      %v1238 = vunpack.c.h.b16 %v572
      %v1239 = vunpack.c.l.b16 %v573
      %v1240 = vunpack.c.h.b16 %v573
      %v1241 = vunpack.c.l.b16 %v574
      %v1242 = vunpack.c.h.b16 %v574
      %v1243 = vunpack.c.l.b16 %v575
      %v1244 = vunpack.c.h.b16 %v575
      %v1245 = vunpack.c.l.b16 %v576
      %v1246 = vunpack.c.h.b16 %v576
      %v1247 = vunpack.c.l.b16 %v577
      %v1248 = vunpack.c.h.b16 %v577
      %v1249 = vunpack.c.l.b16 %v578
      %v1250 = vunpack.c.h.b16 %v578
      %v1251 = vunpack.c.l.b16 %v579
      %v1252 = vunpack.c.h.b16 %v579
      %v1253 = vunpack.c.l.b16 %v580
      %v1254 = vunpack.c.h.b16 %v580
      %v1255 = vunpack.c.l.b16 %v581
      %v1256 = vunpack.c.h.b16 %v581
      %v1257 = vunpack.c.l.b16 %v582
      %v1258 = vunpack.c.h.b16 %v582
      %v1259 = vunpack.c.l.b16 %v583
      %v1260 = vunpack.c.h.b16 %v583
      %v1261 = vunpack.c.l.b16 %v584
      %v1262 = vunpack.c.h.b16 %v584
      %v1263 = vunpack.c.l.b16 %v585
      %v1264 = vunpack.c.h.b16 %v585
      %v1265 = vunpack.c.l.b16 %v586
      %v1266 = vunpack.c.h.b16 %v586
      %v1267 = vunpack.c.l.b16 %v587
      %v1268 = vunpack.c.h.b16 %v587
      %v1269 = vunpack.c.l.b16 %v588
      %v1270 = vunpack.c.h.b16 %v588
      %v1271 = vunpack.c.l.b16 %v589
      %v1272 = vunpack.c.h.b16 %v589
      %v1273 = vunpack.c.l.b16 %v590
      %v1274 = vunpack.c.h.b16 %v590
      %v1275 = vunpack.c.l.b16 %v591
      %v1276 = vunpack.c.h.b16 %v591
      %v1277 = vunpack.c.l.b16 %v592
      %v1278 = vunpack.c.h.b16 %v592
      %v1279 = vunpack.c.l.b16 %v593
      %v1280 = vunpack.c.h.b16 %v593
      %v1281 = vunpack.c.l.b16 %v594
      %v1282 = vunpack.c.h.b16 %v594
      %v1283 = vunpack.c.l.b16 %v595
      %v1284 = vunpack.c.h.b16 %v595
      %v1285 = vunpack.c.l.b16 %v596
      %v1286 = vunpack.c.h.b16 %v596
      %v1287 = vunpack.c.l.b16 %v597
      %v1288 = vunpack.c.h.b16 %v597
      %v1289 = vunpack.c.l.b16 %v598
      %v1290 = vunpack.c.h.b16 %v598
      %v1291 = vunpack.c.l.b16 %v599
      %v1292 = vunpack.c.h.b16 %v599
      %v1293 = vunpack.c.l.b16 %v600
      %v1294 = vunpack.c.h.b16 %v600
      %v1295 = vunpack.c.l.b16 %v601
      %v1296 = vunpack.c.h.b16 %v601
      %v1297 = vunpack.c.l.b16 %v602
      %v1298 = vunpack.c.h.b16 %v602
      %v1299 = vunpack.c.l.b16 %v603
      %v1300 = vunpack.c.h.b16 %v603
      %v1301 = vunpack.c.l.b16 %v604
      %v1302 = vunpack.c.h.b16 %v604
      %v1303 = vunpack.c.l.b16 %v605
      %v1304 = vunpack.c.h.b16 %v605
      %v1305 = vunpack.c.l.b16 %v606
      %v1306 = vunpack.c.h.b16 %v606
      %v1307 = vunpack.c.l.b16 %v607
      %v1308 = vunpack.c.h.b16 %v607
      %v1309 = vunpack.c.l.b16 %v608
      %v1310 = vunpack.c.h.b16 %v608
      %v1311 = vunpack.c.l.b16 %v609
      %v1312 = vunpack.c.h.b16 %v609
      %v1313 = vunpack.c.l.b16 %v610
      %v1314 = vunpack.c.h.b16 %v610
      %v1315 = vunpack.c.l.b16 %v611
      %v1316 = vunpack.c.h.b16 %v611
      %v1317 = vunpack.c.l.b16 %v612
      %v1318 = vunpack.c.h.b16 %v612
      %v1319 = vunpack.c.l.b16 %v613
      %v1320 = vunpack.c.h.b16 %v613
      %v1321 = vunpack.c.l.b16 %v614
      %v1322 = vunpack.c.h.b16 %v614
      %v1323 = vunpack.c.l.b16 %v615
      %v1324 = vunpack.c.h.b16 %v615
      %v1325 = vunpack.c.l.b16 %v616
      %v1326 = vunpack.c.h.b16 %v616
      %v1327 = vunpack.c.l.b16 %v617
      %v1328 = vunpack.c.h.b16 %v617
      %v1329 = vunpack.c.l.b16 %v618
      %v1330 = vunpack.c.h.b16 %v618
      %v1331 = vunpack.c.l.b16 %v619
      %v1332 = vunpack.c.h.b16 %v619
      %v1333 = vunpack.c.l.b16 %v620
      %v1334 = vunpack.c.h.b16 %v620
      %v1335 = vunpack.c.l.b16 %v621
      %v1336 = vunpack.c.h.b16 %v621
      %v1337 = vunpack.c.l.b16 %v622
      %v1338 = vunpack.c.h.b16 %v622
      %v1339 = vpack.c.b16 %v1085, %v1083
      %v1340 = vpack.c.b16 %v1086, %v1084
      %v1341 = vpack.c.b16 %v1089, %v1087
      %v1342 = vpack.c.b16 %v1090, %v1088
      %v1343 = vpack.c.b16 %v1093, %v1091
      %v1344 = vpack.c.b16 %v1094, %v1092
      %v1345 = vpack.c.b16 %v1097, %v1095
      %v1346 = vpack.c.b16 %v1098, %v1096
      %v1347 = vpack.c.b16 %v1101, %v1099
      %v1348 = vpack.c.b16 %v1102, %v1100
      %v1349 = vpack.c.b16 %v1105, %v1103
      %v1350 = vpack.c.b16 %v1106, %v1104
      %v1351 = vpack.c.b16 %v1109, %v1107
      %v1352 = vpack.c.b16 %v1110, %v1108
      %v1353 = vpack.c.b16 %v1113, %v1111
      %v1354 = vpack.c.b16 %v1114, %v1112
      %v1355 = vpack.c.b16 %v1117, %v1115
      %v1356 = vpack.c.b16 %v1118, %v1116
      %v1357 = vpack.c.b16 %v1121, %v1119
      %v1358 = vpack.c.b16 %v1122, %v1120
      %v1359 = vpack.c.b16 %v1125, %v1123
      %v1360 = vpack.c.b16 %v1126, %v1124
      %v1361 = vpack.c.b16 %v1129, %v1127
      %v1362 = vpack.c.b16 %v1130, %v1128
      %v1363 = vpack.c.b16 %v1133, %v1131
      %v1364 = vpack.c.b16 %v1134, %v1132
      %v1365 = vpack.c.b16 %v1137, %v1135
      %v1366 = vpack.c.b16 %v1138, %v1136
      %v1367 = vpack.c.b16 %v1141, %v1139
      %v1368 = vpack.c.b16 %v1142, %v1140
      %v1369 = vpack.c.b16 %v1145, %v1143
      %v1370 = vpack.c.b16 %v1146, %v1144
      %v1371 = vpack.c.b16 %v1149, %v1147
      %v1372 = vpack.c.b16 %v1150, %v1148
      %v1373 = vpack.c.b16 %v1153, %v1151
      %v1374 = vpack.c.b16 %v1154, %v1152
      %v1375 = vpack.c.b16 %v1157, %v1155
      %v1376 = vpack.c.b16 %v1158, %v1156
      %v1377 = vpack.c.b16 %v1161, %v1159
      %v1378 = vpack.c.b16 %v1162, %v1160
      %v1379 = vpack.c.b16 %v1165, %v1163
      %v1380 = vpack.c.b16 %v1166, %v1164
      %v1381 = vpack.c.b16 %v1169, %v1167
      %v1382 = vpack.c.b16 %v1170, %v1168
      %v1383 = vpack.c.b16 %v1173, %v1171
      %v1384 = vpack.c.b16 %v1174, %v1172
      %v1385 = vpack.c.b16 %v1177, %v1175
      %v1386 = vpack.c.b16 %v1178, %v1176
      %v1387 = vpack.c.b16 %v1181, %v1179
      %v1388 = vpack.c.b16 %v1182, %v1180
      %v1389 = vpack.c.b16 %v1185, %v1183
      %v1390 = vpack.c.b16 %v1186, %v1184
      %v1391 = vpack.c.b16 %v1189, %v1187
      %v1392 = vpack.c.b16 %v1190, %v1188
      %v1393 = vpack.c.b16 %v1193, %v1191
      %v1394 = vpack.c.b16 %v1194, %v1192
      %v1395 = vpack.c.b16 %v1197, %v1195
      %v1396 = vpack.c.b16 %v1198, %v1196
      %v1397 = vpack.c.b16 %v1201, %v1199
      %v1398 = vpack.c.b16 %v1202, %v1200
      %v1399 = vpack.c.b16 %v1205, %v1203
      %v1400 = vpack.c.b16 %v1206, %v1204
      %v1401 = vpack.c.b16 %v1209, %v1207
      %v1402 = vpack.c.b16 %v1210, %v1208
      %v1403 = vpack.c.b16 %v1213, %v1211
      %v1404 = vpack.c.b16 %v1214, %v1212
      %v1405 = vpack.c.b16 %v1217, %v1215
      %v1406 = vpack.c.b16 %v1218, %v1216
      %v1407 = vpack.c.b16 %v1221, %v1219
      %v1408 = vpack.c.b16 %v1222, %v1220
      %v1409 = vpack.c.b16 %v1225, %v1223
      %v1410 = vpack.c.b16 %v1226, %v1224
      %v1411 = vpack.c.b16 %v1229, %v1227
      %v1412 = vpack.c.b16 %v1230, %v1228
      %v1413 = vpack.c.b16 %v1233, %v1231
      %v1414 = vpack.c.b16 %v1234, %v1232
      %v1415 = vpack.c.b16 %v1237, %v1235
      %v1416 = vpack.c.b16 %v1238, %v1236
      %v1417 = vpack.c.b16 %v1241, %v1239
      %v1418 = vpack.c.b16 %v1242, %v1240
      %v1419 = vpack.c.b16 %v1245, %v1243
      %v1420 = vpack.c.b16 %v1246, %v1244
      %v1421 = vpack.c.b16 %v1249, %v1247
      %v1422 = vpack.c.b16 %v1250, %v1248
      %v1423 = vpack.c.b16 %v1253, %v1251
      %v1424 = vpack.c.b16 %v1254, %v1252
      %v1425 = vpack.c.b16 %v1257, %v1255
      %v1426 = vpack.c.b16 %v1258, %v1256
      %v1427 = vpack.c.b16 %v1261, %v1259
      %v1428 = vpack.c.b16 %v1262, %v1260
      %v1429 = vpack.c.b16 %v1265, %v1263
      %v1430 = vpack.c.b16 %v1266, %v1264
      %v1431 = vpack.c.b16 %v1269, %v1267
      %v1432 = vpack.c.b16 %v1270, %v1268
      %v1433 = vpack.c.b16 %v1273, %v1271
      %v1434 = vpack.c.b16 %v1274, %v1272
      %v1435 = vpack.c.b16 %v1277, %v1275
      %v1436 = vpack.c.b16 %v1278, %v1276
      %v1437 = vpack.c.b16 %v1281, %v1279
      %v1438 = vpack.c.b16 %v1282, %v1280
      %v1439 = vpack.c.b16 %v1285, %v1283
      %v1440 = vpack.c.b16 %v1286, %v1284
      %v1441 = vpack.c.b16 %v1289, %v1287
      %v1442 = vpack.c.b16 %v1290, %v1288
      %v1443 = vpack.c.b16 %v1293, %v1291
      %v1444 = vpack.c.b16 %v1294, %v1292
      %v1445 = vpack.c.b16 %v1297, %v1295
      %v1446 = vpack.c.b16 %v1298, %v1296
      %v1447 = vpack.c.b16 %v1301, %v1299
      %v1448 = vpack.c.b16 %v1302, %v1300
      %v1449 = vpack.c.b16 %v1305, %v1303
      %v1450 = vpack.c.b16 %v1306, %v1304
      %v1451 = vpack.c.b16 %v1309, %v1307
      %v1452 = vpack.c.b16 %v1310, %v1308
      %v1453 = vpack.c.b16 %v1313, %v1311
      %v1454 = vpack.c.b16 %v1314, %v1312
      %v1455 = vpack.c.b16 %v1317, %v1315
      %v1456 = vpack.c.b16 %v1318, %v1316
      %v1457 = vpack.c.b16 %v1321, %v1319
      %v1458 = vpack.c.b16 %v1322, %v1320
      %v1459 = vpack.c.b16 %v1325, %v1323
      %v1460 = vpack.c.b16 %v1326, %v1324
      %v1461 = vpack.c.b16 %v1329, %v1327
      %v1462 = vpack.c.b16 %v1330, %v1328
      %v1463 = vpack.c.b16 %v1333, %v1331
      %v1464 = vpack.c.b16 %v1334, %v1332
      %v1465 = vpack.c.b16 %v1337, %v1335
      %v1466 = vpack.c.b16 %v1338, %v1336
      %1595 = vmatprep.subr.bf16.mxu0 %v1354
      %1596 = vmatpush1.bf16.msra.mxu0 %v1353
      %1597 = vmatprep.subr.bf16.mxu0 %v1352
      %1598 = vmatpush1.bf16.msra.mxu0 %v1351
      %1599 = vmatprep.subr.bf16.mxu0 %v1350
      %1600 = vmatpush1.bf16.msra.mxu0 %v1349
      %1601 = vmatprep.subr.bf16.mxu0 %v1348
      %1602 = vmatpush1.bf16.msra.mxu0 %v1347
      %1603 = vmatprep.subr.bf16.mxu0 %v1346
      %1604 = vmatpush1.bf16.msra.mxu0 %v1345
      %1605 = vmatprep.subr.bf16.mxu0 %v1344
      %1606 = vmatpush1.bf16.msra.mxu0 %v1343
      %1607 = vmatprep.subr.bf16.mxu0 %v1342
      %1608 = vmatpush1.bf16.msra.mxu0 %v1341
      %1609 = vmatprep.subr.bf16.mxu0 %v1340
      %1610 = vmatpush1.bf16.msra.mxu0 %v1339
      %1611 = vmatprep.subr.bf16.mxu0 %v1370
      %1612 = vmatpush2.bf16.msra.mxu0 %v1369
      %1613 = vmatprep.subr.bf16.mxu0 %v1368
      %1614 = vmatpush2.bf16.msra.mxu0 %v1367
      %1615 = vmatprep.subr.bf16.mxu0 %v1366
      %1616 = vmatpush2.bf16.msra.mxu0 %v1365
      %1617 = vmatprep.subr.bf16.mxu0 %v1364
      %1618 = vmatpush2.bf16.msra.mxu0 %v1363
      %1619 = vmatprep.subr.bf16.mxu0 %v1362
      %1620 = vmatpush2.bf16.msra.mxu0 %v1361
      %1621 = vmatprep.subr.bf16.mxu0 %v1360
      %1622 = vmatpush2.bf16.msra.mxu0 %v1359
      %1623 = vmatprep.subr.bf16.mxu0 %v1358
      %1624 = vmatpush2.bf16.msra.mxu0 %v1357
      %1625 = vmatprep.subr.bf16.mxu0 %v1356
      %1626 = vmatpush2.bf16.msra.mxu0 %v1355
      %1627 = vmatprep.mubr.bf16.mxu0 %v828
      %1628 = vmatmul.mubr.bf16.gmra.mxu0 %v827
      %v1629 = vpop.f32.mrf.mxu0
      %v1630 = vadd.f32 %v628, %v1629
      %v1631 = vpop.f32.mrf.mxu0
      %v1632 = vadd.f32 %v632, %v1631
      %v1633 = vpop.f32.mrf.mxu0
      %v1634 = vadd.f32 %v628, %v1633
      %v1635 = vpop.f32.mrf.mxu0
      %v1636 = vadd.f32 %v632, %v1635
      %1637 = vmatprep.mubr.bf16.mxu0 %v836
      %1638 = vmatmul.mubr.bf16.gmra.mxu0 %v835
      %v1639 = vpop.f32.mrf.mxu0
      %v1640 = vadd.f32 %v628, %v1639
      %v1641 = vpop.f32.mrf.mxu0
      %v1642 = vadd.f32 %v632, %v1641
      %v1643 = vpop.f32.mrf.mxu0
      %v1644 = vadd.f32 %v628, %v1643
      %v1645 = vpop.f32.mrf.mxu0
      %v1646 = vadd.f32 %v632, %v1645
      %1647 = vmatprep.mubr.bf16.mxu0 %v844
      %1648 = vmatmul.mubr.bf16.gmra.mxu0 %v843
      %v1649 = vpop.f32.mrf.mxu0
      %v1650 = vadd.f32 %v628, %v1649
      %v1651 = vpop.f32.mrf.mxu0
      %v1652 = vadd.f32 %v632, %v1651
      %v1653 = vpop.f32.mrf.mxu0
      %v1654 = vadd.f32 %v628, %v1653
      %v1655 = vpop.f32.mrf.mxu0
      %v1656 = vadd.f32 %v632, %v1655
      %1657 = vmatprep.mubr.bf16.mxu0 %v852
      %1658 = vmatmul.mubr.bf16.gmra.mxu0 %v851
      %v1659 = vpop.f32.mrf.mxu0
      %v1660 = vadd.f32 %v628, %v1659
      %v1661 = vpop.f32.mrf.mxu0
      %v1662 = vadd.f32 %v632, %v1661
      %v1663 = vpop.f32.mrf.mxu0
      %v1664 = vadd.f32 %v628, %v1663
      %v1665 = vpop.f32.mrf.mxu0
      %v1666 = vadd.f32 %v632, %v1665
      %1667 = vmatprep.mubr.bf16.mxu0 %v860
      %1668 = vmatmul.mubr.bf16.gmra.mxu0 %v859
      %v1669 = vpop.f32.mrf.mxu0
      %v1670 = vadd.f32 %v628, %v1669
      %v1671 = vpop.f32.mrf.mxu0
      %v1672 = vadd.f32 %v632, %v1671
      %v1673 = vpop.f32.mrf.mxu0
      %v1674 = vadd.f32 %v628, %v1673
      %v1675 = vpop.f32.mrf.mxu0
      %v1676 = vadd.f32 %v632, %v1675
      %1677 = vmatprep.mubr.bf16.mxu0 %v868
      %1678 = vmatmul.mubr.bf16.gmra.mxu0 %v867
      %v1679 = vpop.f32.mrf.mxu0
      %v1680 = vadd.f32 %v628, %v1679
      %v1681 = vpop.f32.mrf.mxu0
      %v1682 = vadd.f32 %v632, %v1681
      %v1683 = vpop.f32.mrf.mxu0
      %v1684 = vadd.f32 %v628, %v1683
      %v1685 = vpop.f32.mrf.mxu0
      %v1686 = vadd.f32 %v632, %v1685
      %1687 = vmatprep.mubr.bf16.mxu0 %v876
      %1688 = vmatmul.mubr.bf16.gmra.mxu0 %v875
      %v1689 = vpop.f32.mrf.mxu0
      %v1690 = vadd.f32 %v628, %v1689
      %v1691 = vpop.f32.mrf.mxu0
      %v1692 = vadd.f32 %v632, %v1691
      %v1693 = vpop.f32.mrf.mxu0
      %v1694 = vadd.f32 %v628, %v1693
      %v1695 = vpop.f32.mrf.mxu0
      %v1696 = vadd.f32 %v632, %v1695
      %1697 = vmatprep.mubr.bf16.mxu0 %v884
      %1698 = vmatmul.mubr.bf16.gmra.mxu0 %v883
      %v1699 = vpop.f32.mrf.mxu0
      %v1700 = vadd.f32 %v628, %v1699
      %v1701 = vpop.f32.mrf.mxu0
      %v1702 = vadd.f32 %v632, %v1701
      %v1703 = vpop.f32.mrf.mxu0
      %v1704 = vadd.f32 %v628, %v1703
      %v1705 = vpop.f32.mrf.mxu0
      %v1706 = vadd.f32 %v632, %v1705
      %1707 = vdwg.mxu0
      %1708 = vmatprep.subr.bf16.mxu0 %v1386
      %1709 = vmatpush1.bf16.msra.mxu0 %v1385
      %1710 = vmatprep.subr.bf16.mxu0 %v1384
      %1711 = vmatpush1.bf16.msra.mxu0 %v1383
      %1712 = vmatprep.subr.bf16.mxu0 %v1382
      %1713 = vmatpush1.bf16.msra.mxu0 %v1381
      %1714 = vmatprep.subr.bf16.mxu0 %v1380
      %1715 = vmatpush1.bf16.msra.mxu0 %v1379
      %1716 = vmatprep.subr.bf16.mxu0 %v1378
      %1717 = vmatpush1.bf16.msra.mxu0 %v1377
      %1718 = vmatprep.subr.bf16.mxu0 %v1376
      %1719 = vmatpush1.bf16.msra.mxu0 %v1375
      %1720 = vmatprep.subr.bf16.mxu0 %v1374
      %1721 = vmatpush1.bf16.msra.mxu0 %v1373
      %1722 = vmatprep.subr.bf16.mxu0 %v1372
      %1723 = vmatpush1.bf16.msra.mxu0 %v1371
      %1724 = vmatprep.subr.bf16.mxu0 %v1402
      %1725 = vmatpush2.bf16.msra.mxu0 %v1401
      %1726 = vmatprep.subr.bf16.mxu0 %v1400
      %1727 = vmatpush2.bf16.msra.mxu0 %v1399
      %1728 = vmatprep.subr.bf16.mxu0 %v1398
      %1729 = vmatpush2.bf16.msra.mxu0 %v1397
      %1730 = vmatprep.subr.bf16.mxu0 %v1396
      %1731 = vmatpush2.bf16.msra.mxu0 %v1395
      %1732 = vmatprep.subr.bf16.mxu0 %v1394
      %1733 = vmatpush2.bf16.msra.mxu0 %v1393
      %1734 = vmatprep.subr.bf16.mxu0 %v1392
      %1735 = vmatpush2.bf16.msra.mxu0 %v1391
      %1736 = vmatprep.subr.bf16.mxu0 %v1390
      %1737 = vmatpush2.bf16.msra.mxu0 %v1389
      %1738 = vmatprep.subr.bf16.mxu0 %v1388
      %1739 = vmatpush2.bf16.msra.mxu0 %v1387
      %1740 = vmatprep.mubr.bf16.mxu0 %v830
      %1741 = vmatmul.mubr.bf16.gmra.mxu0 %v829
      %v1742 = vpop.f32.mrf.mxu0
      %v1743 = vadd.f32 %v1630, %v1742
      %v1744 = vpop.f32.mrf.mxu0
      %v1745 = vadd.f32 %v1632, %v1744
      %v1746 = vpop.f32.mrf.mxu0
      %v1747 = vadd.f32 %v1634, %v1746
      %v1748 = vpop.f32.mrf.mxu0
      %v1749 = vadd.f32 %v1636, %v1748
      %1750 = vmatprep.mubr.bf16.mxu0 %v838
      %1751 = vmatmul.mubr.bf16.gmra.mxu0 %v837
      %v1752 = vpop.f32.mrf.mxu0
      %v1753 = vadd.f32 %v1640, %v1752
      %v1754 = vpop.f32.mrf.mxu0
      %v1755 = vadd.f32 %v1642, %v1754
      %v1756 = vpop.f32.mrf.mxu0
      %v1757 = vadd.f32 %v1644, %v1756
      %v1758 = vpop.f32.mrf.mxu0
      %v1759 = vadd.f32 %v1646, %v1758
      %1760 = vmatprep.mubr.bf16.mxu0 %v846
      %1761 = vmatmul.mubr.bf16.gmra.mxu0 %v845
      %v1762 = vpop.f32.mrf.mxu0
      %v1763 = vadd.f32 %v1650, %v1762
      %v1764 = vpop.f32.mrf.mxu0
      %v1765 = vadd.f32 %v1652, %v1764
      %v1766 = vpop.f32.mrf.mxu0
      %v1767 = vadd.f32 %v1654, %v1766
      %v1768 = vpop.f32.mrf.mxu0
      %v1769 = vadd.f32 %v1656, %v1768
      %1770 = vmatprep.mubr.bf16.mxu0 %v854
      %1771 = vmatmul.mubr.bf16.gmra.mxu0 %v853
      %v1772 = vpop.f32.mrf.mxu0
      %v1773 = vadd.f32 %v1660, %v1772
      %v1774 = vpop.f32.mrf.mxu0
      %v1775 = vadd.f32 %v1662, %v1774
      %v1776 = vpop.f32.mrf.mxu0
      %v1777 = vadd.f32 %v1664, %v1776
      %v1778 = vpop.f32.mrf.mxu0
      %v1779 = vadd.f32 %v1666, %v1778
      %1780 = vmatprep.mubr.bf16.mxu0 %v862
      %1781 = vmatmul.mubr.bf16.gmra.mxu0 %v861
      %v1782 = vpop.f32.mrf.mxu0
      %v1783 = vadd.f32 %v1670, %v1782
      %v1784 = vpop.f32.mrf.mxu0
      %v1785 = vadd.f32 %v1672, %v1784
      %v1786 = vpop.f32.mrf.mxu0
      %v1787 = vadd.f32 %v1674, %v1786
      %v1788 = vpop.f32.mrf.mxu0
      %v1789 = vadd.f32 %v1676, %v1788
      %1790 = vmatprep.mubr.bf16.mxu0 %v870
      %1791 = vmatmul.mubr.bf16.gmra.mxu0 %v869
      %v1792 = vpop.f32.mrf.mxu0
      %v1793 = vadd.f32 %v1680, %v1792
      %v1794 = vpop.f32.mrf.mxu0
      %v1795 = vadd.f32 %v1682, %v1794
      %v1796 = vpop.f32.mrf.mxu0
      %v1797 = vadd.f32 %v1684, %v1796
      %v1798 = vpop.f32.mrf.mxu0
      %v1799 = vadd.f32 %v1686, %v1798
      %1800 = vmatprep.mubr.bf16.mxu0 %v878
      %1801 = vmatmul.mubr.bf16.gmra.mxu0 %v877
      %v1802 = vpop.f32.mrf.mxu0
      %v1803 = vadd.f32 %v1690, %v1802
      %v1804 = vpop.f32.mrf.mxu0
      %v1805 = vadd.f32 %v1692, %v1804
      %v1806 = vpop.f32.mrf.mxu0
      %v1807 = vadd.f32 %v1694, %v1806
      %v1808 = vpop.f32.mrf.mxu0
      %v1809 = vadd.f32 %v1696, %v1808
      %1810 = vmatprep.mubr.bf16.mxu0 %v886
      %1811 = vmatmul.mubr.bf16.gmra.mxu0 %v885
      %v1812 = vpop.f32.mrf.mxu0
      %v1813 = vadd.f32 %v1700, %v1812
      %v1814 = vpop.f32.mrf.mxu0
      %v1815 = vadd.f32 %v1702, %v1814
      %v1816 = vpop.f32.mrf.mxu0
      %v1817 = vadd.f32 %v1704, %v1816
      %v1818 = vpop.f32.mrf.mxu0
      %v1819 = vadd.f32 %v1706, %v1818
      %1820 = vdwg.mxu0
      %1821 = vmatprep.subr.bf16.mxu0 %v1418
      %1822 = vmatpush1.bf16.msra.mxu0 %v1417
      %1823 = vmatprep.subr.bf16.mxu0 %v1416
      %1824 = vmatpush1.bf16.msra.mxu0 %v1415
      %1825 = vmatprep.subr.bf16.mxu0 %v1414
      %1826 = vmatpush1.bf16.msra.mxu0 %v1413
      %1827 = vmatprep.subr.bf16.mxu0 %v1412
      %1828 = vmatpush1.bf16.msra.mxu0 %v1411
      %1829 = vmatprep.subr.bf16.mxu0 %v1410
      %1830 = vmatpush1.bf16.msra.mxu0 %v1409
      %1831 = vmatprep.subr.bf16.mxu0 %v1408
      %1832 = vmatpush1.bf16.msra.mxu0 %v1407
      %1833 = vmatprep.subr.bf16.mxu0 %v1406
      %1834 = vmatpush1.bf16.msra.mxu0 %v1405
      %1835 = vmatprep.subr.bf16.mxu0 %v1404
      %1836 = vmatpush1.bf16.msra.mxu0 %v1403
      %1837 = vmatprep.subr.bf16.mxu0 %v1434
      %1838 = vmatpush2.bf16.msra.mxu0 %v1433
      %1839 = vmatprep.subr.bf16.mxu0 %v1432
      %1840 = vmatpush2.bf16.msra.mxu0 %v1431
      %1841 = vmatprep.subr.bf16.mxu0 %v1430
      %1842 = vmatpush2.bf16.msra.mxu0 %v1429
      %1843 = vmatprep.subr.bf16.mxu0 %v1428
      %1844 = vmatpush2.bf16.msra.mxu0 %v1427
      %1845 = vmatprep.subr.bf16.mxu0 %v1426
      %1846 = vmatpush2.bf16.msra.mxu0 %v1425
      %1847 = vmatprep.subr.bf16.mxu0 %v1424
      %1848 = vmatpush2.bf16.msra.mxu0 %v1423
      %1849 = vmatprep.subr.bf16.mxu0 %v1422
      %1850 = vmatpush2.bf16.msra.mxu0 %v1421
      %1851 = vmatprep.subr.bf16.mxu0 %v1420
      %1852 = vmatpush2.bf16.msra.mxu0 %v1419
      %1853 = vmatprep.mubr.bf16.mxu0 %v832
      %1854 = vmatmul.mubr.bf16.gmra.mxu0 %v831
      %v1855 = vpop.f32.mrf.mxu0
      %v1856 = vadd.f32 %v1743, %v1855
      %v1857 = vpop.f32.mrf.mxu0
      %v1858 = vadd.f32 %v1745, %v1857
      %v1859 = vpop.f32.mrf.mxu0
      %v1860 = vadd.f32 %v1747, %v1859
      %v1861 = vpop.f32.mrf.mxu0
      %v1862 = vadd.f32 %v1749, %v1861
      %1863 = vmatprep.mubr.bf16.mxu0 %v840
      %1864 = vmatmul.mubr.bf16.gmra.mxu0 %v839
      %v1865 = vpop.f32.mrf.mxu0
      %v1866 = vadd.f32 %v1753, %v1865
      %v1867 = vpop.f32.mrf.mxu0
      %v1868 = vadd.f32 %v1755, %v1867
      %v1869 = vpop.f32.mrf.mxu0
      %v1870 = vadd.f32 %v1757, %v1869
      %v1871 = vpop.f32.mrf.mxu0
      %v1872 = vadd.f32 %v1759, %v1871
      %1873 = vmatprep.mubr.bf16.mxu0 %v848
      %1874 = vmatmul.mubr.bf16.gmra.mxu0 %v847
      %v1875 = vpop.f32.mrf.mxu0
      %v1876 = vadd.f32 %v1763, %v1875
      %v1877 = vpop.f32.mrf.mxu0
      %v1878 = vadd.f32 %v1765, %v1877
      %v1879 = vpop.f32.mrf.mxu0
      %v1880 = vadd.f32 %v1767, %v1879
      %v1881 = vpop.f32.mrf.mxu0
      %v1882 = vadd.f32 %v1769, %v1881
      %1883 = vmatprep.mubr.bf16.mxu0 %v856
      %1884 = vmatmul.mubr.bf16.gmra.mxu0 %v855
      %v1885 = vpop.f32.mrf.mxu0
      %v1886 = vadd.f32 %v1773, %v1885
      %v1887 = vpop.f32.mrf.mxu0
      %v1888 = vadd.f32 %v1775, %v1887
      %v1889 = vpop.f32.mrf.mxu0
      %v1890 = vadd.f32 %v1777, %v1889
      %v1891 = vpop.f32.mrf.mxu0
      %v1892 = vadd.f32 %v1779, %v1891
      %1893 = vmatprep.mubr.bf16.mxu0 %v864
      %1894 = vmatmul.mubr.bf16.gmra.mxu0 %v863
      %v1895 = vpop.f32.mrf.mxu0
      %v1896 = vadd.f32 %v1783, %v1895
      %v1897 = vpop.f32.mrf.mxu0
      %v1898 = vadd.f32 %v1785, %v1897
      %v1899 = vpop.f32.mrf.mxu0
      %v1900 = vadd.f32 %v1787, %v1899
      %v1901 = vpop.f32.mrf.mxu0
      %v1902 = vadd.f32 %v1789, %v1901
      %1903 = vmatprep.mubr.bf16.mxu0 %v872
      %1904 = vmatmul.mubr.bf16.gmra.mxu0 %v871
      %v1905 = vpop.f32.mrf.mxu0
      %v1906 = vadd.f32 %v1793, %v1905
      %v1907 = vpop.f32.mrf.mxu0
      %v1908 = vadd.f32 %v1795, %v1907
      %v1909 = vpop.f32.mrf.mxu0
      %v1910 = vadd.f32 %v1797, %v1909
      %v1911 = vpop.f32.mrf.mxu0
      %v1912 = vadd.f32 %v1799, %v1911
      %1913 = vmatprep.mubr.bf16.mxu0 %v880
      %1914 = vmatmul.mubr.bf16.gmra.mxu0 %v879
      %v1915 = vpop.f32.mrf.mxu0
      %v1916 = vadd.f32 %v1803, %v1915
      %v1917 = vpop.f32.mrf.mxu0
      %v1918 = vadd.f32 %v1805, %v1917
      %v1919 = vpop.f32.mrf.mxu0
      %v1920 = vadd.f32 %v1807, %v1919
      %v1921 = vpop.f32.mrf.mxu0
      %v1922 = vadd.f32 %v1809, %v1921
      %1923 = vmatprep.mubr.bf16.mxu0 %v888
      %1924 = vmatmul.mubr.bf16.gmra.mxu0 %v887
      %v1925 = vpop.f32.mrf.mxu0
      %v1926 = vadd.f32 %v1813, %v1925
      %v1927 = vpop.f32.mrf.mxu0
      %v1928 = vadd.f32 %v1815, %v1927
      %v1929 = vpop.f32.mrf.mxu0
      %v1930 = vadd.f32 %v1817, %v1929
      %v1931 = vpop.f32.mrf.mxu0
      %v1932 = vadd.f32 %v1819, %v1931
      %1933 = vdwg.mxu0
      %1934 = vmatprep.subr.bf16.mxu0 %v1450
      %1935 = vmatpush1.bf16.msra.mxu0 %v1449
      %1936 = vmatprep.subr.bf16.mxu0 %v1448
      %1937 = vmatpush1.bf16.msra.mxu0 %v1447
      %1938 = vmatprep.subr.bf16.mxu0 %v1446
      %1939 = vmatpush1.bf16.msra.mxu0 %v1445
      %1940 = vmatprep.subr.bf16.mxu0 %v1444
      %1941 = vmatpush1.bf16.msra.mxu0 %v1443
      %1942 = vmatprep.subr.bf16.mxu0 %v1442
      %1943 = vmatpush1.bf16.msra.mxu0 %v1441
      %1944 = vmatprep.subr.bf16.mxu0 %v1440
      %1945 = vmatpush1.bf16.msra.mxu0 %v1439
      %1946 = vmatprep.subr.bf16.mxu0 %v1438
      %1947 = vmatpush1.bf16.msra.mxu0 %v1437
      %1948 = vmatprep.subr.bf16.mxu0 %v1436
      %1949 = vmatpush1.bf16.msra.mxu0 %v1435
      %1950 = vmatprep.subr.bf16.mxu0 %v1466
      %1951 = vmatpush2.bf16.msra.mxu0 %v1465
      %1952 = vmatprep.subr.bf16.mxu0 %v1464
      %1953 = vmatpush2.bf16.msra.mxu0 %v1463
      %1954 = vmatprep.subr.bf16.mxu0 %v1462
      %1955 = vmatpush2.bf16.msra.mxu0 %v1461
      %1956 = vmatprep.subr.bf16.mxu0 %v1460
      %1957 = vmatpush2.bf16.msra.mxu0 %v1459
      %1958 = vmatprep.subr.bf16.mxu0 %v1458
      %1959 = vmatpush2.bf16.msra.mxu0 %v1457
      %1960 = vmatprep.subr.bf16.mxu0 %v1456
      %1961 = vmatpush2.bf16.msra.mxu0 %v1455
      %1962 = vmatprep.subr.bf16.mxu0 %v1454
      %1963 = vmatpush2.bf16.msra.mxu0 %v1453
      %1964 = vmatprep.subr.bf16.mxu0 %v1452
      %1965 = vmatpush2.bf16.msra.mxu0 %v1451
      %1966 = vmatprep.mubr.bf16.mxu0 %v834
      %1967 = vmatmul.mubr.bf16.gmra.mxu0 %v833
      %v1968 = vpop.f32.mrf.mxu0
      %v1969 = vadd.f32 %v1856, %v1968
      %v1970 = vpop.f32.mrf.mxu0
      %v1971 = vadd.f32 %v1858, %v1970
      %v1972 = vpop.f32.mrf.mxu0
      %v1973 = vadd.f32 %v1860, %v1972
      %v1974 = vpop.f32.mrf.mxu0
      %v1975 = vadd.f32 %v1862, %v1974
      %1976 = vmatprep.mubr.bf16.mxu0 %v842
      %1977 = vmatmul.mubr.bf16.gmra.mxu0 %v841
      %v1978 = vpop.f32.mrf.mxu0
      %v1979 = vadd.f32 %v1866, %v1978
      %v1980 = vpop.f32.mrf.mxu0
      %v1981 = vadd.f32 %v1868, %v1980
      %v1982 = vpop.f32.mrf.mxu0
      %v1983 = vadd.f32 %v1870, %v1982
      %v1984 = vpop.f32.mrf.mxu0
      %v1985 = vadd.f32 %v1872, %v1984
      %1986 = vmatprep.mubr.bf16.mxu0 %v850
      %1987 = vmatmul.mubr.bf16.gmra.mxu0 %v849
      %v1988 = vpop.f32.mrf.mxu0
      %v1989 = vadd.f32 %v1876, %v1988
      %v1990 = vpop.f32.mrf.mxu0
      %v1991 = vadd.f32 %v1878, %v1990
      %v1992 = vpop.f32.mrf.mxu0
      %v1993 = vadd.f32 %v1880, %v1992
      %v1994 = vpop.f32.mrf.mxu0
      %v1995 = vadd.f32 %v1882, %v1994
      %1996 = vmatprep.mubr.bf16.mxu0 %v858
      %1997 = vmatmul.mubr.bf16.gmra.mxu0 %v857
      %v1998 = vpop.f32.mrf.mxu0
      %v1999 = vadd.f32 %v1886, %v1998
      %v2000 = vpop.f32.mrf.mxu0
      %v2001 = vadd.f32 %v1888, %v2000
      %v2002 = vpop.f32.mrf.mxu0
      %v2003 = vadd.f32 %v1890, %v2002
      %v2004 = vpop.f32.mrf.mxu0
      %v2005 = vadd.f32 %v1892, %v2004
      %2006 = vmatprep.mubr.bf16.mxu0 %v866
      %2007 = vmatmul.mubr.bf16.gmra.mxu0 %v865
      %v2008 = vpop.f32.mrf.mxu0
      %v2009 = vadd.f32 %v1896, %v2008
      %v2010 = vpop.f32.mrf.mxu0
      %v2011 = vadd.f32 %v1898, %v2010
      %v2012 = vpop.f32.mrf.mxu0
      %v2013 = vadd.f32 %v1900, %v2012
      %v2014 = vpop.f32.mrf.mxu0
      %v2015 = vadd.f32 %v1902, %v2014
      %2016 = vmatprep.mubr.bf16.mxu0 %v874
      %2017 = vmatmul.mubr.bf16.gmra.mxu0 %v873
      %v2018 = vpop.f32.mrf.mxu0
      %v2019 = vadd.f32 %v1906, %v2018
      %v2020 = vpop.f32.mrf.mxu0
      %v2021 = vadd.f32 %v1908, %v2020
      %v2022 = vpop.f32.mrf.mxu0
      %v2023 = vadd.f32 %v1910, %v2022
      %v2024 = vpop.f32.mrf.mxu0
      %v2025 = vadd.f32 %v1912, %v2024
      %2026 = vmatprep.mubr.bf16.mxu0 %v882
      %2027 = vmatmul.mubr.bf16.gmra.mxu0 %v881
      %v2028 = vpop.f32.mrf.mxu0
      %v2029 = vadd.f32 %v1916, %v2028
      %v2030 = vpop.f32.mrf.mxu0
      %v2031 = vadd.f32 %v1918, %v2030
      %v2032 = vpop.f32.mrf.mxu0
      %v2033 = vadd.f32 %v1920, %v2032
      %v2034 = vpop.f32.mrf.mxu0
      %v2035 = vadd.f32 %v1922, %v2034
      %2036 = vmatprep.mubr.bf16.mxu0 %v890
      %2037 = vmatmul.mubr.bf16.gmra.mxu0 %v889
      %v2038 = vpop.f32.mrf.mxu0
      %v2039 = vadd.f32 %v1926, %v2038
      %v2040 = vpop.f32.mrf.mxu0
      %v2041 = vadd.f32 %v1928, %v2040
      %v2042 = vpop.f32.mrf.mxu0
      %v2043 = vadd.f32 %v1930, %v2042
      %v2044 = vpop.f32.mrf.mxu0
      %v2045 = vadd.f32 %v1932, %v2044
      %2046 = vdwg.mxu0
      %v2047 = vmax.f32 %v1969, 0.0
      %v2048 = vmax.f32 %v1971, 0.0
      %v2049 = vmax.f32 %v1973, 0.0
      %v2050 = vmax.f32 %v1975, 0.0
      %v2051 = vmax.f32 %v1979, 0.0
      %v2052 = vmax.f32 %v1981, 0.0
      %v2053 = vmax.f32 %v1983, 0.0
      %v2054 = vmax.f32 %v1985, 0.0
      %v2055 = vmax.f32 %v1989, 0.0
      %v2056 = vmax.f32 %v1991, 0.0
      %v2057 = vmax.f32 %v1993, 0.0
      %v2058 = vmax.f32 %v1995, 0.0
      %v2059 = vmax.f32 %v1999, 0.0
      %v2060 = vmax.f32 %v2001, 0.0
      %v2061 = vmax.f32 %v2003, 0.0
      %v2062 = vmax.f32 %v2005, 0.0
      %v2063 = vmax.f32 %v2009, 0.0
      %v2064 = vmax.f32 %v2011, 0.0
      %v2065 = vmax.f32 %v2013, 0.0
      %v2066 = vmax.f32 %v2015, 0.0
      %v2067 = vmax.f32 %v2019, 0.0
      %v2068 = vmax.f32 %v2021, 0.0
      %v2069 = vmax.f32 %v2023, 0.0
      %v2070 = vmax.f32 %v2025, 0.0
      %v2071 = vmax.f32 %v2029, 0.0
      %v2072 = vmax.f32 %v2031, 0.0
      %v2073 = vmax.f32 %v2033, 0.0
      %v2074 = vmax.f32 %v2035, 0.0
      %v2075 = vmax.f32 %v2039, 0.0
      %v2076 = vmax.f32 %v2041, 0.0
      %v2077 = vmax.f32 %v2043, 0.0
      %v2078 = vmax.f32 %v2045, 0.0
      %v2079 = vld [vmem:[%s3] sm:$0xff]
      %v2080 = vld [vmem:[%s3 + $0x8] sm:$0xff]
      %v2081 = vld [vmem:[%s3 + $0x10] sm:$0xff]
      %v2082 = vld [vmem:[%s3 + $0x18] sm:$0xff]
      %v2083 = vld [vmem:[%s3 + $0x20] sm:$0xff]
      %v2084 = vld [vmem:[%s3 + $0x28] sm:$0xff]
      %v2085 = vld [vmem:[%s3 + $0x30] sm:$0xff]
      %v2086 = vld [vmem:[%s3 + $0x38] sm:$0xff]
      %v2087 = vld [vmem:[%s3 + $0x40] sm:$0xff]
      %v2088 = vld [vmem:[%s3 + $0x48] sm:$0xff]
      %v2089 = vld [vmem:[%s3 + $0x50] sm:$0xff]
      %v2090 = vld [vmem:[%s3 + $0x58] sm:$0xff]
      %v2091 = vld [vmem:[%s3 + $0x60] sm:$0xff]
      %v2092 = vld [vmem:[%s3 + $0x68] sm:$0xff]
      %v2093 = vld [vmem:[%s3 + $0x70] sm:$0xff]
      %v2094 = vld [vmem:[%s3 + $0x78] sm:$0xff]
      %v2095 = vld [vmem:[%s3 + $0x80] sm:$0xff]
      %v2096 = vld [vmem:[%s3 + $0x88] sm:$0xff]
      %v2097 = vld [vmem:[%s3 + $0x90] sm:$0xff]
      %v2098 = vld [vmem:[%s3 + $0x98] sm:$0xff]
      %v2099 = vld [vmem:[%s3 + $0xa0] sm:$0xff]
      %v2100 = vld [vmem:[%s3 + $0xa8] sm:$0xff]
      %v2101 = vld [vmem:[%s3 + $0xb0] sm:$0xff]
      %v2102 = vld [vmem:[%s3 + $0xb8] sm:$0xff]
      %v2103 = vld [vmem:[%s3 + $0xc0] sm:$0xff]
      %v2104 = vld [vmem:[%s3 + $0xc8] sm:$0xff]
      %v2105 = vld [vmem:[%s3 + $0xd0] sm:$0xff]
      %v2106 = vld [vmem:[%s3 + $0xd8] sm:$0xff]
      %v2107 = vld [vmem:[%s3 + $0xe0] sm:$0xff]
      %v2108 = vld [vmem:[%s3 + $0xe8] sm:$0xff]
      %v2109 = vld [vmem:[%s3 + $0xf0] sm:$0xff]
      %v2110 = vld [vmem:[%s3 + $0xf8] sm:$0xff]
      %v2111 = vld [vmem:[%s4] sm:$0x1]
      %v2113 = vlaneseq
      %v2114 = vshrl.u32 %v2113, 7
      %v2115 = vsub.s32 0, %v2114
      %v2116 = vrot.slane %v2111, %v2115
      %2118 = vmatprep.subr.mxu0 0.0
      %2119 = vmatpush1.msra.mxu0 %v2094
      %2120 = vmatprep.subr.mxu0 0.0
      %2121 = vmatpush1.msra.mxu0 %v2093
      %2122 = vmatprep.subr.mxu0 0.0
      %2123 = vmatpush1.msra.mxu0 %v2092
      %2124 = vmatprep.subr.mxu0 0.0
      %2125 = vmatpush1.msra.mxu0 %v2091
      %2126 = vmatprep.subr.mxu0 0.0
      %2127 = vmatpush1.msra.mxu0 %v2090
      %2128 = vmatprep.subr.mxu0 0.0
      %2129 = vmatpush1.msra.mxu0 %v2089
      %2130 = vmatprep.subr.mxu0 0.0
      %2131 = vmatpush1.msra.mxu0 %v2088
      %2132 = vmatprep.subr.mxu0 0.0
      %2133 = vmatpush1.msra.mxu0 %v2087
      %2134 = vmatprep.subr.mxu0 0.0
      %2135 = vmatpush1.msra.mxu0 %v2086
      %2136 = vmatprep.subr.mxu0 0.0
      %2137 = vmatpush1.msra.mxu0 %v2085
      %2138 = vmatprep.subr.mxu0 0.0
      %2139 = vmatpush1.msra.mxu0 %v2084
      %2140 = vmatprep.subr.mxu0 0.0
      %2141 = vmatpush1.msra.mxu0 %v2083
      %2142 = vmatprep.subr.mxu0 0.0
      %2143 = vmatpush1.msra.mxu0 %v2082
      %2144 = vmatprep.subr.mxu0 0.0
      %2145 = vmatpush1.msra.mxu0 %v2081
      %2146 = vmatprep.subr.mxu0 0.0
      %2147 = vmatpush1.msra.mxu0 %v2080
      %2148 = vmatprep.subr.mxu0 0.0
      %2149 = vmatpush1.msra.mxu0 %v2079
      %2150 = vmatprep.subr.mxu0 0.0
      %2151 = vmatpush2.msra.mxu0 %v2110
      %2152 = vmatprep.subr.mxu0 0.0
      %2153 = vmatpush2.msra.mxu0 %v2109
      %2154 = vmatprep.subr.mxu0 0.0
      %2155 = vmatpush2.msra.mxu0 %v2108
      %2156 = vmatprep.subr.mxu0 0.0
      %2157 = vmatpush2.msra.mxu0 %v2107
      %2158 = vmatprep.subr.mxu0 0.0
      %2159 = vmatpush2.msra.mxu0 %v2106
      %2160 = vmatprep.subr.mxu0 0.0
      %2161 = vmatpush2.msra.mxu0 %v2105
      %2162 = vmatprep.subr.mxu0 0.0
      %2163 = vmatpush2.msra.mxu0 %v2104
      %2164 = vmatprep.subr.mxu0 0.0
      %2165 = vmatpush2.msra.mxu0 %v2103
      %2166 = vmatprep.subr.mxu0 0.0
      %2167 = vmatpush2.msra.mxu0 %v2102
      %2168 = vmatprep.subr.mxu0 0.0
      %2169 = vmatpush2.msra.mxu0 %v2101
      %2170 = vmatprep.subr.mxu0 0.0
      %2171 = vmatpush2.msra.mxu0 %v2100
      %2172 = vmatprep.subr.mxu0 0.0
      %2173 = vmatpush2.msra.mxu0 %v2099
      %2174 = vmatprep.subr.mxu0 0.0
      %2175 = vmatpush2.msra.mxu0 %v2098
      %2176 = vmatprep.subr.mxu0 0.0
      %2177 = vmatpush2.msra.mxu0 %v2097
      %2178 = vmatprep.subr.mxu0 0.0
      %2179 = vmatpush2.msra.mxu0 %v2096
      %2180 = vmatprep.subr.mxu0 0.0
      %2181 = vmatpush2.msra.mxu0 %v2095
      %2182 = vmatprep.mubr.f32.mxu0 %v2048
      %2183 = vmatmul.mubr.f32.gmra.mxu0 %v2047
      %v2184 = vpop.f32.mrf.mxu0
      %v2185 = vadd.f32 %v2116, %v2184
      %v2186 = vpop.f32.mrf.mxu0
      %2187 = vmatprep.mubr.f32.mxu0 %v2050
      %2188 = vmatmul.mubr.f32.gmra.mxu0 %v2049
      %v2189 = vpop.f32.mrf.mxu0
      %v2190 = vadd.f32 %v2116, %v2189
      %v2191 = vpop.f32.mrf.mxu0
      %2192 = vmatprep.mubr.f32.mxu0 %v2052
      %2193 = vmatmul.mubr.f32.gmra.mxu0 %v2051
      %v2194 = vpop.f32.mrf.mxu0
      %v2195 = vadd.f32 %v2116, %v2194
      %v2196 = vpop.f32.mrf.mxu0
      %2197 = vmatprep.mubr.f32.mxu0 %v2054
      %2198 = vmatmul.mubr.f32.gmra.mxu0 %v2053
      %v2199 = vpop.f32.mrf.mxu0
      %v2200 = vadd.f32 %v2116, %v2199
      %v2201 = vpop.f32.mrf.mxu0
      %2202 = vmatprep.mubr.f32.mxu0 %v2056
      %2203 = vmatmul.mubr.f32.gmra.mxu0 %v2055
      %v2204 = vpop.f32.mrf.mxu0
      %v2205 = vadd.f32 %v2116, %v2204
      %v2206 = vpop.f32.mrf.mxu0
      %2207 = vmatprep.mubr.f32.mxu0 %v2058
      %2208 = vmatmul.mubr.f32.gmra.mxu0 %v2057
      %v2209 = vpop.f32.mrf.mxu0
      %v2210 = vadd.f32 %v2116, %v2209
      %v2211 = vpop.f32.mrf.mxu0
      %2212 = vmatprep.mubr.f32.mxu0 %v2060
      %2213 = vmatmul.mubr.f32.gmra.mxu0 %v2059
      %v2214 = vpop.f32.mrf.mxu0
      %v2215 = vadd.f32 %v2116, %v2214
      %v2216 = vpop.f32.mrf.mxu0
      %2217 = vmatprep.mubr.f32.mxu0 %v2062
      %2218 = vmatmul.mubr.f32.gmra.mxu0 %v2061
      %v2219 = vpop.f32.mrf.mxu0
      %v2220 = vadd.f32 %v2116, %v2219
      %v2221 = vpop.f32.mrf.mxu0
      %2222 = vmatprep.mubr.f32.mxu0 %v2064
      %2223 = vmatmul.mubr.f32.gmra.mxu0 %v2063
      %v2224 = vpop.f32.mrf.mxu0
      %v2225 = vadd.f32 %v2116, %v2224
      %v2226 = vpop.f32.mrf.mxu0
      %2227 = vmatprep.mubr.f32.mxu0 %v2066
      %2228 = vmatmul.mubr.f32.gmra.mxu0 %v2065
      %v2229 = vpop.f32.mrf.mxu0
      %v2230 = vadd.f32 %v2116, %v2229
      %v2231 = vpop.f32.mrf.mxu0
      %2232 = vmatprep.mubr.f32.mxu0 %v2068
      %2233 = vmatmul.mubr.f32.gmra.mxu0 %v2067
      %v2234 = vpop.f32.mrf.mxu0
      %v2235 = vadd.f32 %v2116, %v2234
      %v2236 = vpop.f32.mrf.mxu0
      %2237 = vmatprep.mubr.f32.mxu0 %v2070
      %2238 = vmatmul.mubr.f32.gmra.mxu0 %v2069
      %v2239 = vpop.f32.mrf.mxu0
      %v2240 = vadd.f32 %v2116, %v2239
      %v2241 = vpop.f32.mrf.mxu0
      %2242 = vmatprep.mubr.f32.mxu0 %v2072
      %2243 = vmatmul.mubr.f32.gmra.mxu0 %v2071
      %v2244 = vpop.f32.mrf.mxu0
      %v2245 = vadd.f32 %v2116, %v2244
      %v2246 = vpop.f32.mrf.mxu0
      %2247 = vmatprep.mubr.f32.mxu0 %v2074
      %2248 = vmatmul.mubr.f32.gmra.mxu0 %v2073
      %v2249 = vpop.f32.mrf.mxu0
      %v2250 = vadd.f32 %v2116, %v2249
      %v2251 = vpop.f32.mrf.mxu0
      %2252 = vmatprep.mubr.f32.mxu0 %v2076
      %2253 = vmatmul.mubr.f32.gmra.mxu0 %v2075
      %v2254 = vpop.f32.mrf.mxu0
      %v2255 = vadd.f32 %v2116, %v2254
      %v2256 = vpop.f32.mrf.mxu0
      %2257 = vmatprep.mubr.f32.mxu0 %v2078
      %2258 = vmatmul.mubr.f32.gmra.mxu0 %v2077
      %v2259 = vpop.f32.mrf.mxu0
      %v2260 = vadd.f32 %v2116, %v2259
      %v2261 = vpop.f32.mrf.mxu0
      %2262 = vdwg.mxu0
      %v2263 = vmul.f32 %v2185, 0.5
      %v2264 = vmul.f32 %v2190, 0.5
      %v2265 = vmul.f32 %v2195, 0.5
      %v2266 = vmul.f32 %v2200, 0.5
      %v2267 = vmul.f32 %v2205, 0.5
      %v2268 = vmul.f32 %v2210, 0.5
      %v2269 = vmul.f32 %v2215, 0.5
      %v2270 = vmul.f32 %v2220, 0.5
      %v2271 = vmul.f32 %v2225, 0.5
      %v2272 = vmul.f32 %v2230, 0.5
      %v2273 = vmul.f32 %v2235, 0.5
      %v2274 = vmul.f32 %v2240, 0.5
      %v2275 = vmul.f32 %v2245, 0.5
      %v2276 = vmul.f32 %v2250, 0.5
      %v2277 = vmul.f32 %v2255, 0.5
      %v2278 = vmul.f32 %v2260, 0.5
      %v2279 = vmul.f32 %v2263, 1.442695
      %v2280 = vpow.pop %v2279
      %v2281 = vmul.f32 %v2264, 1.442695
      %v2282 = vpow.pop %v2281
      %v2283 = vmul.f32 %v2265, 1.442695
      %v2284 = vpow.pop %v2283
      %v2285 = vmul.f32 %v2266, 1.442695
      %v2286 = vpow.pop %v2285
      %v2287 = vmul.f32 %v2267, 1.442695
      %v2288 = vpow.pop %v2287
      %v2289 = vmul.f32 %v2268, 1.442695
      %v2290 = vpow.pop %v2289
      %v2291 = vmul.f32 %v2269, 1.442695
      %v2292 = vpow.pop %v2291
      %v2293 = vmul.f32 %v2270, 1.442695
      %v2294 = vpow.pop %v2293
      %v2295 = vmul.f32 %v2271, 1.442695
      %v2296 = vpow.pop %v2295
      %v2297 = vmul.f32 %v2272, 1.442695
      %v2298 = vpow.pop %v2297
      %v2299 = vmul.f32 %v2273, 1.442695
      %v2300 = vpow.pop %v2299
      %v2301 = vmul.f32 %v2274, 1.442695
      %v2302 = vpow.pop %v2301
      %v2303 = vmul.f32 %v2275, 1.442695
      %v2304 = vpow.pop %v2303
      %v2305 = vmul.f32 %v2276, 1.442695
      %v2306 = vpow.pop %v2305
      %v2307 = vmul.f32 %v2277, 1.442695
      %v2308 = vpow.pop %v2307
      %v2309 = vmul.f32 %v2278, 1.442695
      %v2310 = vpow.pop %v2309
      %v2311 = vld [vmem:[%s416] sm:$0xff]
      %v2312 = vld [vmem:[%s416 + $0x8] sm:$0xff]
      %v2313 = vld [vmem:[%s416 + $0x10] sm:$0xff]
      %v2314 = vld [vmem:[%s416 + $0x18] sm:$0xff]
      %v2315 = vld [vmem:[%s416 + $0x20] sm:$0xff]
      %v2316 = vld [vmem:[%s416 + $0x28] sm:$0xff]
      %v2317 = vld [vmem:[%s416 + $0x30] sm:$0xff]
      %v2318 = vld [vmem:[%s416 + $0x38] sm:$0xff]
      %v2319 = vld [vmem:[%s416 + $0x40] sm:$0xff]
      %v2320 = vld [vmem:[%s416 + $0x48] sm:$0xff]
      %v2321 = vld [vmem:[%s416 + $0x50] sm:$0xff]
      %v2322 = vld [vmem:[%s416 + $0x58] sm:$0xff]
      %v2323 = vld [vmem:[%s416 + $0x60] sm:$0xff]
      %v2324 = vld [vmem:[%s416 + $0x68] sm:$0xff]
      %v2325 = vld [vmem:[%s416 + $0x70] sm:$0xff]
      %v2326 = vld [vmem:[%s416 + $0x78] sm:$0xff]
      %2343 = vrot.lane.b32.xlu0 %v2280, 126
      %v2344 = vpop.permute.xlu0 %2343
      %2345 = vrot.lane.b32.xlu0 %v2282, 126
      %v2346 = vpop.permute.xlu0 %2345
      %2347 = vrot.lane.b32.xlu0 %v2284, 126
      %v2348 = vpop.permute.xlu0 %2347
      %2349 = vrot.lane.b32.xlu0 %v2286, 126
      %v2350 = vpop.permute.xlu0 %2349
      %2351 = vrot.lane.b32.xlu0 %v2288, 126
      %v2352 = vpop.permute.xlu0 %2351
      %2353 = vrot.lane.b32.xlu0 %v2290, 126
      %v2354 = vpop.permute.xlu0 %2353
      %2355 = vrot.lane.b32.xlu0 %v2292, 126
      %v2356 = vpop.permute.xlu0 %2355
      %2357 = vrot.lane.b32.xlu0 %v2294, 126
      %v2358 = vpop.permute.xlu0 %2357
      %2359 = vrot.lane.b32.xlu0 %v2296, 126
      %v2360 = vpop.permute.xlu0 %2359
      %2361 = vrot.lane.b32.xlu0 %v2298, 126
      %v2362 = vpop.permute.xlu0 %2361
      %2363 = vrot.lane.b32.xlu0 %v2300, 126
      %v2364 = vpop.permute.xlu0 %2363
      %2365 = vrot.lane.b32.xlu0 %v2302, 126
      %v2366 = vpop.permute.xlu0 %2365
      %2367 = vrot.lane.b32.xlu0 %v2304, 126
      %v2368 = vpop.permute.xlu0 %2367
      %2369 = vrot.lane.b32.xlu0 %v2306, 126
      %v2370 = vpop.permute.xlu0 %2369
      %2371 = vrot.lane.b32.xlu0 %v2308, 126
      %v2372 = vpop.permute.xlu0 %2371
      %2373 = vrot.lane.b32.xlu0 %v2310, 126
      %v2374 = vpop.permute.xlu0 %2373
      %v2391 = vmul.f32 %v2311, %v2344
      %v2392 = vmul.f32 %v2312, %v2346
      %v2393 = vmul.f32 %v2313, %v2348
      %v2394 = vmul.f32 %v2314, %v2350
      %v2395 = vmul.f32 %v2315, %v2352
      %v2396 = vmul.f32 %v2316, %v2354
      %v2397 = vmul.f32 %v2317, %v2356
      %v2398 = vmul.f32 %v2318, %v2358
      %v2399 = vmul.f32 %v2319, %v2360
      %v2400 = vmul.f32 %v2320, %v2362
      %v2401 = vmul.f32 %v2321, %v2364
      %v2402 = vmul.f32 %v2322, %v2366
      %v2403 = vmul.f32 %v2323, %v2368
      %v2404 = vmul.f32 %v2324, %v2370
      %v2405 = vmul.f32 %v2325, %v2372
      %v2406 = vmul.f32 %v2326, %v2374
      %v2407 = vadd.f32 %v2391, %v2185
      %v2408 = vadd.f32 %v2392, %v2190
      %v2409 = vadd.f32 %v2393, %v2195
      %v2410 = vadd.f32 %v2394, %v2200
      %v2411 = vadd.f32 %v2395, %v2205
      %v2412 = vadd.f32 %v2396, %v2210
      %v2413 = vadd.f32 %v2397, %v2215
      %v2414 = vadd.f32 %v2398, %v2220
      %v2415 = vadd.f32 %v2399, %v2225
      %v2416 = vadd.f32 %v2400, %v2230
      %v2417 = vadd.f32 %v2401, %v2235
      %v2418 = vadd.f32 %v2402, %v2240
      %v2419 = vadd.f32 %v2403, %v2245
      %v2420 = vadd.f32 %v2404, %v2250
      %v2421 = vadd.f32 %v2405, %v2255
      %v2422 = vadd.f32 %v2406, %v2260
      %v2423 = vld [vmem:[%s5] ss:$2 sm:$0x3]
      %2425 = vset.pattern.permute.xlu0 0
      %2426 = vperm.xlu0 %2425, %v2407
      %v2427 = vpop.permute.xlu0 %2426
      %2430 = vset.pattern.permute.xlu0 0
      %2431 = vperm.xlu0 %2430, %v2408
      %v2432 = vpop.permute.xlu0 %2431
      %2435 = vset.pattern.permute.xlu0 0
      %2436 = vperm.xlu0 %2435, %v2409
      %v2437 = vpop.permute.xlu0 %2436
      %2440 = vset.pattern.permute.xlu0 0
      %2441 = vperm.xlu0 %2440, %v2410
      %v2442 = vpop.permute.xlu0 %2441
      %2445 = vset.pattern.permute.xlu0 0
      %2446 = vperm.xlu0 %2445, %v2411
      %v2447 = vpop.permute.xlu0 %2446
      %2450 = vset.pattern.permute.xlu0 0
      %2451 = vperm.xlu0 %2450, %v2412
      %v2452 = vpop.permute.xlu0 %2451
      %2455 = vset.pattern.permute.xlu0 0
      %2456 = vperm.xlu0 %2455, %v2413
      %v2457 = vpop.permute.xlu0 %2456
      %2460 = vset.pattern.permute.xlu0 0
      %2461 = vperm.xlu0 %2460, %v2414
      %v2462 = vpop.permute.xlu0 %2461
      %2465 = vset.pattern.permute.xlu0 0
      %2466 = vperm.xlu0 %2465, %v2415
      %v2467 = vpop.permute.xlu0 %2466
      %2470 = vset.pattern.permute.xlu0 0
      %2471 = vperm.xlu0 %2470, %v2416
      %v2472 = vpop.permute.xlu0 %2471
      %2475 = vset.pattern.permute.xlu0 0
      %2476 = vperm.xlu0 %2475, %v2417
      %v2477 = vpop.permute.xlu0 %2476
      %2480 = vset.pattern.permute.xlu0 0
      %2481 = vperm.xlu0 %2480, %v2418
      %v2482 = vpop.permute.xlu0 %2481
      %2485 = vset.pattern.permute.xlu0 0
      %2486 = vperm.xlu0 %2485, %v2419
      %v2487 = vpop.permute.xlu0 %2486
      %2490 = vset.pattern.permute.xlu0 0
      %2491 = vperm.xlu0 %2490, %v2420
      %v2492 = vpop.permute.xlu0 %2491
      %2495 = vset.pattern.permute.xlu0 0
      %2496 = vperm.xlu0 %2495, %v2421
      %v2497 = vpop.permute.xlu0 %2496
      %2500 = vset.pattern.permute.xlu0 0
      %2501 = vperm.xlu0 %2500, %v2422
      %v2502 = vpop.permute.xlu0 %2501
      %v2505 = vlaneseq
      %v2506 = vshrl.u32 %v2505, 7
      %v2507 = vsub.s32 0, %v2506
      %v2508 = vrot.slane %v2423, %v2507
      %v2509 = vlaneseq
      %v2510 = vshrl.u32 %v2509, 7
      %v2511 = vsub.s32 1, %v2510
      %v2512 = vrot.slane %v2423, %v2511
      %v2515 = vmul.f32 %v2427, %v2508
      %v2516 = vmul.f32 %v2427, %v2512
      %v2517 = vmul.f32 %v2432, %v2508
      %v2518 = vmul.f32 %v2432, %v2512
      %v2519 = vmul.f32 %v2437, %v2508
      %v2520 = vmul.f32 %v2437, %v2512
      %v2521 = vmul.f32 %v2442, %v2508
      %v2522 = vmul.f32 %v2442, %v2512
      %v2523 = vmul.f32 %v2447, %v2508
      %v2524 = vmul.f32 %v2447, %v2512
      %v2525 = vmul.f32 %v2452, %v2508
      %v2526 = vmul.f32 %v2452, %v2512
      %v2527 = vmul.f32 %v2457, %v2508
      %v2528 = vmul.f32 %v2457, %v2512
      %v2529 = vmul.f32 %v2462, %v2508
      %v2530 = vmul.f32 %v2462, %v2512
      %v2531 = vmul.f32 %v2467, %v2508
      %v2532 = vmul.f32 %v2467, %v2512
      %v2533 = vmul.f32 %v2472, %v2508
      %v2534 = vmul.f32 %v2472, %v2512
      %v2535 = vmul.f32 %v2477, %v2508
      %v2536 = vmul.f32 %v2477, %v2512
      %v2537 = vmul.f32 %v2482, %v2508
      %v2538 = vmul.f32 %v2482, %v2512
      %v2539 = vmul.f32 %v2487, %v2508
      %v2540 = vmul.f32 %v2487, %v2512
      %v2541 = vmul.f32 %v2492, %v2508
      %v2542 = vmul.f32 %v2492, %v2512
      %v2543 = vmul.f32 %v2497, %v2508
      %v2544 = vmul.f32 %v2497, %v2512
      %v2545 = vmul.f32 %v2502, %v2508
      %v2546 = vmul.f32 %v2502, %v2512
      %s2547 = scalar_lea.vmem %s5, 1
      %v2548 = vld [vmem:[%s2547] ss:$2 sm:$0x3]
      %2549 = vset.pattern.permute.xlu0 1
      %2550 = vperm.xlu0 %2549, %v2407
      %v2551 = vpop.permute.xlu0 %2550
      %2553 = vset.pattern.permute.xlu0 1
      %2554 = vperm.xlu0 %2553, %v2408
      %v2555 = vpop.permute.xlu0 %2554
      %2557 = vset.pattern.permute.xlu0 1
      %2558 = vperm.xlu0 %2557, %v2409
      %v2559 = vpop.permute.xlu0 %2558
      %2561 = vset.pattern.permute.xlu0 1
      %2562 = vperm.xlu0 %2561, %v2410
      %v2563 = vpop.permute.xlu0 %2562
      %2565 = vset.pattern.permute.xlu0 1
      %2566 = vperm.xlu0 %2565, %v2411
      %v2567 = vpop.permute.xlu0 %2566
      %2569 = vset.pattern.permute.xlu0 1
      %2570 = vperm.xlu0 %2569, %v2412
      %v2571 = vpop.permute.xlu0 %2570
      %2573 = vset.pattern.permute.xlu0 1
      %2574 = vperm.xlu0 %2573, %v2413
      %v2575 = vpop.permute.xlu0 %2574
      %2577 = vset.pattern.permute.xlu0 1
      %2578 = vperm.xlu0 %2577, %v2414
      %v2579 = vpop.permute.xlu0 %2578
      %2581 = vset.pattern.permute.xlu0 1
      %2582 = vperm.xlu0 %2581, %v2415
      %v2583 = vpop.permute.xlu0 %2582
      %2585 = vset.pattern.permute.xlu0 1
      %2586 = vperm.xlu0 %2585, %v2416
      %v2587 = vpop.permute.xlu0 %2586
      %2589 = vset.pattern.permute.xlu0 1
      %2590 = vperm.xlu0 %2589, %v2417
      %v2591 = vpop.permute.xlu0 %2590
      %2593 = vset.pattern.permute.xlu0 1
      %2594 = vperm.xlu0 %2593, %v2418
      %v2595 = vpop.permute.xlu0 %2594
      %2597 = vset.pattern.permute.xlu0 1
      %2598 = vperm.xlu0 %2597, %v2419
      %v2599 = vpop.permute.xlu0 %2598
      %2601 = vset.pattern.permute.xlu0 1
      %2602 = vperm.xlu0 %2601, %v2420
      %v2603 = vpop.permute.xlu0 %2602
      %2605 = vset.pattern.permute.xlu0 1
      %2606 = vperm.xlu0 %2605, %v2421
      %v2607 = vpop.permute.xlu0 %2606
      %2609 = vset.pattern.permute.xlu0 1
      %2610 = vperm.xlu0 %2609, %v2422
      %v2611 = vpop.permute.xlu0 %2610
      %v2614 = vlaneseq
      %v2615 = vshrl.u32 %v2614, 7
      %v2616 = vsub.s32 0, %v2615
      %v2617 = vrot.slane %v2548, %v2616
      %v2618 = vlaneseq
      %v2619 = vshrl.u32 %v2618, 7
      %v2620 = vsub.s32 1, %v2619
      %v2621 = vrot.slane %v2548, %v2620
      %v2624 = vmul.f32 %v2551, %v2617
      %v2625 = vmul.f32 %v2551, %v2621
      %v2626 = vmul.f32 %v2555, %v2617
      %v2627 = vmul.f32 %v2555, %v2621
      %v2628 = vmul.f32 %v2559, %v2617
      %v2629 = vmul.f32 %v2559, %v2621
      %v2630 = vmul.f32 %v2563, %v2617
      %v2631 = vmul.f32 %v2563, %v2621
      %v2632 = vmul.f32 %v2567, %v2617
      %v2633 = vmul.f32 %v2567, %v2621
      %v2634 = vmul.f32 %v2571, %v2617
      %v2635 = vmul.f32 %v2571, %v2621
      %v2636 = vmul.f32 %v2575, %v2617
      %v2637 = vmul.f32 %v2575, %v2621
      %v2638 = vmul.f32 %v2579, %v2617
      %v2639 = vmul.f32 %v2579, %v2621
      %v2640 = vmul.f32 %v2583, %v2617
      %v2641 = vmul.f32 %v2583, %v2621
      %v2642 = vmul.f32 %v2587, %v2617
      %v2643 = vmul.f32 %v2587, %v2621
      %v2644 = vmul.f32 %v2591, %v2617
      %v2645 = vmul.f32 %v2591, %v2621
      %v2646 = vmul.f32 %v2595, %v2617
      %v2647 = vmul.f32 %v2595, %v2621
      %v2648 = vmul.f32 %v2599, %v2617
      %v2649 = vmul.f32 %v2599, %v2621
      %v2650 = vmul.f32 %v2603, %v2617
      %v2651 = vmul.f32 %v2603, %v2621
      %v2652 = vmul.f32 %v2607, %v2617
      %v2653 = vmul.f32 %v2607, %v2621
      %v2654 = vmul.f32 %v2611, %v2617
      %v2655 = vmul.f32 %v2611, %v2621
      %v2656 = vadd.f32 %v2515, %v2624
      %v2657 = vadd.f32 %v2516, %v2625
      %v2658 = vadd.f32 %v2517, %v2626
      %v2659 = vadd.f32 %v2518, %v2627
      %v2660 = vadd.f32 %v2519, %v2628
      %v2661 = vadd.f32 %v2520, %v2629
      %v2662 = vadd.f32 %v2521, %v2630
      %v2663 = vadd.f32 %v2522, %v2631
      %v2664 = vadd.f32 %v2523, %v2632
      %v2665 = vadd.f32 %v2524, %v2633
      %v2666 = vadd.f32 %v2525, %v2634
      %v2667 = vadd.f32 %v2526, %v2635
      %v2668 = vadd.f32 %v2527, %v2636
      %v2669 = vadd.f32 %v2528, %v2637
      %v2670 = vadd.f32 %v2529, %v2638
      %v2671 = vadd.f32 %v2530, %v2639
      %v2672 = vadd.f32 %v2531, %v2640
      %v2673 = vadd.f32 %v2532, %v2641
      %v2674 = vadd.f32 %v2533, %v2642
      %v2675 = vadd.f32 %v2534, %v2643
      %v2676 = vadd.f32 %v2535, %v2644
      %v2677 = vadd.f32 %v2536, %v2645
      %v2678 = vadd.f32 %v2537, %v2646
      %v2679 = vadd.f32 %v2538, %v2647
      %v2680 = vadd.f32 %v2539, %v2648
      %v2681 = vadd.f32 %v2540, %v2649
      %v2682 = vadd.f32 %v2541, %v2650
      %v2683 = vadd.f32 %v2542, %v2651
      %v2684 = vadd.f32 %v2543, %v2652
      %v2685 = vadd.f32 %v2544, %v2653
      %v2686 = vadd.f32 %v2545, %v2654
      %v2687 = vadd.f32 %v2546, %v2655
      %v2688 = vld [vmem:[%s6] sm:$0x3]
      %v2690 = vlaneseq
      %v2691 = vshrl.u32 %v2690, 7
      %v2692 = vsub.s32 0, %v2691
      %v2693 = vrot.slane %v2688, %v2692
      %v2694 = vlaneseq
      %v2695 = vshrl.u32 %v2694, 7
      %v2696 = vsub.s32 1, %v2695
      %v2697 = vrot.slane %v2688, %v2696
      %v2700 = vadd.f32 %v2656, %v2693
      %v2701 = vadd.f32 %v2657, %v2697
      %v2702 = vadd.f32 %v2658, %v2693
      %v2703 = vadd.f32 %v2659, %v2697
      %v2704 = vadd.f32 %v2660, %v2693
      %v2705 = vadd.f32 %v2661, %v2697
      %v2706 = vadd.f32 %v2662, %v2693
      %v2707 = vadd.f32 %v2663, %v2697
      %v2708 = vadd.f32 %v2664, %v2693
      %v2709 = vadd.f32 %v2665, %v2697
      %v2710 = vadd.f32 %v2666, %v2693
      %v2711 = vadd.f32 %v2667, %v2697
      %v2712 = vadd.f32 %v2668, %v2693
      %v2713 = vadd.f32 %v2669, %v2697
      %v2714 = vadd.f32 %v2670, %v2693
      %v2715 = vadd.f32 %v2671, %v2697
      %v2716 = vadd.f32 %v2672, %v2693
      %v2717 = vadd.f32 %v2673, %v2697
      %v2718 = vadd.f32 %v2674, %v2693
      %v2719 = vadd.f32 %v2675, %v2697
      %v2720 = vadd.f32 %v2676, %v2693
      %v2721 = vadd.f32 %v2677, %v2697
      %v2722 = vadd.f32 %v2678, %v2693
      %v2723 = vadd.f32 %v2679, %v2697
      %v2724 = vadd.f32 %v2680, %v2693
      %v2725 = vadd.f32 %v2681, %v2697
      %v2726 = vadd.f32 %v2682, %v2693
      %v2727 = vadd.f32 %v2683, %v2697
      %v2728 = vadd.f32 %v2684, %v2693
      %v2729 = vadd.f32 %v2685, %v2697
      %v2730 = vadd.f32 %v2686, %v2693
      %v2731 = vadd.f32 %v2687, %v2697
      %v2732 = vmax.f32 %v2700, 0.0
      %v2733 = vmax.f32 %v2701, 0.0
      %v2734 = vmax.f32 %v2702, 0.0
      %v2735 = vmax.f32 %v2703, 0.0
      %v2736 = vmax.f32 %v2704, 0.0
      %v2737 = vmax.f32 %v2705, 0.0
      %v2738 = vmax.f32 %v2706, 0.0
      %v2739 = vmax.f32 %v2707, 0.0
      %v2740 = vmax.f32 %v2708, 0.0
      %v2741 = vmax.f32 %v2709, 0.0
      %v2742 = vmax.f32 %v2710, 0.0
      %v2743 = vmax.f32 %v2711, 0.0
      %v2744 = vmax.f32 %v2712, 0.0
      %v2745 = vmax.f32 %v2713, 0.0
      %v2746 = vmax.f32 %v2714, 0.0
      %v2747 = vmax.f32 %v2715, 0.0
      %v2748 = vmax.f32 %v2716, 0.0
      %v2749 = vmax.f32 %v2717, 0.0
      %v2750 = vmax.f32 %v2718, 0.0
      %v2751 = vmax.f32 %v2719, 0.0
      %v2752 = vmax.f32 %v2720, 0.0
      %v2753 = vmax.f32 %v2721, 0.0
      %v2754 = vmax.f32 %v2722, 0.0
      %v2755 = vmax.f32 %v2723, 0.0
      %v2756 = vmax.f32 %v2724, 0.0
      %v2757 = vmax.f32 %v2725, 0.0
      %v2758 = vmax.f32 %v2726, 0.0
      %v2759 = vmax.f32 %v2727, 0.0
      %v2760 = vmax.f32 %v2728, 0.0
      %v2761 = vmax.f32 %v2729, 0.0
      %v2762 = vmax.f32 %v2730, 0.0
      %v2763 = vmax.f32 %v2731, 0.0
      %v2764 = vpack.c.bf16 %v2734, %v2732
      %v2765 = vpack.c.bf16 %v2735, %v2733
      %v2766 = vpack.c.bf16 %v2738, %v2736
      %v2767 = vpack.c.bf16 %v2739, %v2737
      %v2768 = vpack.c.bf16 %v2742, %v2740
      %v2769 = vpack.c.bf16 %v2743, %v2741
      %v2770 = vpack.c.bf16 %v2746, %v2744
      %v2771 = vpack.c.bf16 %v2747, %v2745
      %v2772 = vpack.c.bf16 %v2750, %v2748
      %v2773 = vpack.c.bf16 %v2751, %v2749
      %v2774 = vpack.c.bf16 %v2754, %v2752
      %v2775 = vpack.c.bf16 %v2755, %v2753
      %v2776 = vpack.c.bf16 %v2758, %v2756
      %v2777 = vpack.c.bf16 %v2759, %v2757
      %v2778 = vpack.c.bf16 %v2762, %v2760
      %v2779 = vpack.c.bf16 %v2763, %v2761
      %v2780 = vld [vmem:[%s7] sm:$0xff]
      %v2781 = vld [vmem:[%s7 + $0x8] sm:$0xff]
      %v2782 = vld [vmem:[%s7 + $0x10] sm:$0xff]
      %v2783 = vld [vmem:[%s7 + $0x18] sm:$0xff]
      %v2784 = vld [vmem:[%s7 + $0x20] sm:$0xff]
      %v2785 = vld [vmem:[%s7 + $0x28] sm:$0xff]
      %v2786 = vld [vmem:[%s7 + $0x30] sm:$0xff]
      %v2787 = vld [vmem:[%s7 + $0x38] sm:$0xff]
      %v2788 = vld [vmem:[%s7 + $0x40] sm:$0xff]
      %v2789 = vld [vmem:[%s7 + $0x48] sm:$0xff]
      %v2790 = vld [vmem:[%s7 + $0x50] sm:$0xff]
      %v2791 = vld [vmem:[%s7 + $0x58] sm:$0xff]
      %v2792 = vld [vmem:[%s7 + $0x60] sm:$0xff]
      %v2793 = vld [vmem:[%s7 + $0x68] sm:$0xff]
      %v2794 = vld [vmem:[%s7 + $0x70] sm:$0xff]
      %v2795 = vld [vmem:[%s7 + $0x78] sm:$0xff]
      %v2796 = vld [vmem:[%s7 + $0x80] sm:$0xff]
      %v2797 = vld [vmem:[%s7 + $0x88] sm:$0xff]
      %v2798 = vld [vmem:[%s7 + $0x90] sm:$0xff]
      %v2799 = vld [vmem:[%s7 + $0x98] sm:$0xff]
      %v2800 = vld [vmem:[%s7 + $0xa0] sm:$0xff]
      %v2801 = vld [vmem:[%s7 + $0xa8] sm:$0xff]
      %v2802 = vld [vmem:[%s7 + $0xb0] sm:$0xff]
      %v2803 = vld [vmem:[%s7 + $0xb8] sm:$0xff]
      %v2804 = vld [vmem:[%s7 + $0xc0] sm:$0xff]
      %v2805 = vld [vmem:[%s7 + $0xc8] sm:$0xff]
      %v2806 = vld [vmem:[%s7 + $0xd0] sm:$0xff]
      %v2807 = vld [vmem:[%s7 + $0xd8] sm:$0xff]
      %v2808 = vld [vmem:[%s7 + $0xe0] sm:$0xff]
      %v2809 = vld [vmem:[%s7 + $0xe8] sm:$0xff]
      %v2810 = vld [vmem:[%s7 + $0xf0] sm:$0xff]
      %v2811 = vld [vmem:[%s7 + $0xf8] sm:$0xff]
      %v2812 = vld [vmem:[%s7 + $0x100] sm:$0xff]
      %v2813 = vld [vmem:[%s7 + $0x108] sm:$0xff]
      %v2814 = vld [vmem:[%s7 + $0x110] sm:$0xff]
      %v2815 = vld [vmem:[%s7 + $0x118] sm:$0xff]
      %v2816 = vld [vmem:[%s7 + $0x120] sm:$0xff]
      %v2817 = vld [vmem:[%s7 + $0x128] sm:$0xff]
      %v2818 = vld [vmem:[%s7 + $0x130] sm:$0xff]
      %v2819 = vld [vmem:[%s7 + $0x138] sm:$0xff]
      %v2820 = vld [vmem:[%s7 + $0x140] sm:$0xff]
      %v2821 = vld [vmem:[%s7 + $0x148] sm:$0xff]
      %v2822 = vld [vmem:[%s7 + $0x150] sm:$0xff]
      %v2823 = vld [vmem:[%s7 + $0x158] sm:$0xff]
      %v2824 = vld [vmem:[%s7 + $0x160] sm:$0xff]
      %v2825 = vld [vmem:[%s7 + $0x168] sm:$0xff]
      %v2826 = vld [vmem:[%s7 + $0x170] sm:$0xff]
      %v2827 = vld [vmem:[%s7 + $0x178] sm:$0xff]
      %v2828 = vld [vmem:[%s7 + $0x180] sm:$0xff]
      %v2829 = vld [vmem:[%s7 + $0x188] sm:$0xff]
      %v2830 = vld [vmem:[%s7 + $0x190] sm:$0xff]
      %v2831 = vld [vmem:[%s7 + $0x198] sm:$0xff]
      %v2832 = vld [vmem:[%s7 + $0x1a0] sm:$0xff]
      %v2833 = vld [vmem:[%s7 + $0x1a8] sm:$0xff]
      %v2834 = vld [vmem:[%s7 + $0x1b0] sm:$0xff]
      %v2835 = vld [vmem:[%s7 + $0x1b8] sm:$0xff]
      %v2836 = vld [vmem:[%s7 + $0x1c0] sm:$0xff]
      %v2837 = vld [vmem:[%s7 + $0x1c8] sm:$0xff]
      %v2838 = vld [vmem:[%s7 + $0x1d0] sm:$0xff]
      %v2839 = vld [vmem:[%s7 + $0x1d8] sm:$0xff]
      %v2840 = vld [vmem:[%s7 + $0x1e0] sm:$0xff]
      %v2841 = vld [vmem:[%s7 + $0x1e8] sm:$0xff]
      %v2842 = vld [vmem:[%s7 + $0x1f0] sm:$0xff]
      %v2843 = vld [vmem:[%s7 + $0x1f8] sm:$0xff]
      %v2844 = vld [vmem:[%s7 + $0x200] sm:$0xff]
      %v2845 = vld [vmem:[%s7 + $0x208] sm:$0xff]
      %v2846 = vld [vmem:[%s7 + $0x210] sm:$0xff]
      %v2847 = vld [vmem:[%s7 + $0x218] sm:$0xff]
      %v2848 = vld [vmem:[%s7 + $0x220] sm:$0xff]
      %v2849 = vld [vmem:[%s7 + $0x228] sm:$0xff]
      %v2850 = vld [vmem:[%s7 + $0x230] sm:$0xff]
      %v2851 = vld [vmem:[%s7 + $0x238] sm:$0xff]
      %v2852 = vld [vmem:[%s7 + $0x240] sm:$0xff]
      %v2853 = vld [vmem:[%s7 + $0x248] sm:$0xff]
      %v2854 = vld [vmem:[%s7 + $0x250] sm:$0xff]
      %v2855 = vld [vmem:[%s7 + $0x258] sm:$0xff]
      %v2856 = vld [vmem:[%s7 + $0x260] sm:$0xff]
      %v2857 = vld [vmem:[%s7 + $0x268] sm:$0xff]
      %v2858 = vld [vmem:[%s7 + $0x270] sm:$0xff]
      %v2859 = vld [vmem:[%s7 + $0x278] sm:$0xff]
      %v2860 = vld [vmem:[%s7 + $0x280] sm:$0xff]
      %v2861 = vld [vmem:[%s7 + $0x288] sm:$0xff]
      %v2862 = vld [vmem:[%s7 + $0x290] sm:$0xff]
      %v2863 = vld [vmem:[%s7 + $0x298] sm:$0xff]
      %v2864 = vld [vmem:[%s7 + $0x2a0] sm:$0xff]
      %v2865 = vld [vmem:[%s7 + $0x2a8] sm:$0xff]
      %v2866 = vld [vmem:[%s7 + $0x2b0] sm:$0xff]
      %v2867 = vld [vmem:[%s7 + $0x2b8] sm:$0xff]
      %v2868 = vld [vmem:[%s7 + $0x2c0] sm:$0xff]
      %v2869 = vld [vmem:[%s7 + $0x2c8] sm:$0xff]
      %v2870 = vld [vmem:[%s7 + $0x2d0] sm:$0xff]
      %v2871 = vld [vmem:[%s7 + $0x2d8] sm:$0xff]
      %v2872 = vld [vmem:[%s7 + $0x2e0] sm:$0xff]
      %v2873 = vld [vmem:[%s7 + $0x2e8] sm:$0xff]
      %v2874 = vld [vmem:[%s7 + $0x2f0] sm:$0xff]
      %v2875 = vld [vmem:[%s7 + $0x2f8] sm:$0xff]
      %v2876 = vld [vmem:[%s7 + $0x300] sm:$0xff]
      %v2877 = vld [vmem:[%s7 + $0x308] sm:$0xff]
      %v2878 = vld [vmem:[%s7 + $0x310] sm:$0xff]
      %v2879 = vld [vmem:[%s7 + $0x318] sm:$0xff]
      %v2880 = vld [vmem:[%s7 + $0x320] sm:$0xff]
      %v2881 = vld [vmem:[%s7 + $0x328] sm:$0xff]
      %v2882 = vld [vmem:[%s7 + $0x330] sm:$0xff]
      %v2883 = vld [vmem:[%s7 + $0x338] sm:$0xff]
      %v2884 = vld [vmem:[%s7 + $0x340] sm:$0xff]
      %v2885 = vld [vmem:[%s7 + $0x348] sm:$0xff]
      %v2886 = vld [vmem:[%s7 + $0x350] sm:$0xff]
      %v2887 = vld [vmem:[%s7 + $0x358] sm:$0xff]
      %v2888 = vld [vmem:[%s7 + $0x360] sm:$0xff]
      %v2889 = vld [vmem:[%s7 + $0x368] sm:$0xff]
      %v2890 = vld [vmem:[%s7 + $0x370] sm:$0xff]
      %v2891 = vld [vmem:[%s7 + $0x378] sm:$0xff]
      %v2892 = vld [vmem:[%s7 + $0x380] sm:$0xff]
      %v2893 = vld [vmem:[%s7 + $0x388] sm:$0xff]
      %v2894 = vld [vmem:[%s7 + $0x390] sm:$0xff]
      %v2895 = vld [vmem:[%s7 + $0x398] sm:$0xff]
      %v2896 = vld [vmem:[%s7 + $0x3a0] sm:$0xff]
      %v2897 = vld [vmem:[%s7 + $0x3a8] sm:$0xff]
      %v2898 = vld [vmem:[%s7 + $0x3b0] sm:$0xff]
      %v2899 = vld [vmem:[%s7 + $0x3b8] sm:$0xff]
      %v2900 = vld [vmem:[%s7 + $0x3c0] sm:$0xff]
      %v2901 = vld [vmem:[%s7 + $0x3c8] sm:$0xff]
      %v2902 = vld [vmem:[%s7 + $0x3d0] sm:$0xff]
      %v2903 = vld [vmem:[%s7 + $0x3d8] sm:$0xff]
      %v2904 = vld [vmem:[%s7 + $0x3e0] sm:$0xff]
      %v2905 = vld [vmem:[%s7 + $0x3e8] sm:$0xff]
      %v2906 = vld [vmem:[%s7 + $0x3f0] sm:$0xff]
      %v2907 = vld [vmem:[%s7 + $0x3f8] sm:$0xff]
      %v2908 = vld [vmem:[%s8] sm:$0xff]
      %v2910 = vlaneseq
      %v2911 = vshrl.u32 %v2910, 7
      %v2912 = vsub.s32 0, %v2911
      %v2913 = vrot.slane %v2908, %v2912
      %v2914 = vlaneseq
      %v2915 = vshrl.u32 %v2914, 7
      %v2916 = vsub.s32 1, %v2915
      %v2917 = vrot.slane %v2908, %v2916
      %v2918 = vlaneseq
      %v2919 = vshrl.u32 %v2918, 7
      %v2920 = vsub.s32 2, %v2919
      %v2921 = vrot.slane %v2908, %v2920
      %v2922 = vlaneseq
      %v2923 = vshrl.u32 %v2922, 7
      %v2924 = vsub.s32 3, %v2923
      %v2925 = vrot.slane %v2908, %v2924
      %v2926 = vlaneseq
      %v2927 = vshrl.u32 %v2926, 7
      %v2928 = vsub.s32 4, %v2927
      %v2929 = vrot.slane %v2908, %v2928
      %v2930 = vlaneseq
      %v2931 = vshrl.u32 %v2930, 7
      %v2932 = vsub.s32 5, %v2931
      %v2933 = vrot.slane %v2908, %v2932
      %v2934 = vlaneseq
      %v2935 = vshrl.u32 %v2934, 7
      %v2936 = vsub.s32 6, %v2935
      %v2937 = vrot.slane %v2908, %v2936
      %v2938 = vlaneseq
      %v2939 = vshrl.u32 %v2938, 7
      %v2940 = vsub.s32 7, %v2939
      %v2941 = vrot.slane %v2908, %v2940
      %v3078 = vunpack.c.l.b16 %v2780
      %v3079 = vunpack.c.h.b16 %v2780
      %v3080 = vunpack.c.l.b16 %v2781
      %v3081 = vunpack.c.h.b16 %v2781
      %v3082 = vunpack.c.l.b16 %v2782
      %v3083 = vunpack.c.h.b16 %v2782
      %v3084 = vunpack.c.l.b16 %v2783
      %v3085 = vunpack.c.h.b16 %v2783
      %v3086 = vunpack.c.l.b16 %v2784
      %v3087 = vunpack.c.h.b16 %v2784
      %v3088 = vunpack.c.l.b16 %v2785
      %v3089 = vunpack.c.h.b16 %v2785
      %v3090 = vunpack.c.l.b16 %v2786
      %v3091 = vunpack.c.h.b16 %v2786
      %v3092 = vunpack.c.l.b16 %v2787
      %v3093 = vunpack.c.h.b16 %v2787
      %v3094 = vunpack.c.l.b16 %v2788
      %v3095 = vunpack.c.h.b16 %v2788
      %v3096 = vunpack.c.l.b16 %v2789
      %v3097 = vunpack.c.h.b16 %v2789
      %v3098 = vunpack.c.l.b16 %v2790
      %v3099 = vunpack.c.h.b16 %v2790
      %v3100 = vunpack.c.l.b16 %v2791
      %v3101 = vunpack.c.h.b16 %v2791
      %v3102 = vunpack.c.l.b16 %v2792
      %v3103 = vunpack.c.h.b16 %v2792
      %v3104 = vunpack.c.l.b16 %v2793
      %v3105 = vunpack.c.h.b16 %v2793
      %v3106 = vunpack.c.l.b16 %v2794
      %v3107 = vunpack.c.h.b16 %v2794
      %v3108 = vunpack.c.l.b16 %v2795
      %v3109 = vunpack.c.h.b16 %v2795
      %v3110 = vunpack.c.l.b16 %v2796
      %v3111 = vunpack.c.h.b16 %v2796
      %v3112 = vunpack.c.l.b16 %v2797
      %v3113 = vunpack.c.h.b16 %v2797
      %v3114 = vunpack.c.l.b16 %v2798
      %v3115 = vunpack.c.h.b16 %v2798
      %v3116 = vunpack.c.l.b16 %v2799
      %v3117 = vunpack.c.h.b16 %v2799
      %v3118 = vunpack.c.l.b16 %v2800
      %v3119 = vunpack.c.h.b16 %v2800
      %v3120 = vunpack.c.l.b16 %v2801
      %v3121 = vunpack.c.h.b16 %v2801
      %v3122 = vunpack.c.l.b16 %v2802
      %v3123 = vunpack.c.h.b16 %v2802
      %v3124 = vunpack.c.l.b16 %v2803
      %v3125 = vunpack.c.h.b16 %v2803
      %v3126 = vunpack.c.l.b16 %v2804
      %v3127 = vunpack.c.h.b16 %v2804
      %v3128 = vunpack.c.l.b16 %v2805
      %v3129 = vunpack.c.h.b16 %v2805
      %v3130 = vunpack.c.l.b16 %v2806
      %v3131 = vunpack.c.h.b16 %v2806
      %v3132 = vunpack.c.l.b16 %v2807
      %v3133 = vunpack.c.h.b16 %v2807
      %v3134 = vunpack.c.l.b16 %v2808
      %v3135 = vunpack.c.h.b16 %v2808
      %v3136 = vunpack.c.l.b16 %v2809
      %v3137 = vunpack.c.h.b16 %v2809
      %v3138 = vunpack.c.l.b16 %v2810
      %v3139 = vunpack.c.h.b16 %v2810
      %v3140 = vunpack.c.l.b16 %v2811
      %v3141 = vunpack.c.h.b16 %v2811
      %v3142 = vunpack.c.l.b16 %v2812
      %v3143 = vunpack.c.h.b16 %v2812
      %v3144 = vunpack.c.l.b16 %v2813
      %v3145 = vunpack.c.h.b16 %v2813
      %v3146 = vunpack.c.l.b16 %v2814
      %v3147 = vunpack.c.h.b16 %v2814
      %v3148 = vunpack.c.l.b16 %v2815
      %v3149 = vunpack.c.h.b16 %v2815
      %v3150 = vunpack.c.l.b16 %v2816
      %v3151 = vunpack.c.h.b16 %v2816
      %v3152 = vunpack.c.l.b16 %v2817
      %v3153 = vunpack.c.h.b16 %v2817
      %v3154 = vunpack.c.l.b16 %v2818
      %v3155 = vunpack.c.h.b16 %v2818
      %v3156 = vunpack.c.l.b16 %v2819
      %v3157 = vunpack.c.h.b16 %v2819
      %v3158 = vunpack.c.l.b16 %v2820
      %v3159 = vunpack.c.h.b16 %v2820
      %v3160 = vunpack.c.l.b16 %v2821
      %v3161 = vunpack.c.h.b16 %v2821
      %v3162 = vunpack.c.l.b16 %v2822
      %v3163 = vunpack.c.h.b16 %v2822
      %v3164 = vunpack.c.l.b16 %v2823
      %v3165 = vunpack.c.h.b16 %v2823
      %v3166 = vunpack.c.l.b16 %v2824
      %v3167 = vunpack.c.h.b16 %v2824
      %v3168 = vunpack.c.l.b16 %v2825
      %v3169 = vunpack.c.h.b16 %v2825
      %v3170 = vunpack.c.l.b16 %v2826
      %v3171 = vunpack.c.h.b16 %v2826
      %v3172 = vunpack.c.l.b16 %v2827
      %v3173 = vunpack.c.h.b16 %v2827
      %v3174 = vunpack.c.l.b16 %v2828
      %v3175 = vunpack.c.h.b16 %v2828
      %v3176 = vunpack.c.l.b16 %v2829
      %v3177 = vunpack.c.h.b16 %v2829
      %v3178 = vunpack.c.l.b16 %v2830
      %v3179 = vunpack.c.h.b16 %v2830
      %v3180 = vunpack.c.l.b16 %v2831
      %v3181 = vunpack.c.h.b16 %v2831
      %v3182 = vunpack.c.l.b16 %v2832
      %v3183 = vunpack.c.h.b16 %v2832
      %v3184 = vunpack.c.l.b16 %v2833
      %v3185 = vunpack.c.h.b16 %v2833
      %v3186 = vunpack.c.l.b16 %v2834
      %v3187 = vunpack.c.h.b16 %v2834
      %v3188 = vunpack.c.l.b16 %v2835
      %v3189 = vunpack.c.h.b16 %v2835
      %v3190 = vunpack.c.l.b16 %v2836
      %v3191 = vunpack.c.h.b16 %v2836
      %v3192 = vunpack.c.l.b16 %v2837
      %v3193 = vunpack.c.h.b16 %v2837
      %v3194 = vunpack.c.l.b16 %v2838
      %v3195 = vunpack.c.h.b16 %v2838
      %v3196 = vunpack.c.l.b16 %v2839
      %v3197 = vunpack.c.h.b16 %v2839
      %v3198 = vunpack.c.l.b16 %v2840
      %v3199 = vunpack.c.h.b16 %v2840
      %v3200 = vunpack.c.l.b16 %v2841
      %v3201 = vunpack.c.h.b16 %v2841
      %v3202 = vunpack.c.l.b16 %v2842
      %v3203 = vunpack.c.h.b16 %v2842
      %v3204 = vunpack.c.l.b16 %v2843
      %v3205 = vunpack.c.h.b16 %v2843
      %v3206 = vunpack.c.l.b16 %v2844
      %v3207 = vunpack.c.h.b16 %v2844
      %v3208 = vunpack.c.l.b16 %v2845
      %v3209 = vunpack.c.h.b16 %v2845
      %v3210 = vunpack.c.l.b16 %v2846
      %v3211 = vunpack.c.h.b16 %v2846
      %v3212 = vunpack.c.l.b16 %v2847
      %v3213 = vunpack.c.h.b16 %v2847
      %v3214 = vunpack.c.l.b16 %v2848
      %v3215 = vunpack.c.h.b16 %v2848
      %v3216 = vunpack.c.l.b16 %v2849
      %v3217 = vunpack.c.h.b16 %v2849
      %v3218 = vunpack.c.l.b16 %v2850
      %v3219 = vunpack.c.h.b16 %v2850
      %v3220 = vunpack.c.l.b16 %v2851
      %v3221 = vunpack.c.h.b16 %v2851
      %v3222 = vunpack.c.l.b16 %v2852
      %v3223 = vunpack.c.h.b16 %v2852
      %v3224 = vunpack.c.l.b16 %v2853
      %v3225 = vunpack.c.h.b16 %v2853
      %v3226 = vunpack.c.l.b16 %v2854
      %v3227 = vunpack.c.h.b16 %v2854
      %v3228 = vunpack.c.l.b16 %v2855
      %v3229 = vunpack.c.h.b16 %v2855
      %v3230 = vunpack.c.l.b16 %v2856
      %v3231 = vunpack.c.h.b16 %v2856
      %v3232 = vunpack.c.l.b16 %v2857
      %v3233 = vunpack.c.h.b16 %v2857
      %v3234 = vunpack.c.l.b16 %v2858
      %v3235 = vunpack.c.h.b16 %v2858
      %v3236 = vunpack.c.l.b16 %v2859
      %v3237 = vunpack.c.h.b16 %v2859
      %v3238 = vunpack.c.l.b16 %v2860
      %v3239 = vunpack.c.h.b16 %v2860
      %v3240 = vunpack.c.l.b16 %v2861
      %v3241 = vunpack.c.h.b16 %v2861
      %v3242 = vunpack.c.l.b16 %v2862
      %v3243 = vunpack.c.h.b16 %v2862
      %v3244 = vunpack.c.l.b16 %v2863
      %v3245 = vunpack.c.h.b16 %v2863
      %v3246 = vunpack.c.l.b16 %v2864
      %v3247 = vunpack.c.h.b16 %v2864
      %v3248 = vunpack.c.l.b16 %v2865
      %v3249 = vunpack.c.h.b16 %v2865
      %v3250 = vunpack.c.l.b16 %v2866
      %v3251 = vunpack.c.h.b16 %v2866
      %v3252 = vunpack.c.l.b16 %v2867
      %v3253 = vunpack.c.h.b16 %v2867
      %v3254 = vunpack.c.l.b16 %v2868
      %v3255 = vunpack.c.h.b16 %v2868
      %v3256 = vunpack.c.l.b16 %v2869
      %v3257 = vunpack.c.h.b16 %v2869
      %v3258 = vunpack.c.l.b16 %v2870
      %v3259 = vunpack.c.h.b16 %v2870
      %v3260 = vunpack.c.l.b16 %v2871
      %v3261 = vunpack.c.h.b16 %v2871
      %v3262 = vunpack.c.l.b16 %v2872
      %v3263 = vunpack.c.h.b16 %v2872
      %v3264 = vunpack.c.l.b16 %v2873
      %v3265 = vunpack.c.h.b16 %v2873
      %v3266 = vunpack.c.l.b16 %v2874
      %v3267 = vunpack.c.h.b16 %v2874
      %v3268 = vunpack.c.l.b16 %v2875
      %v3269 = vunpack.c.h.b16 %v2875
      %v3270 = vunpack.c.l.b16 %v2876
      %v3271 = vunpack.c.h.b16 %v2876
      %v3272 = vunpack.c.l.b16 %v2877
      %v3273 = vunpack.c.h.b16 %v2877
      %v3274 = vunpack.c.l.b16 %v2878
      %v3275 = vunpack.c.h.b16 %v2878
      %v3276 = vunpack.c.l.b16 %v2879
      %v3277 = vunpack.c.h.b16 %v2879
      %v3278 = vunpack.c.l.b16 %v2880
      %v3279 = vunpack.c.h.b16 %v2880
      %v3280 = vunpack.c.l.b16 %v2881
      %v3281 = vunpack.c.h.b16 %v2881
      %v3282 = vunpack.c.l.b16 %v2882
      %v3283 = vunpack.c.h.b16 %v2882
      %v3284 = vunpack.c.l.b16 %v2883
      %v3285 = vunpack.c.h.b16 %v2883
      %v3286 = vunpack.c.l.b16 %v2884
      %v3287 = vunpack.c.h.b16 %v2884
      %v3288 = vunpack.c.l.b16 %v2885
      %v3289 = vunpack.c.h.b16 %v2885
      %v3290 = vunpack.c.l.b16 %v2886
      %v3291 = vunpack.c.h.b16 %v2886
      %v3292 = vunpack.c.l.b16 %v2887
      %v3293 = vunpack.c.h.b16 %v2887
      %v3294 = vunpack.c.l.b16 %v2888
      %v3295 = vunpack.c.h.b16 %v2888
      %v3296 = vunpack.c.l.b16 %v2889
      %v3297 = vunpack.c.h.b16 %v2889
      %v3298 = vunpack.c.l.b16 %v2890
      %v3299 = vunpack.c.h.b16 %v2890
      %v3300 = vunpack.c.l.b16 %v2891
      %v3301 = vunpack.c.h.b16 %v2891
      %v3302 = vunpack.c.l.b16 %v2892
      %v3303 = vunpack.c.h.b16 %v2892
      %v3304 = vunpack.c.l.b16 %v2893
      %v3305 = vunpack.c.h.b16 %v2893
      %v3306 = vunpack.c.l.b16 %v2894
      %v3307 = vunpack.c.h.b16 %v2894
      %v3308 = vunpack.c.l.b16 %v2895
      %v3309 = vunpack.c.h.b16 %v2895
      %v3310 = vunpack.c.l.b16 %v2896
      %v3311 = vunpack.c.h.b16 %v2896
      %v3312 = vunpack.c.l.b16 %v2897
      %v3313 = vunpack.c.h.b16 %v2897
      %v3314 = vunpack.c.l.b16 %v2898
      %v3315 = vunpack.c.h.b16 %v2898
      %v3316 = vunpack.c.l.b16 %v2899
      %v3317 = vunpack.c.h.b16 %v2899
      %v3318 = vunpack.c.l.b16 %v2900
      %v3319 = vunpack.c.h.b16 %v2900
      %v3320 = vunpack.c.l.b16 %v2901
      %v3321 = vunpack.c.h.b16 %v2901
      %v3322 = vunpack.c.l.b16 %v2902
      %v3323 = vunpack.c.h.b16 %v2902
      %v3324 = vunpack.c.l.b16 %v2903
      %v3325 = vunpack.c.h.b16 %v2903
      %v3326 = vunpack.c.l.b16 %v2904
      %v3327 = vunpack.c.h.b16 %v2904
      %v3328 = vunpack.c.l.b16 %v2905
      %v3329 = vunpack.c.h.b16 %v2905
      %v3330 = vunpack.c.l.b16 %v2906
      %v3331 = vunpack.c.h.b16 %v2906
      %v3332 = vunpack.c.l.b16 %v2907
      %v3333 = vunpack.c.h.b16 %v2907
      %v3334 = vpack.c.b16 %v3086, %v3078
      %v3335 = vpack.c.b16 %v3087, %v3079
      %v3336 = vpack.c.b16 %v3088, %v3080
      %v3337 = vpack.c.b16 %v3089, %v3081
      %v3338 = vpack.c.b16 %v3090, %v3082
      %v3339 = vpack.c.b16 %v3091, %v3083
      %v3340 = vpack.c.b16 %v3092, %v3084
      %v3341 = vpack.c.b16 %v3093, %v3085
      %v3342 = vpack.c.b16 %v3102, %v3094
      %v3343 = vpack.c.b16 %v3103, %v3095
      %v3344 = vpack.c.b16 %v3104, %v3096
      %v3345 = vpack.c.b16 %v3105, %v3097
      %v3346 = vpack.c.b16 %v3106, %v3098
      %v3347 = vpack.c.b16 %v3107, %v3099
      %v3348 = vpack.c.b16 %v3108, %v3100
      %v3349 = vpack.c.b16 %v3109, %v3101
      %v3350 = vpack.c.b16 %v3118, %v3110
      %v3351 = vpack.c.b16 %v3119, %v3111
      %v3352 = vpack.c.b16 %v3120, %v3112
      %v3353 = vpack.c.b16 %v3121, %v3113
      %v3354 = vpack.c.b16 %v3122, %v3114
      %v3355 = vpack.c.b16 %v3123, %v3115
      %v3356 = vpack.c.b16 %v3124, %v3116
      %v3357 = vpack.c.b16 %v3125, %v3117
      %v3358 = vpack.c.b16 %v3134, %v3126
      %v3359 = vpack.c.b16 %v3135, %v3127
      %v3360 = vpack.c.b16 %v3136, %v3128
      %v3361 = vpack.c.b16 %v3137, %v3129
      %v3362 = vpack.c.b16 %v3138, %v3130
      %v3363 = vpack.c.b16 %v3139, %v3131
      %v3364 = vpack.c.b16 %v3140, %v3132
      %v3365 = vpack.c.b16 %v3141, %v3133
      %v3366 = vpack.c.b16 %v3150, %v3142
      %v3367 = vpack.c.b16 %v3151, %v3143
      %v3368 = vpack.c.b16 %v3152, %v3144
      %v3369 = vpack.c.b16 %v3153, %v3145
      %v3370 = vpack.c.b16 %v3154, %v3146
      %v3371 = vpack.c.b16 %v3155, %v3147
      %v3372 = vpack.c.b16 %v3156, %v3148
      %v3373 = vpack.c.b16 %v3157, %v3149
      %v3374 = vpack.c.b16 %v3166, %v3158
      %v3375 = vpack.c.b16 %v3167, %v3159
      %v3376 = vpack.c.b16 %v3168, %v3160
      %v3377 = vpack.c.b16 %v3169, %v3161
      %v3378 = vpack.c.b16 %v3170, %v3162
      %v3379 = vpack.c.b16 %v3171, %v3163
      %v3380 = vpack.c.b16 %v3172, %v3164
      %v3381 = vpack.c.b16 %v3173, %v3165
      %v3382 = vpack.c.b16 %v3182, %v3174
      %v3383 = vpack.c.b16 %v3183, %v3175
      %v3384 = vpack.c.b16 %v3184, %v3176
      %v3385 = vpack.c.b16 %v3185, %v3177
      %v3386 = vpack.c.b16 %v3186, %v3178
      %v3387 = vpack.c.b16 %v3187, %v3179
      %v3388 = vpack.c.b16 %v3188, %v3180
      %v3389 = vpack.c.b16 %v3189, %v3181
      %v3390 = vpack.c.b16 %v3198, %v3190
      %v3391 = vpack.c.b16 %v3199, %v3191
      %v3392 = vpack.c.b16 %v3200, %v3192
      %v3393 = vpack.c.b16 %v3201, %v3193
      %v3394 = vpack.c.b16 %v3202, %v3194
      %v3395 = vpack.c.b16 %v3203, %v3195
      %v3396 = vpack.c.b16 %v3204, %v3196
      %v3397 = vpack.c.b16 %v3205, %v3197
      %v3398 = vpack.c.b16 %v3214, %v3206
      %v3399 = vpack.c.b16 %v3215, %v3207
      %v3400 = vpack.c.b16 %v3216, %v3208
      %v3401 = vpack.c.b16 %v3217, %v3209
      %v3402 = vpack.c.b16 %v3218, %v3210
      %v3403 = vpack.c.b16 %v3219, %v3211
      %v3404 = vpack.c.b16 %v3220, %v3212
      %v3405 = vpack.c.b16 %v3221, %v3213
      %v3406 = vpack.c.b16 %v3230, %v3222
      %v3407 = vpack.c.b16 %v3231, %v3223
      %v3408 = vpack.c.b16 %v3232, %v3224
      %v3409 = vpack.c.b16 %v3233, %v3225
      %v3410 = vpack.c.b16 %v3234, %v3226
      %v3411 = vpack.c.b16 %v3235, %v3227
      %v3412 = vpack.c.b16 %v3236, %v3228
      %v3413 = vpack.c.b16 %v3237, %v3229
      %v3414 = vpack.c.b16 %v3246, %v3238
      %v3415 = vpack.c.b16 %v3247, %v3239
      %v3416 = vpack.c.b16 %v3248, %v3240
      %v3417 = vpack.c.b16 %v3249, %v3241
      %v3418 = vpack.c.b16 %v3250, %v3242
      %v3419 = vpack.c.b16 %v3251, %v3243
      %v3420 = vpack.c.b16 %v3252, %v3244
      %v3421 = vpack.c.b16 %v3253, %v3245
      %v3422 = vpack.c.b16 %v3262, %v3254
      %v3423 = vpack.c.b16 %v3263, %v3255
      %v3424 = vpack.c.b16 %v3264, %v3256
      %v3425 = vpack.c.b16 %v3265, %v3257
      %v3426 = vpack.c.b16 %v3266, %v3258
      %v3427 = vpack.c.b16 %v3267, %v3259
      %v3428 = vpack.c.b16 %v3268, %v3260
      %v3429 = vpack.c.b16 %v3269, %v3261
      %v3430 = vpack.c.b16 %v3278, %v3270
      %v3431 = vpack.c.b16 %v3279, %v3271
      %v3432 = vpack.c.b16 %v3280, %v3272
      %v3433 = vpack.c.b16 %v3281, %v3273
      %v3434 = vpack.c.b16 %v3282, %v3274
      %v3435 = vpack.c.b16 %v3283, %v3275
      %v3436 = vpack.c.b16 %v3284, %v3276
      %v3437 = vpack.c.b16 %v3285, %v3277
      %v3438 = vpack.c.b16 %v3294, %v3286
      %v3439 = vpack.c.b16 %v3295, %v3287
      %v3440 = vpack.c.b16 %v3296, %v3288
      %v3441 = vpack.c.b16 %v3297, %v3289
      %v3442 = vpack.c.b16 %v3298, %v3290
      %v3443 = vpack.c.b16 %v3299, %v3291
      %v3444 = vpack.c.b16 %v3300, %v3292
      %v3445 = vpack.c.b16 %v3301, %v3293
      %v3446 = vpack.c.b16 %v3310, %v3302
      %v3447 = vpack.c.b16 %v3311, %v3303
      %v3448 = vpack.c.b16 %v3312, %v3304
      %v3449 = vpack.c.b16 %v3313, %v3305
      %v3450 = vpack.c.b16 %v3314, %v3306
      %v3451 = vpack.c.b16 %v3315, %v3307
      %v3452 = vpack.c.b16 %v3316, %v3308
      %v3453 = vpack.c.b16 %v3317, %v3309
      %v3454 = vpack.c.b16 %v3326, %v3318
      %v3455 = vpack.c.b16 %v3327, %v3319
      %v3456 = vpack.c.b16 %v3328, %v3320
      %v3457 = vpack.c.b16 %v3329, %v3321
      %v3458 = vpack.c.b16 %v3330, %v3322
      %v3459 = vpack.c.b16 %v3331, %v3323
      %v3460 = vpack.c.b16 %v3332, %v3324
      %v3461 = vpack.c.b16 %v3333, %v3325
      %3590 = vmatprep.subr.bf16.mxu0 %v3391
      %3591 = vmatpush1.bf16.msra.mxu0 %v3390
      %3592 = vmatprep.subr.bf16.mxu0 %v3383
      %3593 = vmatpush1.bf16.msra.mxu0 %v3382
      %3594 = vmatprep.subr.bf16.mxu0 %v3375
      %3595 = vmatpush1.bf16.msra.mxu0 %v3374
      %3596 = vmatprep.subr.bf16.mxu0 %v3367
      %3597 = vmatpush1.bf16.msra.mxu0 %v3366
      %3598 = vmatprep.subr.bf16.mxu0 %v3359
      %3599 = vmatpush1.bf16.msra.mxu0 %v3358
      %3600 = vmatprep.subr.bf16.mxu0 %v3351
      %3601 = vmatpush1.bf16.msra.mxu0 %v3350
      %3602 = vmatprep.subr.bf16.mxu0 %v3343
      %3603 = vmatpush1.bf16.msra.mxu0 %v3342
      %3604 = vmatprep.subr.bf16.mxu0 %v3335
      %3605 = vmatpush1.bf16.msra.mxu0 %v3334
      %3606 = vmatprep.subr.bf16.mxu0 %v3455
      %3607 = vmatpush2.bf16.msra.mxu0 %v3454
      %3608 = vmatprep.subr.bf16.mxu0 %v3447
      %3609 = vmatpush2.bf16.msra.mxu0 %v3446
      %3610 = vmatprep.subr.bf16.mxu0 %v3439
      %3611 = vmatpush2.bf16.msra.mxu0 %v3438
      %3612 = vmatprep.subr.bf16.mxu0 %v3431
      %3613 = vmatpush2.bf16.msra.mxu0 %v3430
      %3614 = vmatprep.subr.bf16.mxu0 %v3423
      %3615 = vmatpush2.bf16.msra.mxu0 %v3422
      %3616 = vmatprep.subr.bf16.mxu0 %v3415
      %3617 = vmatpush2.bf16.msra.mxu0 %v3414
      %3618 = vmatprep.subr.bf16.mxu0 %v3407
      %3619 = vmatpush2.bf16.msra.mxu0 %v3406
      %3620 = vmatprep.subr.bf16.mxu0 %v3399
      %3621 = vmatpush2.bf16.msra.mxu0 %v3398
      %3622 = vmatprep.mubr.bf16.mxu0 %v2765
      %3623 = vmatmul.mubr.bf16.gmra.mxu0 %v2764
      %v3624 = vpop.f32.mrf.mxu0
      %v3625 = vadd.f32 %v2913, %v3624
      %v3626 = vpop.f32.mrf.mxu0
      %v3627 = vadd.f32 %v2917, %v3626
      %v3628 = vpop.f32.mrf.mxu0
      %v3629 = vadd.f32 %v2913, %v3628
      %v3630 = vpop.f32.mrf.mxu0
      %v3631 = vadd.f32 %v2917, %v3630
      %3632 = vmatprep.mubr.bf16.mxu0 %v2767
      %3633 = vmatmul.mubr.bf16.gmra.mxu0 %v2766
      %v3634 = vpop.f32.mrf.mxu0
      %v3635 = vadd.f32 %v2913, %v3634
      %v3636 = vpop.f32.mrf.mxu0
      %v3637 = vadd.f32 %v2917, %v3636
      %v3638 = vpop.f32.mrf.mxu0
      %v3639 = vadd.f32 %v2913, %v3638
      %v3640 = vpop.f32.mrf.mxu0
      %v3641 = vadd.f32 %v2917, %v3640
      %3642 = vmatprep.mubr.bf16.mxu0 %v2769
      %3643 = vmatmul.mubr.bf16.gmra.mxu0 %v2768
      %v3644 = vpop.f32.mrf.mxu0
      %v3645 = vadd.f32 %v2913, %v3644
      %v3646 = vpop.f32.mrf.mxu0
      %v3647 = vadd.f32 %v2917, %v3646
      %v3648 = vpop.f32.mrf.mxu0
      %v3649 = vadd.f32 %v2913, %v3648
      %v3650 = vpop.f32.mrf.mxu0
      %v3651 = vadd.f32 %v2917, %v3650
      %3652 = vmatprep.mubr.bf16.mxu0 %v2771
      %3653 = vmatmul.mubr.bf16.gmra.mxu0 %v2770
      %v3654 = vpop.f32.mrf.mxu0
      %v3655 = vadd.f32 %v2913, %v3654
      %v3656 = vpop.f32.mrf.mxu0
      %v3657 = vadd.f32 %v2917, %v3656
      %v3658 = vpop.f32.mrf.mxu0
      %v3659 = vadd.f32 %v2913, %v3658
      %v3660 = vpop.f32.mrf.mxu0
      %v3661 = vadd.f32 %v2917, %v3660
      %3662 = vmatprep.mubr.bf16.mxu0 %v2773
      %3663 = vmatmul.mubr.bf16.gmra.mxu0 %v2772
      %v3664 = vpop.f32.mrf.mxu0
      %v3665 = vadd.f32 %v2913, %v3664
      %v3666 = vpop.f32.mrf.mxu0
      %v3667 = vadd.f32 %v2917, %v3666
      %v3668 = vpop.f32.mrf.mxu0
      %v3669 = vadd.f32 %v2913, %v3668
      %v3670 = vpop.f32.mrf.mxu0
      %v3671 = vadd.f32 %v2917, %v3670
      %3672 = vmatprep.mubr.bf16.mxu0 %v2775
      %3673 = vmatmul.mubr.bf16.gmra.mxu0 %v2774
      %v3674 = vpop.f32.mrf.mxu0
      %v3675 = vadd.f32 %v2913, %v3674
      %v3676 = vpop.f32.mrf.mxu0
      %v3677 = vadd.f32 %v2917, %v3676
      %v3678 = vpop.f32.mrf.mxu0
      %v3679 = vadd.f32 %v2913, %v3678
      %v3680 = vpop.f32.mrf.mxu0
      %v3681 = vadd.f32 %v2917, %v3680
      %3682 = vmatprep.mubr.bf16.mxu0 %v2777
      %3683 = vmatmul.mubr.bf16.gmra.mxu0 %v2776
      %v3684 = vpop.f32.mrf.mxu0
      %v3685 = vadd.f32 %v2913, %v3684
      %v3686 = vpop.f32.mrf.mxu0
      %v3687 = vadd.f32 %v2917, %v3686
      %v3688 = vpop.f32.mrf.mxu0
      %v3689 = vadd.f32 %v2913, %v3688
      %v3690 = vpop.f32.mrf.mxu0
      %v3691 = vadd.f32 %v2917, %v3690
      %3692 = vmatprep.mubr.bf16.mxu0 %v2779
      %3693 = vmatmul.mubr.bf16.gmra.mxu0 %v2778
      %v3694 = vpop.f32.mrf.mxu0
      %v3695 = vadd.f32 %v2913, %v3694
      %v3696 = vpop.f32.mrf.mxu0
      %v3697 = vadd.f32 %v2917, %v3696
      %v3698 = vpop.f32.mrf.mxu0
      %v3699 = vadd.f32 %v2913, %v3698
      %v3700 = vpop.f32.mrf.mxu0
      %v3701 = vadd.f32 %v2917, %v3700
      %3702 = vdwg.mxu0
      %3703 = vmatprep.subr.bf16.mxu0 %v3393
      %3704 = vmatpush1.bf16.msra.mxu0 %v3392
      %3705 = vmatprep.subr.bf16.mxu0 %v3385
      %3706 = vmatpush1.bf16.msra.mxu0 %v3384
      %3707 = vmatprep.subr.bf16.mxu0 %v3377
      %3708 = vmatpush1.bf16.msra.mxu0 %v3376
      %3709 = vmatprep.subr.bf16.mxu0 %v3369
      %3710 = vmatpush1.bf16.msra.mxu0 %v3368
      %3711 = vmatprep.subr.bf16.mxu0 %v3361
      %3712 = vmatpush1.bf16.msra.mxu0 %v3360
      %3713 = vmatprep.subr.bf16.mxu0 %v3353
      %3714 = vmatpush1.bf16.msra.mxu0 %v3352
      %3715 = vmatprep.subr.bf16.mxu0 %v3345
      %3716 = vmatpush1.bf16.msra.mxu0 %v3344
      %3717 = vmatprep.subr.bf16.mxu0 %v3337
      %3718 = vmatpush1.bf16.msra.mxu0 %v3336
      %3719 = vmatprep.subr.bf16.mxu0 %v3457
      %3720 = vmatpush2.bf16.msra.mxu0 %v3456
      %3721 = vmatprep.subr.bf16.mxu0 %v3449
      %3722 = vmatpush2.bf16.msra.mxu0 %v3448
      %3723 = vmatprep.subr.bf16.mxu0 %v3441
      %3724 = vmatpush2.bf16.msra.mxu0 %v3440
      %3725 = vmatprep.subr.bf16.mxu0 %v3433
      %3726 = vmatpush2.bf16.msra.mxu0 %v3432
      %3727 = vmatprep.subr.bf16.mxu0 %v3425
      %3728 = vmatpush2.bf16.msra.mxu0 %v3424
      %3729 = vmatprep.subr.bf16.mxu0 %v3417
      %3730 = vmatpush2.bf16.msra.mxu0 %v3416
      %3731 = vmatprep.subr.bf16.mxu0 %v3409
      %3732 = vmatpush2.bf16.msra.mxu0 %v3408
      %3733 = vmatprep.subr.bf16.mxu0 %v3401
      %3734 = vmatpush2.bf16.msra.mxu0 %v3400
      %3735 = vmatprep.mubr.bf16.mxu0 %v2765
      %3736 = vmatmul.mubr.bf16.gmra.mxu0 %v2764
      %v3737 = vpop.f32.mrf.mxu0
      %v3738 = vadd.f32 %v2921, %v3737
      %v3739 = vpop.f32.mrf.mxu0
      %v3740 = vadd.f32 %v2925, %v3739
      %v3741 = vpop.f32.mrf.mxu0
      %v3742 = vadd.f32 %v2921, %v3741
      %v3743 = vpop.f32.mrf.mxu0
      %v3744 = vadd.f32 %v2925, %v3743
      %3745 = vmatprep.mubr.bf16.mxu0 %v2767
      %3746 = vmatmul.mubr.bf16.gmra.mxu0 %v2766
      %v3747 = vpop.f32.mrf.mxu0
      %v3748 = vadd.f32 %v2921, %v3747
      %v3749 = vpop.f32.mrf.mxu0
      %v3750 = vadd.f32 %v2925, %v3749
      %v3751 = vpop.f32.mrf.mxu0
      %v3752 = vadd.f32 %v2921, %v3751
      %v3753 = vpop.f32.mrf.mxu0
      %v3754 = vadd.f32 %v2925, %v3753
      %3755 = vmatprep.mubr.bf16.mxu0 %v2769
      %3756 = vmatmul.mubr.bf16.gmra.mxu0 %v2768
      %v3757 = vpop.f32.mrf.mxu0
      %v3758 = vadd.f32 %v2921, %v3757
      %v3759 = vpop.f32.mrf.mxu0
      %v3760 = vadd.f32 %v2925, %v3759
      %v3761 = vpop.f32.mrf.mxu0
      %v3762 = vadd.f32 %v2921, %v3761
      %v3763 = vpop.f32.mrf.mxu0
      %v3764 = vadd.f32 %v2925, %v3763
      %3765 = vmatprep.mubr.bf16.mxu0 %v2771
      %3766 = vmatmul.mubr.bf16.gmra.mxu0 %v2770
      %v3767 = vpop.f32.mrf.mxu0
      %v3768 = vadd.f32 %v2921, %v3767
      %v3769 = vpop.f32.mrf.mxu0
      %v3770 = vadd.f32 %v2925, %v3769
      %v3771 = vpop.f32.mrf.mxu0
      %v3772 = vadd.f32 %v2921, %v3771
      %v3773 = vpop.f32.mrf.mxu0
      %v3774 = vadd.f32 %v2925, %v3773
      %3775 = vmatprep.mubr.bf16.mxu0 %v2773
      %3776 = vmatmul.mubr.bf16.gmra.mxu0 %v2772
      %v3777 = vpop.f32.mrf.mxu0
      %v3778 = vadd.f32 %v2921, %v3777
      %v3779 = vpop.f32.mrf.mxu0
      %v3780 = vadd.f32 %v2925, %v3779
      %v3781 = vpop.f32.mrf.mxu0
      %v3782 = vadd.f32 %v2921, %v3781
      %v3783 = vpop.f32.mrf.mxu0
      %v3784 = vadd.f32 %v2925, %v3783
      %3785 = vmatprep.mubr.bf16.mxu0 %v2775
      %3786 = vmatmul.mubr.bf16.gmra.mxu0 %v2774
      %v3787 = vpop.f32.mrf.mxu0
      %v3788 = vadd.f32 %v2921, %v3787
      %v3789 = vpop.f32.mrf.mxu0
      %v3790 = vadd.f32 %v2925, %v3789
      %v3791 = vpop.f32.mrf.mxu0
      %v3792 = vadd.f32 %v2921, %v3791
      %v3793 = vpop.f32.mrf.mxu0
      %v3794 = vadd.f32 %v2925, %v3793
      %3795 = vmatprep.mubr.bf16.mxu0 %v2777
      %3796 = vmatmul.mubr.bf16.gmra.mxu0 %v2776
      %v3797 = vpop.f32.mrf.mxu0
      %v3798 = vadd.f32 %v2921, %v3797
      %v3799 = vpop.f32.mrf.mxu0
      %v3800 = vadd.f32 %v2925, %v3799
      %v3801 = vpop.f32.mrf.mxu0
      %v3802 = vadd.f32 %v2921, %v3801
      %v3803 = vpop.f32.mrf.mxu0
      %v3804 = vadd.f32 %v2925, %v3803
      %3805 = vmatprep.mubr.bf16.mxu0 %v2779
      %3806 = vmatmul.mubr.bf16.gmra.mxu0 %v2778
      %v3807 = vpop.f32.mrf.mxu0
      %v3808 = vadd.f32 %v2921, %v3807
      %v3809 = vpop.f32.mrf.mxu0
      %v3810 = vadd.f32 %v2925, %v3809
      %v3811 = vpop.f32.mrf.mxu0
      %v3812 = vadd.f32 %v2921, %v3811
      %v3813 = vpop.f32.mrf.mxu0
      %v3814 = vadd.f32 %v2925, %v3813
      %3815 = vdwg.mxu0
      %3816 = vmatprep.subr.bf16.mxu0 %v3395
      %3817 = vmatpush1.bf16.msra.mxu0 %v3394
      %3818 = vmatprep.subr.bf16.mxu0 %v3387
      %3819 = vmatpush1.bf16.msra.mxu0 %v3386
      %3820 = vmatprep.subr.bf16.mxu0 %v3379
      %3821 = vmatpush1.bf16.msra.mxu0 %v3378
      %3822 = vmatprep.subr.bf16.mxu0 %v3371
      %3823 = vmatpush1.bf16.msra.mxu0 %v3370
      %3824 = vmatprep.subr.bf16.mxu0 %v3363
      %3825 = vmatpush1.bf16.msra.mxu0 %v3362
      %3826 = vmatprep.subr.bf16.mxu0 %v3355
      %3827 = vmatpush1.bf16.msra.mxu0 %v3354
      %3828 = vmatprep.subr.bf16.mxu0 %v3347
      %3829 = vmatpush1.bf16.msra.mxu0 %v3346
      %3830 = vmatprep.subr.bf16.mxu0 %v3339
      %3831 = vmatpush1.bf16.msra.mxu0 %v3338
      %3832 = vmatprep.subr.bf16.mxu0 %v3459
      %3833 = vmatpush2.bf16.msra.mxu0 %v3458
      %3834 = vmatprep.subr.bf16.mxu0 %v3451
      %3835 = vmatpush2.bf16.msra.mxu0 %v3450
      %3836 = vmatprep.subr.bf16.mxu0 %v3443
      %3837 = vmatpush2.bf16.msra.mxu0 %v3442
      %3838 = vmatprep.subr.bf16.mxu0 %v3435
      %3839 = vmatpush2.bf16.msra.mxu0 %v3434
      %3840 = vmatprep.subr.bf16.mxu0 %v3427
      %3841 = vmatpush2.bf16.msra.mxu0 %v3426
      %3842 = vmatprep.subr.bf16.mxu0 %v3419
      %3843 = vmatpush2.bf16.msra.mxu0 %v3418
      %3844 = vmatprep.subr.bf16.mxu0 %v3411
      %3845 = vmatpush2.bf16.msra.mxu0 %v3410
      %3846 = vmatprep.subr.bf16.mxu0 %v3403
      %3847 = vmatpush2.bf16.msra.mxu0 %v3402
      %3848 = vmatprep.mubr.bf16.mxu0 %v2765
      %3849 = vmatmul.mubr.bf16.gmra.mxu0 %v2764
      %v3850 = vpop.f32.mrf.mxu0
      %v3851 = vadd.f32 %v2929, %v3850
      %v3852 = vpop.f32.mrf.mxu0
      %v3853 = vadd.f32 %v2933, %v3852
      %v3854 = vpop.f32.mrf.mxu0
      %v3855 = vadd.f32 %v2929, %v3854
      %v3856 = vpop.f32.mrf.mxu0
      %v3857 = vadd.f32 %v2933, %v3856
      %3858 = vmatprep.mubr.bf16.mxu0 %v2767
      %3859 = vmatmul.mubr.bf16.gmra.mxu0 %v2766
      %v3860 = vpop.f32.mrf.mxu0
      %v3861 = vadd.f32 %v2929, %v3860
      %v3862 = vpop.f32.mrf.mxu0
      %v3863 = vadd.f32 %v2933, %v3862
      %v3864 = vpop.f32.mrf.mxu0
      %v3865 = vadd.f32 %v2929, %v3864
      %v3866 = vpop.f32.mrf.mxu0
      %v3867 = vadd.f32 %v2933, %v3866
      %3868 = vmatprep.mubr.bf16.mxu0 %v2769
      %3869 = vmatmul.mubr.bf16.gmra.mxu0 %v2768
      %v3870 = vpop.f32.mrf.mxu0
      %v3871 = vadd.f32 %v2929, %v3870
      %v3872 = vpop.f32.mrf.mxu0
      %v3873 = vadd.f32 %v2933, %v3872
      %v3874 = vpop.f32.mrf.mxu0
      %v3875 = vadd.f32 %v2929, %v3874
      %v3876 = vpop.f32.mrf.mxu0
      %v3877 = vadd.f32 %v2933, %v3876
      %3878 = vmatprep.mubr.bf16.mxu0 %v2771
      %3879 = vmatmul.mubr.bf16.gmra.mxu0 %v2770
      %v3880 = vpop.f32.mrf.mxu0
      %v3881 = vadd.f32 %v2929, %v3880
      %v3882 = vpop.f32.mrf.mxu0
      %v3883 = vadd.f32 %v2933, %v3882
      %v3884 = vpop.f32.mrf.mxu0
      %v3885 = vadd.f32 %v2929, %v3884
      %v3886 = vpop.f32.mrf.mxu0
      %v3887 = vadd.f32 %v2933, %v3886
      %3888 = vmatprep.mubr.bf16.mxu0 %v2773
      %3889 = vmatmul.mubr.bf16.gmra.mxu0 %v2772
      %v3890 = vpop.f32.mrf.mxu0
      %v3891 = vadd.f32 %v2929, %v3890
      %v3892 = vpop.f32.mrf.mxu0
      %v3893 = vadd.f32 %v2933, %v3892
      %v3894 = vpop.f32.mrf.mxu0
      %v3895 = vadd.f32 %v2929, %v3894
      %v3896 = vpop.f32.mrf.mxu0
      %v3897 = vadd.f32 %v2933, %v3896
      %3898 = vmatprep.mubr.bf16.mxu0 %v2775
      %3899 = vmatmul.mubr.bf16.gmra.mxu0 %v2774
      %v3900 = vpop.f32.mrf.mxu0
      %v3901 = vadd.f32 %v2929, %v3900
      %v3902 = vpop.f32.mrf.mxu0
      %v3903 = vadd.f32 %v2933, %v3902
      %v3904 = vpop.f32.mrf.mxu0
      %v3905 = vadd.f32 %v2929, %v3904
      %v3906 = vpop.f32.mrf.mxu0
      %v3907 = vadd.f32 %v2933, %v3906
      %3908 = vmatprep.mubr.bf16.mxu0 %v2777
      %3909 = vmatmul.mubr.bf16.gmra.mxu0 %v2776
      %v3910 = vpop.f32.mrf.mxu0
      %v3911 = vadd.f32 %v2929, %v3910
      %v3912 = vpop.f32.mrf.mxu0
      %v3913 = vadd.f32 %v2933, %v3912
      %v3914 = vpop.f32.mrf.mxu0
      %v3915 = vadd.f32 %v2929, %v3914
      %v3916 = vpop.f32.mrf.mxu0
      %v3917 = vadd.f32 %v2933, %v3916
      %3918 = vmatprep.mubr.bf16.mxu0 %v2779
      %3919 = vmatmul.mubr.bf16.gmra.mxu0 %v2778
      %v3920 = vpop.f32.mrf.mxu0
      %v3921 = vadd.f32 %v2929, %v3920
      %v3922 = vpop.f32.mrf.mxu0
      %v3923 = vadd.f32 %v2933, %v3922
      %v3924 = vpop.f32.mrf.mxu0
      %v3925 = vadd.f32 %v2929, %v3924
      %v3926 = vpop.f32.mrf.mxu0
      %v3927 = vadd.f32 %v2933, %v3926
      %3928 = vdwg.mxu0
      %3929 = vmatprep.subr.bf16.mxu0 %v3397
      %3930 = vmatpush1.bf16.msra.mxu0 %v3396
      %3931 = vmatprep.subr.bf16.mxu0 %v3389
      %3932 = vmatpush1.bf16.msra.mxu0 %v3388
      %3933 = vmatprep.subr.bf16.mxu0 %v3381
      %3934 = vmatpush1.bf16.msra.mxu0 %v3380
      %3935 = vmatprep.subr.bf16.mxu0 %v3373
      %3936 = vmatpush1.bf16.msra.mxu0 %v3372
      %3937 = vmatprep.subr.bf16.mxu0 %v3365
      %3938 = vmatpush1.bf16.msra.mxu0 %v3364
      %3939 = vmatprep.subr.bf16.mxu0 %v3357
      %3940 = vmatpush1.bf16.msra.mxu0 %v3356
      %3941 = vmatprep.subr.bf16.mxu0 %v3349
      %3942 = vmatpush1.bf16.msra.mxu0 %v3348
      %3943 = vmatprep.subr.bf16.mxu0 %v3341
      %3944 = vmatpush1.bf16.msra.mxu0 %v3340
      %3945 = vmatprep.subr.bf16.mxu0 %v3461
      %3946 = vmatpush2.bf16.msra.mxu0 %v3460
      %3947 = vmatprep.subr.bf16.mxu0 %v3453
      %3948 = vmatpush2.bf16.msra.mxu0 %v3452
      %3949 = vmatprep.subr.bf16.mxu0 %v3445
      %3950 = vmatpush2.bf16.msra.mxu0 %v3444
      %3951 = vmatprep.subr.bf16.mxu0 %v3437
      %3952 = vmatpush2.bf16.msra.mxu0 %v3436
      %3953 = vmatprep.subr.bf16.mxu0 %v3429
      %3954 = vmatpush2.bf16.msra.mxu0 %v3428
      %3955 = vmatprep.subr.bf16.mxu0 %v3421
      %3956 = vmatpush2.bf16.msra.mxu0 %v3420
      %3957 = vmatprep.subr.bf16.mxu0 %v3413
      %3958 = vmatpush2.bf16.msra.mxu0 %v3412
      %3959 = vmatprep.subr.bf16.mxu0 %v3405
      %3960 = vmatpush2.bf16.msra.mxu0 %v3404
      %3961 = vmatprep.mubr.bf16.mxu0 %v2765
      %3962 = vmatmul.mubr.bf16.gmra.mxu0 %v2764
      %v3963 = vpop.f32.mrf.mxu0
      %v3964 = vadd.f32 %v2937, %v3963
      %v3965 = vpop.f32.mrf.mxu0
      %v3966 = vadd.f32 %v2941, %v3965
      %v3967 = vpop.f32.mrf.mxu0
      %v3968 = vadd.f32 %v2937, %v3967
      %v3969 = vpop.f32.mrf.mxu0
      %v3970 = vadd.f32 %v2941, %v3969
      %3971 = vmatprep.mubr.bf16.mxu0 %v2767
      %3972 = vmatmul.mubr.bf16.gmra.mxu0 %v2766
      %v3973 = vpop.f32.mrf.mxu0
      %v3974 = vadd.f32 %v2937, %v3973
      %v3975 = vpop.f32.mrf.mxu0
      %v3976 = vadd.f32 %v2941, %v3975
      %v3977 = vpop.f32.mrf.mxu0
      %v3978 = vadd.f32 %v2937, %v3977
      %v3979 = vpop.f32.mrf.mxu0
      %v3980 = vadd.f32 %v2941, %v3979
      %3981 = vmatprep.mubr.bf16.mxu0 %v2769
      %3982 = vmatmul.mubr.bf16.gmra.mxu0 %v2768
      %v3983 = vpop.f32.mrf.mxu0
      %v3984 = vadd.f32 %v2937, %v3983
      %v3985 = vpop.f32.mrf.mxu0
      %v3986 = vadd.f32 %v2941, %v3985
      %v3987 = vpop.f32.mrf.mxu0
      %v3988 = vadd.f32 %v2937, %v3987
      %v3989 = vpop.f32.mrf.mxu0
      %v3990 = vadd.f32 %v2941, %v3989
      %3991 = vmatprep.mubr.bf16.mxu0 %v2771
      %3992 = vmatmul.mubr.bf16.gmra.mxu0 %v2770
      %v3993 = vpop.f32.mrf.mxu0
      %v3994 = vadd.f32 %v2937, %v3993
      %v3995 = vpop.f32.mrf.mxu0
      %v3996 = vadd.f32 %v2941, %v3995
      %v3997 = vpop.f32.mrf.mxu0
      %v3998 = vadd.f32 %v2937, %v3997
      %v3999 = vpop.f32.mrf.mxu0
      %v4000 = vadd.f32 %v2941, %v3999
      %4001 = vmatprep.mubr.bf16.mxu0 %v2773
      %4002 = vmatmul.mubr.bf16.gmra.mxu0 %v2772
      %v4003 = vpop.f32.mrf.mxu0
      %v4004 = vadd.f32 %v2937, %v4003
      %v4005 = vpop.f32.mrf.mxu0
      %v4006 = vadd.f32 %v2941, %v4005
      %v4007 = vpop.f32.mrf.mxu0
      %v4008 = vadd.f32 %v2937, %v4007
      %v4009 = vpop.f32.mrf.mxu0
      %v4010 = vadd.f32 %v2941, %v4009
      %4011 = vmatprep.mubr.bf16.mxu0 %v2775
      %4012 = vmatmul.mubr.bf16.gmra.mxu0 %v2774
      %v4013 = vpop.f32.mrf.mxu0
      %v4014 = vadd.f32 %v2937, %v4013
      %v4015 = vpop.f32.mrf.mxu0
      %v4016 = vadd.f32 %v2941, %v4015
      %v4017 = vpop.f32.mrf.mxu0
      %v4018 = vadd.f32 %v2937, %v4017
      %v4019 = vpop.f32.mrf.mxu0
      %v4020 = vadd.f32 %v2941, %v4019
      %4021 = vmatprep.mubr.bf16.mxu0 %v2777
      %4022 = vmatmul.mubr.bf16.gmra.mxu0 %v2776
      %v4023 = vpop.f32.mrf.mxu0
      %v4024 = vadd.f32 %v2937, %v4023
      %v4025 = vpop.f32.mrf.mxu0
      %v4026 = vadd.f32 %v2941, %v4025
      %v4027 = vpop.f32.mrf.mxu0
      %v4028 = vadd.f32 %v2937, %v4027
      %v4029 = vpop.f32.mrf.mxu0
      %v4030 = vadd.f32 %v2941, %v4029
      %4031 = vmatprep.mubr.bf16.mxu0 %v2779
      %4032 = vmatmul.mubr.bf16.gmra.mxu0 %v2778
      %v4033 = vpop.f32.mrf.mxu0
      %v4034 = vadd.f32 %v2937, %v4033
      %v4035 = vpop.f32.mrf.mxu0
      %v4036 = vadd.f32 %v2941, %v4035
      %v4037 = vpop.f32.mrf.mxu0
      %v4038 = vadd.f32 %v2937, %v4037
      %v4039 = vpop.f32.mrf.mxu0
      %v4040 = vadd.f32 %v2941, %v4039
      %4041 = vdwg.mxu0
      %4042 = vst [vmem:[%s423] sm:$0xff] %v3625
      %4043 = vst [vmem:[%s423 + $0x8] sm:$0xff] %v3627
      %4044 = vst [vmem:[%s423 + $0x10] sm:$0xff] %v3738
      %4045 = vst [vmem:[%s423 + $0x18] sm:$0xff] %v3740
      %4046 = vst [vmem:[%s423 + $0x20] sm:$0xff] %v3851
      %4047 = vst [vmem:[%s423 + $0x28] sm:$0xff] %v3853
      %4048 = vst [vmem:[%s423 + $0x30] sm:$0xff] %v3964
      %4049 = vst [vmem:[%s423 + $0x38] sm:$0xff] %v3966
      %4050 = vst [vmem:[%s423 + $0x40] sm:$0xff] %v3629
      %4051 = vst [vmem:[%s423 + $0x48] sm:$0xff] %v3631
      %4052 = vst [vmem:[%s423 + $0x50] sm:$0xff] %v3742
      %4053 = vst [vmem:[%s423 + $0x58] sm:$0xff] %v3744
      %4054 = vst [vmem:[%s423 + $0x60] sm:$0xff] %v3855
      %4055 = vst [vmem:[%s423 + $0x68] sm:$0xff] %v3857
      %4056 = vst [vmem:[%s423 + $0x70] sm:$0xff] %v3968
      %4057 = vst [vmem:[%s423 + $0x78] sm:$0xff] %v3970
      %4058 = vst [vmem:[%s423 + $0x80] sm:$0xff] %v3635
      %4059 = vst [vmem:[%s423 + $0x88] sm:$0xff] %v3637
      %4060 = vst [vmem:[%s423 + $0x90] sm:$0xff] %v3748
      %4061 = vst [vmem:[%s423 + $0x98] sm:$0xff] %v3750
      %4062 = vst [vmem:[%s423 + $0xa0] sm:$0xff] %v3861
      %4063 = vst [vmem:[%s423 + $0xa8] sm:$0xff] %v3863
      %4064 = vst [vmem:[%s423 + $0xb0] sm:$0xff] %v3974
      %4065 = vst [vmem:[%s423 + $0xb8] sm:$0xff] %v3976
      %4066 = vst [vmem:[%s423 + $0xc0] sm:$0xff] %v3639
      %4067 = vst [vmem:[%s423 + $0xc8] sm:$0xff] %v3641
      %4068 = vst [vmem:[%s423 + $0xd0] sm:$0xff] %v3752
      %4069 = vst [vmem:[%s423 + $0xd8] sm:$0xff] %v3754
      %4070 = vst [vmem:[%s423 + $0xe0] sm:$0xff] %v3865
      %4071 = vst [vmem:[%s423 + $0xe8] sm:$0xff] %v3867
      %4072 = vst [vmem:[%s423 + $0xf0] sm:$0xff] %v3978
      %4073 = vst [vmem:[%s423 + $0xf8] sm:$0xff] %v3980
      %4074 = vst [vmem:[%s423 + $0x100] sm:$0xff] %v3645
      %4075 = vst [vmem:[%s423 + $0x108] sm:$0xff] %v3647
      %4076 = vst [vmem:[%s423 + $0x110] sm:$0xff] %v3758
      %4077 = vst [vmem:[%s423 + $0x118] sm:$0xff] %v3760
      %4078 = vst [vmem:[%s423 + $0x120] sm:$0xff] %v3871
      %4079 = vst [vmem:[%s423 + $0x128] sm:$0xff] %v3873
      %4080 = vst [vmem:[%s423 + $0x130] sm:$0xff] %v3984
      %4081 = vst [vmem:[%s423 + $0x138] sm:$0xff] %v3986
      %4082 = vst [vmem:[%s423 + $0x140] sm:$0xff] %v3649
      %4083 = vst [vmem:[%s423 + $0x148] sm:$0xff] %v3651
      %4084 = vst [vmem:[%s423 + $0x150] sm:$0xff] %v3762
      %4085 = vst [vmem:[%s423 + $0x158] sm:$0xff] %v3764
      %4086 = vst [vmem:[%s423 + $0x160] sm:$0xff] %v3875
      %4087 = vst [vmem:[%s423 + $0x168] sm:$0xff] %v3877
      %4088 = vst [vmem:[%s423 + $0x170] sm:$0xff] %v3988
      %4089 = vst [vmem:[%s423 + $0x178] sm:$0xff] %v3990
      %4090 = vst [vmem:[%s423 + $0x180] sm:$0xff] %v3655
      %4091 = vst [vmem:[%s423 + $0x188] sm:$0xff] %v3657
      %4092 = vst [vmem:[%s423 + $0x190] sm:$0xff] %v3768
      %4093 = vst [vmem:[%s423 + $0x198] sm:$0xff] %v3770
      %4094 = vst [vmem:[%s423 + $0x1a0] sm:$0xff] %v3881
      %4095 = vst [vmem:[%s423 + $0x1a8] sm:$0xff] %v3883
      %4096 = vst [vmem:[%s423 + $0x1b0] sm:$0xff] %v3994
      %4097 = vst [vmem:[%s423 + $0x1b8] sm:$0xff] %v3996
      %4098 = vst [vmem:[%s423 + $0x1c0] sm:$0xff] %v3659
      %4099 = vst [vmem:[%s423 + $0x1c8] sm:$0xff] %v3661
      %4100 = vst [vmem:[%s423 + $0x1d0] sm:$0xff] %v3772
      %4101 = vst [vmem:[%s423 + $0x1d8] sm:$0xff] %v3774
      %4102 = vst [vmem:[%s423 + $0x1e0] sm:$0xff] %v3885
      %4103 = vst [vmem:[%s423 + $0x1e8] sm:$0xff] %v3887
      %4104 = vst [vmem:[%s423 + $0x1f0] sm:$0xff] %v3998
      %4105 = vst [vmem:[%s423 + $0x1f8] sm:$0xff] %v4000
      %4106 = vst [vmem:[%s423 + $0x200] sm:$0xff] %v3665
      %4107 = vst [vmem:[%s423 + $0x208] sm:$0xff] %v3667
      %4108 = vst [vmem:[%s423 + $0x210] sm:$0xff] %v3778
      %4109 = vst [vmem:[%s423 + $0x218] sm:$0xff] %v3780
      %4110 = vst [vmem:[%s423 + $0x220] sm:$0xff] %v3891
      %4111 = vst [vmem:[%s423 + $0x228] sm:$0xff] %v3893
      %4112 = vst [vmem:[%s423 + $0x230] sm:$0xff] %v4004
      %4113 = vst [vmem:[%s423 + $0x238] sm:$0xff] %v4006
      %4114 = vst [vmem:[%s423 + $0x240] sm:$0xff] %v3669
      %4115 = vst [vmem:[%s423 + $0x248] sm:$0xff] %v3671
      %4116 = vst [vmem:[%s423 + $0x250] sm:$0xff] %v3782
      %4117 = vst [vmem:[%s423 + $0x258] sm:$0xff] %v3784
      %4118 = vst [vmem:[%s423 + $0x260] sm:$0xff] %v3895
      %4119 = vst [vmem:[%s423 + $0x268] sm:$0xff] %v3897
      %4120 = vst [vmem:[%s423 + $0x270] sm:$0xff] %v4008
      %4121 = vst [vmem:[%s423 + $0x278] sm:$0xff] %v4010
      %4122 = vst [vmem:[%s423 + $0x280] sm:$0xff] %v3675
      %4123 = vst [vmem:[%s423 + $0x288] sm:$0xff] %v3677
      %4124 = vst [vmem:[%s423 + $0x290] sm:$0xff] %v3788
      %4125 = vst [vmem:[%s423 + $0x298] sm:$0xff] %v3790
      %4126 = vst [vmem:[%s423 + $0x2a0] sm:$0xff] %v3901
      %4127 = vst [vmem:[%s423 + $0x2a8] sm:$0xff] %v3903
      %4128 = vst [vmem:[%s423 + $0x2b0] sm:$0xff] %v4014
      %4129 = vst [vmem:[%s423 + $0x2b8] sm:$0xff] %v4016
      %4130 = vst [vmem:[%s423 + $0x2c0] sm:$0xff] %v3679
      %4131 = vst [vmem:[%s423 + $0x2c8] sm:$0xff] %v3681
      %4132 = vst [vmem:[%s423 + $0x2d0] sm:$0xff] %v3792
      %4133 = vst [vmem:[%s423 + $0x2d8] sm:$0xff] %v3794
      %4134 = vst [vmem:[%s423 + $0x2e0] sm:$0xff] %v3905
      %4135 = vst [vmem:[%s423 + $0x2e8] sm:$0xff] %v3907
      %4136 = vst [vmem:[%s423 + $0x2f0] sm:$0xff] %v4018
      %4137 = vst [vmem:[%s423 + $0x2f8] sm:$0xff] %v4020
      %4138 = vst [vmem:[%s423 + $0x300] sm:$0xff] %v3685
      %4139 = vst [vmem:[%s423 + $0x308] sm:$0xff] %v3687
      %4140 = vst [vmem:[%s423 + $0x310] sm:$0xff] %v3798
      %4141 = vst [vmem:[%s423 + $0x318] sm:$0xff] %v3800
      %4142 = vst [vmem:[%s423 + $0x320] sm:$0xff] %v3911
      %4143 = vst [vmem:[%s423 + $0x328] sm:$0xff] %v3913
      %4144 = vst [vmem:[%s423 + $0x330] sm:$0xff] %v4024
      %4145 = vst [vmem:[%s423 + $0x338] sm:$0xff] %v4026
      %4146 = vst [vmem:[%s423 + $0x340] sm:$0xff] %v3689
      %4147 = vst [vmem:[%s423 + $0x348] sm:$0xff] %v3691
      %4148 = vst [vmem:[%s423 + $0x350] sm:$0xff] %v3802
      %4149 = vst [vmem:[%s423 + $0x358] sm:$0xff] %v3804
      %4150 = vst [vmem:[%s423 + $0x360] sm:$0xff] %v3915
      %4151 = vst [vmem:[%s423 + $0x368] sm:$0xff] %v3917
      %4152 = vst [vmem:[%s423 + $0x370] sm:$0xff] %v4028
      %4153 = vst [vmem:[%s423 + $0x378] sm:$0xff] %v4030
      %4154 = vst [vmem:[%s423 + $0x380] sm:$0xff] %v3695
      %4155 = vst [vmem:[%s423 + $0x388] sm:$0xff] %v3697
      %4156 = vst [vmem:[%s423 + $0x390] sm:$0xff] %v3808
      %4157 = vst [vmem:[%s423 + $0x398] sm:$0xff] %v3810
      %4158 = vst [vmem:[%s423 + $0x3a0] sm:$0xff] %v3921
      %4159 = vst [vmem:[%s423 + $0x3a8] sm:$0xff] %v3923
      %4160 = vst [vmem:[%s423 + $0x3b0] sm:$0xff] %v4034
      %4161 = vst [vmem:[%s423 + $0x3b8] sm:$0xff] %v4036
      %4162 = vst [vmem:[%s423 + $0x3c0] sm:$0xff] %v3699
      %4163 = vst [vmem:[%s423 + $0x3c8] sm:$0xff] %v3701
      %4164 = vst [vmem:[%s423 + $0x3d0] sm:$0xff] %v3812
      %4165 = vst [vmem:[%s423 + $0x3d8] sm:$0xff] %v3814
      %4166 = vst [vmem:[%s423 + $0x3e0] sm:$0xff] %v3925
      %4167 = vst [vmem:[%s423 + $0x3e8] sm:$0xff] %v3927
      %4168 = vst [vmem:[%s423 + $0x3f0] sm:$0xff] %v4038
      %4169 = vst [vmem:[%s423 + $0x3f8] sm:$0xff] %v4040
      %vm4170 = vcmask 31744
      %4171 = vst.msk [vmem:[%s429] sm:$0xff] %vm4170, %v2185
      %4172 = vst.msk [vmem:[%s429 + $0x8] sm:$0xff] %vm4170, %v2190
      %4173 = vst.msk [vmem:[%s429 + $0x10] sm:$0xff] %vm4170, %v2195
      %4174 = vst.msk [vmem:[%s429 + $0x18] sm:$0xff] %vm4170, %v2200
      %4175 = vst.msk [vmem:[%s429 + $0x20] sm:$0xff] %vm4170, %v2205
      %4176 = vst.msk [vmem:[%s429 + $0x28] sm:$0xff] %vm4170, %v2210
      %4177 = vst.msk [vmem:[%s429 + $0x30] sm:$0xff] %vm4170, %v2215
      %4178 = vst.msk [vmem:[%s429 + $0x38] sm:$0xff] %vm4170, %v2220
      %4179 = vst.msk [vmem:[%s429 + $0x40] sm:$0xff] %vm4170, %v2225
      %4180 = vst.msk [vmem:[%s429 + $0x48] sm:$0xff] %vm4170, %v2230
      %4181 = vst.msk [vmem:[%s429 + $0x50] sm:$0xff] %vm4170, %v2235
      %4182 = vst.msk [vmem:[%s429 + $0x58] sm:$0xff] %vm4170, %v2240
      %4183 = vst.msk [vmem:[%s429 + $0x60] sm:$0xff] %vm4170, %v2245
      %4184 = vst.msk [vmem:[%s429 + $0x68] sm:$0xff] %vm4170, %v2250
      %4185 = vst.msk [vmem:[%s429 + $0x70] sm:$0xff] %vm4170, %v2255
      %4186 = vst.msk [vmem:[%s429 + $0x78] sm:$0xff] %vm4170, %v2260
      %s4187 = smul.u32 16, %s23
      %p4188 = scmp.lt.s32.totalorder %s4187, 31
      %s4189 = scalar_select %p4188, %s4187, 31
      %s4190 = smul.addr %s4189, 8
      %s4191 = smul.addr %s4190, 8
      %s4192 = scalar_lea.vmem %s10, %s4191
      %s4193 = smul.u32 16, %s23
      %p4194 = scmp.lt.s32.totalorder %s4193, 31
      %s4195 = scalar_select %p4194, %s4193, 31
      %s4196 = smul.addr %s4195, 8
      %s4197 = scalar_lea.vmem %s11, %s4196
      // Predicated region
      $region61: #{vae_forward.1} parent=59 // pred_check
        %p4198 = pneg %p261
      $region62: #{vae_forward.1} parent=59 // pred_check_branch
        %4200 = sbr.rel (%p4198) target = $region64
      $region63: #{vae_forward.1} parent=59 // pred_region
        %s4201 = smul.u32 16, %s23
      $region64: #{vae_forward.1} parent=59 // pred_fallthru
        _
      // Predicated region
      $region65: #{vae_forward.1} parent=59 // pred_check
        %p4202 = pneg %p287
      $region66: #{vae_forward.1} parent=59 // pred_check_branch
        %4204 = sbr.rel (%p4202) target = $region68
      $region67: #{vae_forward.1} parent=59 // pred_region
        %s4205 = smul.u32 16, %s23
      $region68: #{vae_forward.1} parent=59 // pred_fallthru
        _
    $region60: #{vae_forward.1} parent=5 // pred_fallthru
      _
    %p4206 = scmp.le.s32.totalorder 2, %s18
    // Predicated region
    $region69: #{vae_forward.1} parent=5 // pred_check
      %p4207 = pneg %p4206
    $region70: #{vae_forward.1} parent=5 // pred_check_branch
      %4209 = sbr.rel (%p4207) target = $region72
    $region71: #{vae_forward.1} parent=5 // pred_region
      %s4210 = ssub.s32 %s18, 2
      // Predicated region
      $region73: #{vae_forward.1} parent=71 // pred_check
        %p4211 = pneg %p267
      $region74: #{vae_forward.1} parent=71 // pred_check_branch
        %4213 = sbr.rel (%p4211) target = $region76
      $region75: #{vae_forward.1} parent=71 // pred_region
        %s4214 = smul.u32 16, %s24
        %p4215 = scmp.lt.s32.totalorder %s4214, 31
        %s4216 = scalar_select %p4215, %s4214, 31
        %s4217 = smul.addr %s4216, 8
        %s4218 = smul.addr %s4217, 8
        %s4219 = scalar_lea.vmem %s10, %s4218
      $region76: #{vae_forward.1} parent=71 // pred_fallthru
        _
      // Predicated region
      $region77: #{vae_forward.1} parent=71 // pred_check
        %p4220 = pneg %p293
      $region78: #{vae_forward.1} parent=71 // pred_check_branch
        %4222 = sbr.rel (%p4220) target = $region80
      $region79: #{vae_forward.1} parent=71 // pred_region
        %s4223 = smul.u32 16, %s24
        %p4224 = scmp.lt.s32.totalorder %s4223, 31
        %s4225 = scalar_select %p4224, %s4223, 31
        %s4226 = smul.addr %s4225, 8
        %s4227 = scalar_lea.vmem %s11, %s4226
      $region80: #{vae_forward.1} parent=71 // pred_fallthru
        _
    $region72: #{vae_forward.1} parent=5 // pred_fallthru
      _
  $region6: #{vae_forward.1} parent=0 // loop_footer
    %s22 = sadd.s32 1, %s18
  $region7: #{vae_forward.1} parent=0 // loop_footer_branch
    %17 = sbr.rel target = $region3
  $region8: #{vae_forward.1} parent=0 // loop_exit
    _

</llo_original>
